<compile_context>
chip_gen: v6e
topology: v6e:2x2x1
jax: 0.10.0
libtpu: 0.0.40
codegen_flags: <defaults>
</compile_context>

<pallas_src>
import functools

import jax
import jax.numpy as jnp
from jax.experimental import pallas as pl
from jax.experimental.pallas import tpu as pltpu


def _round_up(x, m):
    return (x + m - 1) // m * m


def _pad_gate_cols(w, h, hp):
    """Relocate PyTorch-ordered gate blocks (i,f,g,o) of width h into 128-lane
    aligned blocks of width hp (zero padded): (..., 4h) -> (..., 4hp)."""
    pad = [(0, 0)] * (w.ndim - 1) + [(0, hp - h)]
    return jnp.concatenate(
        [jnp.pad(w[..., k * h:(k + 1) * h], pad) for k in range(4)], axis=-1)


def decoder_lstm_kernel(xproj_ref, h0_ref, c0_ref, whh0_ref, wih_ref, whh_ref,
                        bcat_ref, htop_ref, hout_ref, cout_ref,
                        *, n_layers, hid_p, batch_p, t_chunk, seq_len):
    """One grid step == t_chunk time steps.

    hout_ref / cout_ref are resident across the whole grid (constant output
    block index) and carry the recurrent state between chunks; inside a chunk
    the state lives in vregs (Python locals).
    """
    Hp = hid_p
    T = t_chunk
    mm_dtype = whh0_ref.dtype          # f32 or bf16 (matmul operand dtype)
    has_tail = (seq_len % T) != 0
    t_base = pl.program_id(0) * T

    @pl.when(pl.program_id(0) == 0)
    def _():
        hout_ref[...] = h0_ref[...]
        cout_ref[...] = c0_ref[...]

    # Pull recurrent state into vregs once per chunk.
    hs = [hout_ref[layer] for layer in range(n_layers)]
    cs = [cout_ref[layer] for layer in range(n_layers)]

    # Hoist bias broadcasts out of the unrolled time loop (layer-0 bias is
    # already folded into the precomputed xproj).
    biases = [jnp.broadcast_to(bcat_ref[layer], (batch_p, 4 * Hp))
              for layer in range(n_layers - 1)]

    def lstm_cell(gates, c_prev):
        # Gate slices are 128-lane aligned (Hp is a multiple of 128).
        i_g = jax.nn.sigmoid(gates[:, 0 * Hp:1 * Hp])
        f_g = jax.nn.sigmoid(gates[:, 1 * Hp:2 * Hp])
        g_g = jnp.tanh(gates[:, 2 * Hp:3 * Hp])
        o_g = jax.nn.sigmoid(gates[:, 3 * Hp:4 * Hp])
        c_new = f_g * c_prev + i_g * g_g
        h_new = o_g * jnp.tanh(c_new)
        return h_new, c_new

    # Static unroll over the chunk: all ref indices are compile-time constants.
    for tt in range(T):
        if has_tail:
            valid = (t_base + tt) < seq_len   # scalar; only last chunk masks

        # Layer 0: hoisted input projection (+bias) + recurrent matmul.
        gates = xproj_ref[tt] + jnp.dot(
            hs[0].astype(mm_dtype), whh0_ref[...],
            preferred_element_type=jnp.float32)
        h_new, c_new = lstm_cell(gates, cs[0])
        if has_tail:
            h_new = jnp.where(valid, h_new, hs[0])
            c_new = jnp.where(valid, c_new, cs[0])
        hs[0], cs[0] = h_new, c_new
        x = h_new

        # Layers 1..L-1: two accumulated dots (no concat on the serial chain).
        for layer in range(1, n_layers):
            gates = (jnp.dot(x.astype(mm_dtype), wih_ref[layer - 1],
                             preferred_element_type=jnp.float32)
                     + jnp.dot(hs[layer].astype(mm_dtype), whh_ref[layer - 1],
                               preferred_element_type=jnp.float32)
                     + biases[layer - 1])
            h_new, c_new = lstm_cell(gates, cs[layer])
            if has_tail:
                h_new = jnp.where(valid, h_new, hs[layer])
                c_new = jnp.where(valid, c_new, cs[layer])
            hs[layer], cs[layer] = h_new, c_new
            x = h_new

        # Lane-dense (Bp, Hp) store of the top-layer hidden state; the output
        # projection runs once over the whole sequence outside the kernel.
        htop_ref[tt] = x

    # Write recurrent state back once per chunk.
    for layer in range(n_layers):
        hout_ref[layer] = hs[layer]
        cout_ref[layer] = cs[layer]


def decoder_forward(tokens, hidden, cell, params, *, t_chunk=16,
                    matmul_dtype=jnp.float32):
    """Pallas implementation of Decoder.forward (inference mode).

    matmul_dtype=jnp.bfloat16 is recommended on v6e/v7x (MXU-native); all
    accumulation and gate math stays f32.
    """
    emb_table, wih_t, whh_t, bias, wout_t, bout = params
    S, B = tokens.shape
    L, E, H4 = wih_t.shape
    H = H4 // 4
    O = wout_t.shape[1]
    f32 = jnp.float32
    mmd = matmul_dtype

    Hp = _round_up(H, 128)          # lane-align hidden / gate blocks
    Bp = _round_up(B, 8)            # f32 sublane granularity
    T = max(1, min(t_chunk, S))     # chunk length (time steps per grid step)
    S_pad = _round_up(S, T)         # pad time; tail steps masked in-kernel
    n_chunks = S_pad // T

    # ---- XLA glue: embedding gather (+ eval dropout == identity) and the
    # hoisted layer-0 input projection as one big (S*B, E) x (E, 4H) matmul.
    embedded = jnp.take(emb_table, tokens, axis=0)                 # (S, B, E)
    xproj = jnp.dot(embedded.reshape(S * B, E).astype(mmd), wih_t[0].astype(mmd),
                    preferred_element_type=f32) + bias[0]
    xproj = _pad_gate_cols(xproj.reshape(S, B, 4 * H), H, Hp)      # (S, B, 4Hp)
    xproj = jnp.pad(xproj, ((0, S_pad - S), (0, Bp - B), (0, 0)))  # (Sp,Bp,4Hp)

    # ---- weight packing: gate columns relocated to 128-aligned blocks.
    whh0_p = jnp.zeros((Hp, 4 * Hp), f32).at[:H].set(
        _pad_gate_cols(whh_t[0], H, Hp)).astype(mmd)
    Lm1 = max(L - 1, 1)
    wih_rest = jnp.zeros((Lm1, Hp, 4 * Hp), f32)
    whh_rest = jnp.zeros((Lm1, Hp, 4 * Hp), f32)
    bcat = jnp.zeros((Lm1, 1, 4 * Hp), f32)
    if L > 1:
        wih_rest = wih_rest.at[:, :H].set(_pad_gate_cols(wih_t[1:], H, Hp))
        whh_rest = whh_rest.at[:, :H].set(_pad_gate_cols(whh_t[1:], H, Hp))
        bcat = bcat.at[:].set(_pad_gate_cols(bias[1:], H, Hp))
    wih_rest = wih_rest.astype(mmd)
    whh_rest = whh_rest.astype(mmd)
    h0_p = jnp.pad(hidden, ((0, 0), (0, Bp - B), (0, Hp - H)))
    c0_p = jnp.pad(cell, ((0, 0), (0, Bp - B), (0, Hp - H)))

    kernel = functools.partial(decoder_lstm_kernel, n_layers=L, hid_p=Hp,
                               batch_p=Bp, t_chunk=T, seq_len=S)

    # Explicit VMEM budget (blocks x double-buffering, with headroom), capped
    # at 90% of this generation's VMEM (128 MiB v5e/v6e, 64 MiB v7x).
    w_item = jnp.dtype(mmd).itemsize
    block_bytes = (4 * T * Bp * 4 * Hp                  # xproj chunk (f32)
                   + w_item * Hp * 4 * Hp               # whh0
                   + w_item * 2 * Lm1 * Hp * 4 * Hp     # wih_rest + whh_rest
                   + 4 * Lm1 * 4 * Hp                   # bias
                   + 4 * T * Bp * Hp                    # htop chunk (f32)
                   + 4 * 4 * L * Bp * Hp)               # h0, c0, hout, cout
    try:
        vmem_cap = int(pltpu.get_tpu_info().vmem_capacity_bytes)
    except Exception:
        vmem_cap = 64 * 2**20
    vmem_limit = int(min(max(4 * block_bytes, 32 * 2**20), int(vmem_cap * 0.9)))

    htop_p, h_out_p, c_out_p = pl.pallas_call(
        kernel,
        out_shape=(
            jax.ShapeDtypeStruct((S_pad, Bp, Hp), f32),
            jax.ShapeDtypeStruct((L, Bp, Hp), f32),
            jax.ShapeDtypeStruct((L, Bp, Hp), f32),
        ),
        grid_spec=pltpu.PrefetchScalarGridSpec(
            num_scalar_prefetch=0,
            grid=(n_chunks,),
            in_specs=[
                pl.BlockSpec((T, Bp, 4 * Hp), lambda tc: (tc, 0, 0)),       # xproj chunk
                pl.BlockSpec((L, Bp, Hp), lambda tc: (0, 0, 0)),            # h0
                pl.BlockSpec((L, Bp, Hp), lambda tc: (0, 0, 0)),            # c0
                pl.BlockSpec((Hp, 4 * Hp), lambda tc: (0, 0)),              # W_hh^T[0]
                pl.BlockSpec((Lm1, Hp, 4 * Hp), lambda tc: (0, 0, 0)),      # W_ih^T[1:]
                pl.BlockSpec((Lm1, Hp, 4 * Hp), lambda tc: (0, 0, 0)),      # W_hh^T[1:]
                pl.BlockSpec((Lm1, 1, 4 * Hp), lambda tc: (0, 0, 0)),       # bias (l>0)
            ],
            out_specs=[
                pl.BlockSpec((T, Bp, Hp), lambda tc: (tc, 0, 0)),           # h_top chunk
                pl.BlockSpec((L, Bp, Hp), lambda tc: (0, 0, 0)),            # hidden
                pl.BlockSpec((L, Bp, Hp), lambda tc: (0, 0, 0)),            # cell
            ],
        ),
        compiler_params=pltpu.CompilerParams(
            dimension_semantics=("arbitrary",),   # state carried across chunks
            vmem_limit_bytes=vmem_limit),
    )(xproj, h0_p, c0_p, whh0_p, wih_rest, whh_rest, bcat)

    # Output projection hoisted out of the recurrence: one big batched matmul.
    h_top = htop_p[:S, :B, :H]                                     # (S, B, H)
    pred = (jnp.dot(h_top.reshape(S * B, H).astype(mmd), wout_t.astype(mmd),
                    preferred_element_type=f32).reshape(S, B, O) + bout)
    return pred, h_out_p[:, :B, :H], c_out_p[:, :B, :H]


def decoder_forward_reference(tokens, hidden, cell, params):
    """Pure-JAX reference with identical semantics, for validation."""
    emb_table, wih_t, whh_t, bias, wout_t, bout = params
    S, B = tokens.shape
    L, E, H4 = wih_t.shape
    H = H4 // 4
    embedded = jnp.take(emb_table, tokens, axis=0)  # (S, B, E)
    h = hidden
    c = cell
    preds = []
    for t in range(S):
        x = embedded[t]
        new_h, new_c = [], []
        for layer in range(L):
            gates = x @ wih_t[layer] + h[layer] @ whh_t[layer] + bias[layer]
            i_g = jax.nn.sigmoid(gates[:, 0 * H:1 * H])
            f_g = jax.nn.sigmoid(gates[:, 1 * H:2 * H])
            g_g = jnp.tanh(gates[:, 2 * H:3 * H])
            o_g = jax.nn.sigmoid(gates[:, 3 * H:4 * H])
            c_new = f_g * c[layer] + i_g * g_g
            h_new = o_g * jnp.tanh(c_new)
            new_h.append(h_new)
            new_c.append(c_new)
            x = h_new
        h = jnp.stack(new_h)
        c = jnp.stack(new_c)
        preds.append(x @ wout_t + bout)
    return jnp.stack(preds), h, c


def make_params(key, output_dim, emb_dim, hid_dim, n_layers):
    """Deterministic parameter init (uniform +-1/sqrt(hid_dim), like PyTorch)."""
    ks = jax.random.split(key, 6)
    bound = 1.0 / jnp.sqrt(hid_dim)
    emb_table = jax.random.normal(ks[0], (output_dim, emb_dim), jnp.float32)
    # Requires emb_dim == hid_dim so per-layer input weights stack uniformly.
    assert emb_dim == hid_dim
    wih_t = jax.random.uniform(ks[1], (n_layers, emb_dim, 4 * hid_dim),
                               jnp.float32, -bound, bound)
    whh_t = jax.random.uniform(ks[2], (n_layers, hid_dim, 4 * hid_dim),
                               jnp.float32, -bound, bound)
    bias = jax.random.uniform(ks[3], (n_layers, 1, 4 * hid_dim),
                              jnp.float32, -bound, bound)      # b_ih + b_hh fused
    wout_t = jax.random.uniform(ks[4], (hid_dim, output_dim),
                                jnp.float32, -bound, bound)
    bout = jax.random.uniform(ks[5], (1, output_dim), jnp.float32, -bound, bound)
    return emb_table, wih_t, whh_t, bias, wout_t, bout


if __name__ == "__main__":
    # Small shapes consistent with the module.
    OUTPUT_DIM = 16   # vocab size
    EMB_DIM = 32
    HID_DIM = 32
    N_LAYERS = 2
    SEQ = 8
    BATCH = 2

    key = jax.random.PRNGKey(0)
    k_tok, k_h, k_c, k_p = jax.random.split(key, 4)

    tokens = jax.random.randint(k_tok, (SEQ, BATCH), 0, OUTPUT_DIM, jnp.int32)
    hidden = jax.random.normal(k_h, (N_LAYERS, BATCH, HID_DIM), jnp.float32)
    cell = jax.random.normal(k_c, (N_LAYERS, BATCH, HID_DIM), jnp.float32)
    params = make_params(k_p, OUTPUT_DIM, EMB_DIM, HID_DIM, N_LAYERS)

    pred_ref, h_ref, c_ref = decoder_forward_reference(tokens, hidden, cell, params)

    # f32, chunk divides S (2 chunks): exercises the resident-state carry.
    pred, h_out, c_out = decoder_forward(tokens, hidden, cell, params, t_chunk=4)
    jax.block_until_ready((pred, h_out, c_out))
    assert jnp.allclose(pred, pred_ref, atol=1e-4), "prediction mismatch (f32)"
    assert jnp.allclose(h_out, h_ref, atol=1e-4), "hidden mismatch (f32)"
    assert jnp.allclose(c_out, c_ref, atol=1e-4), "cell mismatch (f32)"

    # f32, chunk does NOT divide S: exercises the padded-tail masking path.
    pred2, h_out2, c_out2 = decoder_forward(tokens, hidden, cell, params, t_chunk=5)
    jax.block_until_ready((pred2, h_out2, c_out2))
    assert jnp.allclose(pred2, pred_ref, atol=1e-4), "prediction mismatch (tail)"
    assert jnp.allclose(h_out2, h_ref, atol=1e-4), "hidden mismatch (tail)"
    assert jnp.allclose(c_out2, c_ref, atol=1e-4), "cell mismatch (tail)"

    # bf16 matmul operands (MXU-native path for v6e/v7x); looser tolerance.
    pred3, h_out3, c_out3 = decoder_forward(tokens, hidden, cell, params,
                                            t_chunk=8, matmul_dtype=jnp.bfloat16)
    jax.block_until_ready((pred3, h_out3, c_out3))
    assert jnp.allclose(pred3, pred_ref, atol=1e-1, rtol=1e-1), "pred mismatch (bf16)"
    assert jnp.allclose(h_out3, h_ref, atol=1e-1, rtol=1e-1), "hidden mismatch (bf16)"
    assert jnp.allclose(c_out3, c_ref, atol=1e-1, rtol=1e-1), "cell mismatch (bf16)"

    print("KERNEL_OK")
</pallas_src>

<mosaic_0001>
module attributes {stable_mosaic.version = 11 : i64} {
  func.func @decoder_lstm_kernel(%arg0: i32, %arg1: memref<4x8x512xf32, #tpu.memory_space<vmem>>, %arg2: memref<2x8x128xf32, #tpu.memory_space<vmem>>, %arg3: memref<2x8x128xf32, #tpu.memory_space<vmem>>, %arg4: memref<128x512xf32, #tpu.memory_space<vmem>>, %arg5: memref<1x128x512xf32, #tpu.memory_space<vmem>>, %arg6: memref<1x128x512xf32, #tpu.memory_space<vmem>>, %arg7: memref<1x1x512xf32, #tpu.memory_space<vmem>>, %arg8: memref<4x8x128xf32, #tpu.memory_space<vmem>>, %arg9: memref<2x8x128xf32, #tpu.memory_space<vmem>>, %arg10: memref<2x8x128xf32, #tpu.memory_space<vmem>>) attributes {dimension_semantics = [#tpu.dimension_semantics<arbitrary>], iteration_bounds = array<i64: 2>, scalar_prefetch = 0 : i64, scratch_operands = 0 : i64, tpu.core_type = #tpu.core_type<tc>, window_params = [{transform_indices = @transform_0, window_bounds = array<i64: 4, 8, 512>}, {pipeline_mode = #tpu.pipeline_mode<synchronous>, transform_indices = @transform_1, window_bounds = array<i64: 2, 8, 128>}, {pipeline_mode = #tpu.pipeline_mode<synchronous>, transform_indices = @transform_2, window_bounds = array<i64: 2, 8, 128>}, {pipeline_mode = #tpu.pipeline_mode<synchronous>, transform_indices = @transform_3, window_bounds = array<i64: 128, 512>}, {pipeline_mode = #tpu.pipeline_mode<synchronous>, transform_indices = @transform_4, window_bounds = array<i64: 1, 128, 512>}, {pipeline_mode = #tpu.pipeline_mode<synchronous>, transform_indices = @transform_5, window_bounds = array<i64: 1, 128, 512>}, {pipeline_mode = #tpu.pipeline_mode<synchronous>, transform_indices = @transform_6, window_bounds = array<i64: 1, 1, 512>}, {transform_indices = @transform_7, window_bounds = array<i64: 4, 8, 128>}, {pipeline_mode = #tpu.pipeline_mode<synchronous>, transform_indices = @transform_8, window_bounds = array<i64: 2, 8, 128>}, {pipeline_mode = #tpu.pipeline_mode<synchronous>, transform_indices = @transform_9, window_bounds = array<i64: 2, 8, 128>}]} {
    %c0_i32 = arith.constant 0 : i32
    %0 = arith.cmpi eq, %arg0, %c0_i32 : i32
    %1 = arith.extui %0 : i1 to i32
    %c0_i32_0 = arith.constant 0 : i32
    %2 = arith.cmpi ne, %1, %c0_i32_0 : i32
    scf.if %2 {
      %c0_115 = arith.constant 0 : index
      %c0_116 = arith.constant 0 : index
      %c0_117 = arith.constant 0 : index
      %291 = vector.load %arg2[%c0_115, %c0_116, %c0_117] : memref<2x8x128xf32, #tpu.memory_space<vmem>>, vector<2x8x128xf32>
      %c0_118 = arith.constant 0 : index
      %c0_119 = arith.constant 0 : index
      %c0_120 = arith.constant 0 : index
      %292 = vector.load %arg9[%c0_118, %c0_119, %c0_120] : memref<2x8x128xf32, #tpu.memory_space<vmem>>, vector<2x8x128xf32>
      tpu.vector_store %arg9[%c0_118, %c0_119, %c0_120], %291 {strides = array<i32>} : memref<2x8x128xf32, #tpu.memory_space<vmem>>, vector<2x8x128xf32>,
      %c0_121 = arith.constant 0 : index
      %c0_122 = arith.constant 0 : index
      %c0_123 = arith.constant 0 : index
      %293 = vector.load %arg3[%c0_121, %c0_122, %c0_123] : memref<2x8x128xf32, #tpu.memory_space<vmem>>, vector<2x8x128xf32>
      %c0_124 = arith.constant 0 : index
      %c0_125 = arith.constant 0 : index
      %c0_126 = arith.constant 0 : index
      %294 = vector.load %arg10[%c0_124, %c0_125, %c0_126] : memref<2x8x128xf32, #tpu.memory_space<vmem>>, vector<2x8x128xf32>
      tpu.vector_store %arg10[%c0_124, %c0_125, %c0_126], %293 {strides = array<i32>} : memref<2x8x128xf32, #tpu.memory_space<vmem>>, vector<2x8x128xf32>,
    } else {
    }
    %c0 = arith.constant 0 : index
    %c0_1 = arith.constant 0 : index
    %c0_2 = arith.constant 0 : index
    %3 = vector.load %arg9[%c0, %c0_1, %c0_2] : memref<2x8x128xf32, #tpu.memory_space<vmem>>, vector<1x8x128xf32>
    %4 = vector.shape_cast %3 : vector<1x8x128xf32> to vector<8x128xf32>
    %c1 = arith.constant 1 : index
    %c0_3 = arith.constant 0 : index
    %c0_4 = arith.constant 0 : index
    %5 = vector.load %arg9[%c1, %c0_3, %c0_4] : memref<2x8x128xf32, #tpu.memory_space<vmem>>, vector<1x8x128xf32>
    %6 = vector.shape_cast %5 : vector<1x8x128xf32> to vector<8x128xf32>
    %c0_5 = arith.constant 0 : index
    %c0_6 = arith.constant 0 : index
    %c0_7 = arith.constant 0 : index
    %7 = vector.load %arg10[%c0_5, %c0_6, %c0_7] : memref<2x8x128xf32, #tpu.memory_space<vmem>>, vector<1x8x128xf32>
    %8 = vector.shape_cast %7 : vector<1x8x128xf32> to vector<8x128xf32>
    %c1_8 = arith.constant 1 : index
    %c0_9 = arith.constant 0 : index
    %c0_10 = arith.constant 0 : index
    %9 = vector.load %arg10[%c1_8, %c0_9, %c0_10] : memref<2x8x128xf32, #tpu.memory_space<vmem>>, vector<1x8x128xf32>
    %10 = vector.shape_cast %9 : vector<1x8x128xf32> to vector<8x128xf32>
    %c0_11 = arith.constant 0 : index
    %c0_12 = arith.constant 0 : index
    %c0_13 = arith.constant 0 : index
    %11 = vector.load %arg7[%c0_11, %c0_12, %c0_13] : memref<1x1x512xf32, #tpu.memory_space<vmem>>, vector<1x1x512xf32>
    %12 = vector.shape_cast %11 : vector<1x1x512xf32> to vector<1x512xf32>
    %13 = vector.shape_cast %12 : vector<1x512xf32> to vector<1x512xf32>
    %14 = vector.broadcast %13 : vector<1x512xf32> to vector<8x512xf32>
    %c0_14 = arith.constant 0 : index
    %c0_15 = arith.constant 0 : index
    %c0_16 = arith.constant 0 : index
    %15 = vector.load %arg1[%c0_14, %c0_15, %c0_16] : memref<4x8x512xf32, #tpu.memory_space<vmem>>, vector<1x8x512xf32>
    %16 = vector.shape_cast %15 : vector<1x8x512xf32> to vector<8x512xf32>
    %c0_17 = arith.constant 0 : index
    %c0_18 = arith.constant 0 : index
    %17 = vector.load %arg4[%c0_17, %c0_18] : memref<128x512xf32, #tpu.memory_space<vmem>>, vector<128x512xf32>
    %cst = arith.constant dense<0.000000e+00> : vector<8x512xf32>
    %18 = tpu.matmul %4, %17, %cst {dimension_numbers = #tpu.dot_dimension_numbers<[1], [0], [0], [1], [0, 0, 1, 1], [], []>} : vector<8x128xf32>, vector<128x512xf32>, vector<8x512xf32> -> vector<8x512xf32>
    %19 = arith.addf %16, %18 : vector<8x512xf32>
    %20 = vector.extract_strided_slice %19 {offsets = [0, 0], sizes = [8, 128], strides = [1, 1]} : vector<8x512xf32> to vector<8x128xf32>
    %21 = arith.negf %20 : vector<8x128xf32>
    %22 = math.exp %21 : vector<8x128xf32>
    %cst_19 = arith.constant 1.000000e+00 : f32
    %23 = vector.broadcast %cst_19 : f32 to vector<8x128xf32>
    %24 = arith.addf %23, %22 : vector<8x128xf32>
    %25 = arith.divf %23, %24 : vector<8x128xf32>
    %26 = vector.extract_strided_slice %19 {offsets = [0, 128], sizes = [8, 128], strides = [1, 1]} : vector<8x512xf32> to vector<8x128xf32>
    %27 = arith.negf %26 : vector<8x128xf32>
    %28 = math.exp %27 : vector<8x128xf32>
    %cst_20 = arith.constant 1.000000e+00 : f32
    %29 = vector.broadcast %cst_20 : f32 to vector<8x128xf32>
    %30 = arith.addf %29, %28 : vector<8x128xf32>
    %31 = arith.divf %29, %30 : vector<8x128xf32>
    %32 = vector.extract_strided_slice %19 {offsets = [0, 256], sizes = [8, 128], strides = [1, 1]} : vector<8x512xf32> to vector<8x128xf32>
    %33 = math.tanh %32 : vector<8x128xf32>
    %34 = vector.extract_strided_slice %19 {offsets = [0, 384], sizes = [8, 128], strides = [1, 1]} : vector<8x512xf32> to vector<8x128xf32>
    %35 = arith.negf %34 : vector<8x128xf32>
    %36 = math.exp %35 : vector<8x128xf32>
    %cst_21 = arith.constant 1.000000e+00 : f32
    %37 = vector.broadcast %cst_21 : f32 to vector<8x128xf32>
    %38 = arith.addf %37, %36 : vector<8x128xf32>
    %39 = arith.divf %37, %38 : vector<8x128xf32>
    %40 = arith.mulf %31, %8 : vector<8x128xf32>
    %41 = arith.mulf %25, %33 : vector<8x128xf32>
    %42 = arith.addf %40, %41 : vector<8x128xf32>
    %43 = math.tanh %42 : vector<8x128xf32>
    %44 = arith.mulf %39, %43 : vector<8x128xf32>
    %c0_22 = arith.constant 0 : index
    %c0_23 = arith.constant 0 : index
    %c0_24 = arith.constant 0 : index
    %45 = vector.load %arg5[%c0_22, %c0_23, %c0_24] : memref<1x128x512xf32, #tpu.memory_space<vmem>>, vector<1x128x512xf32>
    %46 = vector.shape_cast %45 : vector<1x128x512xf32> to vector<128x512xf32>
    %cst_25 = arith.constant dense<0.000000e+00> : vector<8x512xf32>
    %47 = tpu.matmul %44, %46, %cst_25 {dimension_numbers = #tpu.dot_dimension_numbers<[1], [0], [0], [1], [0, 0, 1, 1], [], []>} : vector<8x128xf32>, vector<128x512xf32>, vector<8x512xf32> -> vector<8x512xf32>
    %c0_26 = arith.constant 0 : index
    %c0_27 = arith.constant 0 : index
    %c0_28 = arith.constant 0 : index
    %48 = vector.load %arg6[%c0_26, %c0_27, %c0_28] : memref<1x128x512xf32, #tpu.memory_space<vmem>>, vector<1x128x512xf32>
    %49 = vector.shape_cast %48 : vector<1x128x512xf32> to vector<128x512xf32>
    %cst_29 = arith.constant dense<0.000000e+00> : vector<8x512xf32>
    %50 = tpu.matmul %6, %49, %cst_29 {dimension_numbers = #tpu.dot_dimension_numbers<[1], [0], [0], [1], [0, 0, 1, 1], [], []>} : vector<8x128xf32>, vector<128x512xf32>, vector<8x512xf32> -> vector<8x512xf32>
    %51 = arith.addf %47, %50 : vector<8x512xf32>
    %52 = arith.addf %51, %14 : vector<8x512xf32>
    %53 = vector.extract_strided_slice %52 {offsets = [0, 0], sizes = [8, 128], strides = [1, 1]} : vector<8x512xf32> to vector<8x128xf32>
    %54 = arith.negf %53 : vector<8x128xf32>
    %55 = math.exp %54 : vector<8x128xf32>
    %cst_30 = arith.constant 1.000000e+00 : f32
    %56 = vector.broadcast %cst_30 : f32 to vector<8x128xf32>
    %57 = arith.addf %56, %55 : vector<8x128xf32>
    %58 = arith.divf %56, %57 : vector<8x128xf32>
    %59 = vector.extract_strided_slice %52 {offsets = [0, 128], sizes = [8, 128], strides = [1, 1]} : vector<8x512xf32> to vector<8x128xf32>
    %60 = arith.negf %59 : vector<8x128xf32>
    %61 = math.exp %60 : vector<8x128xf32>
    %cst_31 = arith.constant 1.000000e+00 : f32
    %62 = vector.broadcast %cst_31 : f32 to vector<8x128xf32>
    %63 = arith.addf %62, %61 : vector<8x128xf32>
    %64 = arith.divf %62, %63 : vector<8x128xf32>
    %65 = vector.extract_strided_slice %52 {offsets = [0, 256], sizes = [8, 128], strides = [1, 1]} : vector<8x512xf32> to vector<8x128xf32>
    %66 = math.tanh %65 : vector<8x128xf32>
    %67 = vector.extract_strided_slice %52 {offsets = [0, 384], sizes = [8, 128], strides = [1, 1]} : vector<8x512xf32> to vector<8x128xf32>
    %68 = arith.negf %67 : vector<8x128xf32>
    %69 = math.exp %68 : vector<8x128xf32>
    %cst_32 = arith.constant 1.000000e+00 : f32
    %70 = vector.broadcast %cst_32 : f32 to vector<8x128xf32>
    %71 = arith.addf %70, %69 : vector<8x128xf32>
    %72 = arith.divf %70, %71 : vector<8x128xf32>
    %73 = arith.mulf %64, %10 : vector<8x128xf32>
    %74 = arith.mulf %58, %66 : vector<8x128xf32>
    %75 = arith.addf %73, %74 : vector<8x128xf32>
    %76 = math.tanh %75 : vector<8x128xf32>
    %77 = arith.mulf %72, %76 : vector<8x128xf32>
    %c0_33 = arith.constant 0 : index
    %c0_34 = arith.constant 0 : index
    %c0_35 = arith.constant 0 : index
    %78 = vector.load %arg8[%c0_33, %c0_34, %c0_35] : memref<4x8x128xf32, #tpu.memory_space<vmem>>, vector<1x8x128xf32>
    %79 = vector.shape_cast %78 : vector<1x8x128xf32> to vector<8x128xf32>
    %80 = vector.shape_cast %77 : vector<8x128xf32> to vector<1x8x128xf32>
    tpu.vector_store %arg8[%c0_33, %c0_34, %c0_35], %80 {strides = array<i32>} : memref<4x8x128xf32, #tpu.memory_space<vmem>>, vector<1x8x128xf32>,
    %c1_36 = arith.constant 1 : index
    %c0_37 = arith.constant 0 : index
    %c0_38 = arith.constant 0 : index
    %81 = vector.load %arg1[%c1_36, %c0_37, %c0_38] : memref<4x8x512xf32, #tpu.memory_space<vmem>>, vector<1x8x512xf32>
    %82 = vector.shape_cast %81 : vector<1x8x512xf32> to vector<8x512xf32>
    %c0_39 = arith.constant 0 : index
    %c0_40 = arith.constant 0 : index
    %83 = vector.load %arg4[%c0_39, %c0_40] : memref<128x512xf32, #tpu.memory_space<vmem>>, vector<128x512xf32>
    %cst_41 = arith.constant dense<0.000000e+00> : vector<8x512xf32>
    %84 = tpu.matmul %44, %83, %cst_41 {dimension_numbers = #tpu.dot_dimension_numbers<[1], [0], [0], [1], [0, 0, 1, 1], [], []>} : vector<8x128xf32>, vector<128x512xf32>, vector<8x512xf32> -> vector<8x512xf32>
    %85 = arith.addf %82, %84 : vector<8x512xf32>
    %86 = vector.extract_strided_slice %85 {offsets = [0, 0], sizes = [8, 128], strides = [1, 1]} : vector<8x512xf32> to vector<8x128xf32>
    %87 = arith.negf %86 : vector<8x128xf32>
    %88 = math.exp %87 : vector<8x128xf32>
    %cst_42 = arith.constant 1.000000e+00 : f32
    %89 = vector.broadcast %cst_42 : f32 to vector<8x128xf32>
    %90 = arith.addf %89, %88 : vector<8x128xf32>
    %91 = arith.divf %89, %90 : vector<8x128xf32>
    %92 = vector.extract_strided_slice %85 {offsets = [0, 128], sizes = [8, 128], strides = [1, 1]} : vector<8x512xf32> to vector<8x128xf32>
    %93 = arith.negf %92 : vector<8x128xf32>
    %94 = math.exp %93 : vector<8x128xf32>
    %cst_43 = arith.constant 1.000000e+00 : f32
    %95 = vector.broadcast %cst_43 : f32 to vector<8x128xf32>
    %96 = arith.addf %95, %94 : vector<8x128xf32>
    %97 = arith.divf %95, %96 : vector<8x128xf32>
    %98 = vector.extract_strided_slice %85 {offsets = [0, 256], sizes = [8, 128], strides = [1, 1]} : vector<8x512xf32> to vector<8x128xf32>
    %99 = math.tanh %98 : vector<8x128xf32>
    %100 = vector.extract_strided_slice %85 {offsets = [0, 384], sizes = [8, 128], strides = [1, 1]} : vector<8x512xf32> to vector<8x128xf32>
    %101 = arith.negf %100 : vector<8x128xf32>
    %102 = math.exp %101 : vector<8x128xf32>
    %cst_44 = arith.constant 1.000000e+00 : f32
    %103 = vector.broadcast %cst_44 : f32 to vector<8x128xf32>
    %104 = arith.addf %103, %102 : vector<8x128xf32>
    %105 = arith.divf %103, %104 : vector<8x128xf32>
    %106 = arith.mulf %97, %42 : vector<8x128xf32>
    %107 = arith.mulf %91, %99 : vector<8x128xf32>
    %108 = arith.addf %106, %107 : vector<8x128xf32>
    %109 = math.tanh %108 : vector<8x128xf32>
    %110 = arith.mulf %105, %109 : vector<8x128xf32>
    %c0_45 = arith.constant 0 : index
    %c0_46 = arith.constant 0 : index
    %c0_47 = arith.constant 0 : index
    %111 = vector.load %arg5[%c0_45, %c0_46, %c0_47] : memref<1x128x512xf32, #tpu.memory_space<vmem>>, vector<1x128x512xf32>
    %112 = vector.shape_cast %111 : vector<1x128x512xf32> to vector<128x512xf32>
    %cst_48 = arith.constant dense<0.000000e+00> : vector<8x512xf32>
    %113 = tpu.matmul %110, %112, %cst_48 {dimension_numbers = #tpu.dot_dimension_numbers<[1], [0], [0], [1], [0, 0, 1, 1], [], []>} : vector<8x128xf32>, vector<128x512xf32>, vector<8x512xf32> -> vector<8x512xf32>
    %c0_49 = arith.constant 0 : index
    %c0_50 = arith.constant 0 : index
    %c0_51 = arith.constant 0 : index
    %114 = vector.load %arg6[%c0_49, %c0_50, %c0_51] : memref<1x128x512xf32, #tpu.memory_space<vmem>>, vector<1x128x512xf32>
    %115 = vector.shape_cast %114 : vector<1x128x512xf32> to vector<128x512xf32>
    %cst_52 = arith.constant dense<0.000000e+00> : vector<8x512xf32>
    %116 = tpu.matmul %77, %115, %cst_52 {dimension_numbers = #tpu.dot_dimension_numbers<[1], [0], [0], [1], [0, 0, 1, 1], [], []>} : vector<8x128xf32>, vector<128x512xf32>, vector<8x512xf32> -> vector<8x512xf32>
    %117 = arith.addf %113, %116 : vector<8x512xf32>
    %118 = arith.addf %117, %14 : vector<8x512xf32>
    %119 = vector.extract_strided_slice %118 {offsets = [0, 0], sizes = [8, 128], strides = [1, 1]} : vector<8x512xf32> to vector<8x128xf32>
    %120 = arith.negf %119 : vector<8x128xf32>
    %121 = math.exp %120 : vector<8x128xf32>
    %cst_53 = arith.constant 1.000000e+00 : f32
    %122 = vector.broadcast %cst_53 : f32 to vector<8x128xf32>
    %123 = arith.addf %122, %121 : vector<8x128xf32>
    %124 = arith.divf %122, %123 : vector<8x128xf32>
    %125 = vector.extract_strided_slice %118 {offsets = [0, 128], sizes = [8, 128], strides = [1, 1]} : vector<8x512xf32> to vector<8x128xf32>
    %126 = arith.negf %125 : vector<8x128xf32>
    %127 = math.exp %126 : vector<8x128xf32>
    %cst_54 = arith.constant 1.000000e+00 : f32
    %128 = vector.broadcast %cst_54 : f32 to vector<8x128xf32>
    %129 = arith.addf %128, %127 : vector<8x128xf32>
    %130 = arith.divf %128, %129 : vector<8x128xf32>
    %131 = vector.extract_strided_slice %118 {offsets = [0, 256], sizes = [8, 128], strides = [1, 1]} : vector<8x512xf32> to vector<8x128xf32>
    %132 = math.tanh %131 : vector<8x128xf32>
    %133 = vector.extract_strided_slice %118 {offsets = [0, 384], sizes = [8, 128], strides = [1, 1]} : vector<8x512xf32> to vector<8x128xf32>
    %134 = arith.negf %133 : vector<8x128xf32>
    %135 = math.exp %134 : vector<8x128xf32>
    %cst_55 = arith.constant 1.000000e+00 : f32
    %136 = vector.broadcast %cst_55 : f32 to vector<8x128xf32>
    %137 = arith.addf %136, %135 : vector<8x128xf32>
    %138 = arith.divf %136, %137 : vector<8x128xf32>
    %139 = arith.mulf %130, %75 : vector<8x128xf32>
    %140 = arith.mulf %124, %132 : vector<8x128xf32>
    %141 = arith.addf %139, %140 : vector<8x128xf32>
    %142 = math.tanh %141 : vector<8x128xf32>
    %143 = arith.mulf %138, %142 : vector<8x128xf32>
    %c1_56 = arith.constant 1 : index
    %c0_57 = arith.constant 0 : index
    %c0_58 = arith.constant 0 : index
    %144 = vector.load %arg8[%c1_56, %c0_57, %c0_58] : memref<4x8x128xf32, #tpu.memory_space<vmem>>, vector<1x8x128xf32>
    %145 = vector.shape_cast %144 : vector<1x8x128xf32> to vector<8x128xf32>
    %146 = vector.shape_cast %143 : vector<8x128xf32> to vector<1x8x128xf32>
    tpu.vector_store %arg8[%c1_56, %c0_57, %c0_58], %146 {strides = array<i32>} : memref<4x8x128xf32, #tpu.memory_space<vmem>>, vector<1x8x128xf32>,
    %c2 = arith.constant 2 : index
    %c0_59 = arith.constant 0 : index
    %c0_60 = arith.constant 0 : index
    %147 = vector.load %arg1[%c2, %c0_59, %c0_60] : memref<4x8x512xf32, #tpu.memory_space<vmem>>, vector<1x8x512xf32>
    %148 = vector.shape_cast %147 : vector<1x8x512xf32> to vector<8x512xf32>
    %c0_61 = arith.constant 0 : index
    %c0_62 = arith.constant 0 : index
    %149 = vector.load %arg4[%c0_61, %c0_62] : memref<128x512xf32, #tpu.memory_space<vmem>>, vector<128x512xf32>
    %cst_63 = arith.constant dense<0.000000e+00> : vector<8x512xf32>
    %150 = tpu.matmul %110, %149, %cst_63 {dimension_numbers = #tpu.dot_dimension_numbers<[1], [0], [0], [1], [0, 0, 1, 1], [], []>} : vector<8x128xf32>, vector<128x512xf32>, vector<8x512xf32> -> vector<8x512xf32>
    %151 = arith.addf %148, %150 : vector<8x512xf32>
    %152 = vector.extract_strided_slice %151 {offsets = [0, 0], sizes = [8, 128], strides = [1, 1]} : vector<8x512xf32> to vector<8x128xf32>
    %153 = arith.negf %152 : vector<8x128xf32>
    %154 = math.exp %153 : vector<8x128xf32>
    %cst_64 = arith.constant 1.000000e+00 : f32
    %155 = vector.broadcast %cst_64 : f32 to vector<8x128xf32>
    %156 = arith.addf %155, %154 : vector<8x128xf32>
    %157 = arith.divf %155, %156 : vector<8x128xf32>
    %158 = vector.extract_strided_slice %151 {offsets = [0, 128], sizes = [8, 128], strides = [1, 1]} : vector<8x512xf32> to vector<8x128xf32>
    %159 = arith.negf %158 : vector<8x128xf32>
    %160 = math.exp %159 : vector<8x128xf32>
    %cst_65 = arith.constant 1.000000e+00 : f32
    %161 = vector.broadcast %cst_65 : f32 to vector<8x128xf32>
    %162 = arith.addf %161, %160 : vector<8x128xf32>
    %163 = arith.divf %161, %162 : vector<8x128xf32>
    %164 = vector.extract_strided_slice %151 {offsets = [0, 256], sizes = [8, 128], strides = [1, 1]} : vector<8x512xf32> to vector<8x128xf32>
    %165 = math.tanh %164 : vector<8x128xf32>
    %166 = vector.extract_strided_slice %151 {offsets = [0, 384], sizes = [8, 128], strides = [1, 1]} : vector<8x512xf32> to vector<8x128xf32>
    %167 = arith.negf %166 : vector<8x128xf32>
    %168 = math.exp %167 : vector<8x128xf32>
    %cst_66 = arith.constant 1.000000e+00 : f32
    %169 = vector.broadcast %cst_66 : f32 to vector<8x128xf32>
    %170 = arith.addf %169, %168 : vector<8x128xf32>
    %171 = arith.divf %169, %170 : vector<8x128xf32>
    %172 = arith.mulf %163, %108 : vector<8x128xf32>
    %173 = arith.mulf %157, %165 : vector<8x128xf32>
    %174 = arith.addf %172, %173 : vector<8x128xf32>
    %175 = math.tanh %174 : vector<8x128xf32>
    %176 = arith.mulf %171, %175 : vector<8x128xf32>
    %c0_67 = arith.constant 0 : index
    %c0_68 = arith.constant 0 : index
    %c0_69 = arith.constant 0 : index
    %177 = vector.load %arg5[%c0_67, %c0_68, %c0_69] : memref<1x128x512xf32, #tpu.memory_space<vmem>>, vector<1x128x512xf32>
    %178 = vector.shape_cast %177 : vector<1x128x512xf32> to vector<128x512xf32>
    %cst_70 = arith.constant dense<0.000000e+00> : vector<8x512xf32>
    %179 = tpu.matmul %176, %178, %cst_70 {dimension_numbers = #tpu.dot_dimension_numbers<[1], [0], [0], [1], [0, 0, 1, 1], [], []>} : vector<8x128xf32>, vector<128x512xf32>, vector<8x512xf32> -> vector<8x512xf32>
    %c0_71 = arith.constant 0 : index
    %c0_72 = arith.constant 0 : index
    %c0_73 = arith.constant 0 : index
    %180 = vector.load %arg6[%c0_71, %c0_72, %c0_73] : memref<1x128x512xf32, #tpu.memory_space<vmem>>, vector<1x128x512xf32>
    %181 = vector.shape_cast %180 : vector<1x128x512xf32> to vector<128x512xf32>
    %cst_74 = arith.constant dense<0.000000e+00> : vector<8x512xf32>
    %182 = tpu.matmul %143, %181, %cst_74 {dimension_numbers = #tpu.dot_dimension_numbers<[1], [0], [0], [1], [0, 0, 1, 1], [], []>} : vector<8x128xf32>, vector<128x512xf32>, vector<8x512xf32> -> vector<8x512xf32>
    %183 = arith.addf %179, %182 : vector<8x512xf32>
    %184 = arith.addf %183, %14 : vector<8x512xf32>
    %185 = vector.extract_strided_slice %184 {offsets = [0, 0], sizes = [8, 128], strides = [1, 1]} : vector<8x512xf32> to vector<8x128xf32>
    %186 = arith.negf %185 : vector<8x128xf32>
    %187 = math.exp %186 : vector<8x128xf32>
    %cst_75 = arith.constant 1.000000e+00 : f32
    %188 = vector.broadcast %cst_75 : f32 to vector<8x128xf32>
    %189 = arith.addf %188, %187 : vector<8x128xf32>
    %190 = arith.divf %188, %189 : vector<8x128xf32>
    %191 = vector.extract_strided_slice %184 {offsets = [0, 128], sizes = [8, 128], strides = [1, 1]} : vector<8x512xf32> to vector<8x128xf32>
    %192 = arith.negf %191 : vector<8x128xf32>
    %193 = math.exp %192 : vector<8x128xf32>
    %cst_76 = arith.constant 1.000000e+00 : f32
    %194 = vector.broadcast %cst_76 : f32 to vector<8x128xf32>
    %195 = arith.addf %194, %193 : vector<8x128xf32>
    %196 = arith.divf %194, %195 : vector<8x128xf32>
    %197 = vector.extract_strided_slice %184 {offsets = [0, 256], sizes = [8, 128], strides = [1, 1]} : vector<8x512xf32> to vector<8x128xf32>
    %198 = math.tanh %197 : vector<8x128xf32>
    %199 = vector.extract_strided_slice %184 {offsets = [0, 384], sizes = [8, 128], strides = [1, 1]} : vector<8x512xf32> to vector<8x128xf32>
    %200 = arith.negf %199 : vector<8x128xf32>
    %201 = math.exp %200 : vector<8x128xf32>
    %cst_77 = arith.constant 1.000000e+00 : f32
    %202 = vector.broadcast %cst_77 : f32 to vector<8x128xf32>
    %203 = arith.addf %202, %201 : vector<8x128xf32>
    %204 = arith.divf %202, %203 : vector<8x128xf32>
    %205 = arith.mulf %196, %141 : vector<8x128xf32>
    %206 = arith.mulf %190, %198 : vector<8x128xf32>
    %207 = arith.addf %205, %206 : vector<8x128xf32>
    %208 = math.tanh %207 : vector<8x128xf32>
    %209 = arith.mulf %204, %208 : vector<8x128xf32>
    %c2_78 = arith.constant 2 : index
    %c0_79 = arith.constant 0 : index
    %c0_80 = arith.constant 0 : index
    %210 = vector.load %arg8[%c2_78, %c0_79, %c0_80] : memref<4x8x128xf32, #tpu.memory_space<vmem>>, vector<1x8x128xf32>
    %211 = vector.shape_cast %210 : vector<1x8x128xf32> to vector<8x128xf32>
    %212 = vector.shape_cast %209 : vector<8x128xf32> to vector<1x8x128xf32>
    tpu.vector_store %arg8[%c2_78, %c0_79, %c0_80], %212 {strides = array<i32>} : memref<4x8x128xf32, #tpu.memory_space<vmem>>, vector<1x8x128xf32>,
    %c3 = arith.constant 3 : index
    %c0_81 = arith.constant 0 : index
    %c0_82 = arith.constant 0 : index
    %213 = vector.load %arg1[%c3, %c0_81, %c0_82] : memref<4x8x512xf32, #tpu.memory_space<vmem>>, vector<1x8x512xf32>
    %214 = vector.shape_cast %213 : vector<1x8x512xf32> to vector<8x512xf32>
    %c0_83 = arith.constant 0 : index
    %c0_84 = arith.constant 0 : index
    %215 = vector.load %arg4[%c0_83, %c0_84] : memref<128x512xf32, #tpu.memory_space<vmem>>, vector<128x512xf32>
    %cst_85 = arith.constant dense<0.000000e+00> : vector<8x512xf32>
    %216 = tpu.matmul %176, %215, %cst_85 {dimension_numbers = #tpu.dot_dimension_numbers<[1], [0], [0], [1], [0, 0, 1, 1], [], []>} : vector<8x128xf32>, vector<128x512xf32>, vector<8x512xf32> -> vector<8x512xf32>
    %217 = arith.addf %214, %216 : vector<8x512xf32>
    %218 = vector.extract_strided_slice %217 {offsets = [0, 0], sizes = [8, 128], strides = [1, 1]} : vector<8x512xf32> to vector<8x128xf32>
    %219 = arith.negf %218 : vector<8x128xf32>
    %220 = math.exp %219 : vector<8x128xf32>
    %cst_86 = arith.constant 1.000000e+00 : f32
    %221 = vector.broadcast %cst_86 : f32 to vector<8x128xf32>
    %222 = arith.addf %221, %220 : vector<8x128xf32>
    %223 = arith.divf %221, %222 : vector<8x128xf32>
    %224 = vector.extract_strided_slice %217 {offsets = [0, 128], sizes = [8, 128], strides = [1, 1]} : vector<8x512xf32> to vector<8x128xf32>
    %225 = arith.negf %224 : vector<8x128xf32>
    %226 = math.exp %225 : vector<8x128xf32>
    %cst_87 = arith.constant 1.000000e+00 : f32
    %227 = vector.broadcast %cst_87 : f32 to vector<8x128xf32>
    %228 = arith.addf %227, %226 : vector<8x128xf32>
    %229 = arith.divf %227, %228 : vector<8x128xf32>
    %230 = vector.extract_strided_slice %217 {offsets = [0, 256], sizes = [8, 128], strides = [1, 1]} : vector<8x512xf32> to vector<8x128xf32>
    %231 = math.tanh %230 : vector<8x128xf32>
    %232 = vector.extract_strided_slice %217 {offsets = [0, 384], sizes = [8, 128], strides = [1, 1]} : vector<8x512xf32> to vector<8x128xf32>
    %233 = arith.negf %232 : vector<8x128xf32>
    %234 = math.exp %233 : vector<8x128xf32>
    %cst_88 = arith.constant 1.000000e+00 : f32
    %235 = vector.broadcast %cst_88 : f32 to vector<8x128xf32>
    %236 = arith.addf %235, %234 : vector<8x128xf32>
    %237 = arith.divf %235, %236 : vector<8x128xf32>
    %238 = arith.mulf %229, %174 : vector<8x128xf32>
    %239 = arith.mulf %223, %231 : vector<8x128xf32>
    %240 = arith.addf %238, %239 : vector<8x128xf32>
    %241 = math.tanh %240 : vector<8x128xf32>
    %242 = arith.mulf %237, %241 : vector<8x128xf32>
    %c0_89 = arith.constant 0 : index
    %c0_90 = arith.constant 0 : index
    %c0_91 = arith.constant 0 : index
    %243 = vector.load %arg5[%c0_89, %c0_90, %c0_91] : memref<1x128x512xf32, #tpu.memory_space<vmem>>, vector<1x128x512xf32>
    %244 = vector.shape_cast %243 : vector<1x128x512xf32> to vector<128x512xf32>
    %cst_92 = arith.constant dense<0.000000e+00> : vector<8x512xf32>
    %245 = tpu.matmul %242, %244, %cst_92 {dimension_numbers = #tpu.dot_dimension_numbers<[1], [0], [0], [1], [0, 0, 1, 1], [], []>} : vector<8x128xf32>, vector<128x512xf32>, vector<8x512xf32> -> vector<8x512xf32>
    %c0_93 = arith.constant 0 : index
    %c0_94 = arith.constant 0 : index
    %c0_95 = arith.constant 0 : index
    %246 = vector.load %arg6[%c0_93, %c0_94, %c0_95] : memref<1x128x512xf32, #tpu.memory_space<vmem>>, vector<1x128x512xf32>
    %247 = vector.shape_cast %246 : vector<1x128x512xf32> to vector<128x512xf32>
    %cst_96 = arith.constant dense<0.000000e+00> : vector<8x512xf32>
    %248 = tpu.matmul %209, %247, %cst_96 {dimension_numbers = #tpu.dot_dimension_numbers<[1], [0], [0], [1], [0, 0, 1, 1], [], []>} : vector<8x128xf32>, vector<128x512xf32>, vector<8x512xf32> -> vector<8x512xf32>
    %249 = arith.addf %245, %248 : vector<8x512xf32>
    %250 = arith.addf %249, %14 : vector<8x512xf32>
    %251 = vector.extract_strided_slice %250 {offsets = [0, 0], sizes = [8, 128], strides = [1, 1]} : vector<8x512xf32> to vector<8x128xf32>
    %252 = arith.negf %251 : vector<8x128xf32>
    %253 = math.exp %252 : vector<8x128xf32>
    %cst_97 = arith.constant 1.000000e+00 : f32
    %254 = vector.broadcast %cst_97 : f32 to vector<8x128xf32>
    %255 = arith.addf %254, %253 : vector<8x128xf32>
    %256 = arith.divf %254, %255 : vector<8x128xf32>
    %257 = vector.extract_strided_slice %250 {offsets = [0, 128], sizes = [8, 128], strides = [1, 1]} : vector<8x512xf32> to vector<8x128xf32>
    %258 = arith.negf %257 : vector<8x128xf32>
    %259 = math.exp %258 : vector<8x128xf32>
    %cst_98 = arith.constant 1.000000e+00 : f32
    %260 = vector.broadcast %cst_98 : f32 to vector<8x128xf32>
    %261 = arith.addf %260, %259 : vector<8x128xf32>
    %262 = arith.divf %260, %261 : vector<8x128xf32>
    %263 = vector.extract_strided_slice %250 {offsets = [0, 256], sizes = [8, 128], strides = [1, 1]} : vector<8x512xf32> to vector<8x128xf32>
    %264 = math.tanh %263 : vector<8x128xf32>
    %265 = vector.extract_strided_slice %250 {offsets = [0, 384], sizes = [8, 128], strides = [1, 1]} : vector<8x512xf32> to vector<8x128xf32>
    %266 = arith.negf %265 : vector<8x128xf32>
    %267 = math.exp %266 : vector<8x128xf32>
    %cst_99 = arith.constant 1.000000e+00 : f32
    %268 = vector.broadcast %cst_99 : f32 to vector<8x128xf32>
    %269 = arith.addf %268, %267 : vector<8x128xf32>
    %270 = arith.divf %268, %269 : vector<8x128xf32>
    %271 = arith.mulf %262, %207 : vector<8x128xf32>
    %272 = arith.mulf %256, %264 : vector<8x128xf32>
    %273 = arith.addf %271, %272 : vector<8x128xf32>
    %274 = math.tanh %273 : vector<8x128xf32>
    %275 = arith.mulf %270, %274 : vector<8x128xf32>
    %c3_100 = arith.constant 3 : index
    %c0_101 = arith.constant 0 : index
    %c0_102 = arith.constant 0 : index
    %276 = vector.load %arg8[%c3_100, %c0_101, %c0_102] : memref<4x8x128xf32, #tpu.memory_space<vmem>>, vector<1x8x128xf32>
    %277 = vector.shape_cast %276 : vector<1x8x128xf32> to vector<8x128xf32>
    %278 = vector.shape_cast %275 : vector<8x128xf32> to vector<1x8x128xf32>
    tpu.vector_store %arg8[%c3_100, %c0_101, %c0_102], %278 {strides = array<i32>} : memref<4x8x128xf32, #tpu.memory_space<vmem>>, vector<1x8x128xf32>,
    %c0_103 = arith.constant 0 : index
    %c0_104 = arith.constant 0 : index
    %c0_105 = arith.constant 0 : index
    %279 = vector.load %arg9[%c0_103, %c0_104, %c0_105] : memref<2x8x128xf32, #tpu.memory_space<vmem>>, vector<1x8x128xf32>
    %280 = vector.shape_cast %279 : vector<1x8x128xf32> to vector<8x128xf32>
    %281 = vector.shape_cast %242 : vector<8x128xf32> to vector<1x8x128xf32>
    tpu.vector_store %arg9[%c0_103, %c0_104, %c0_105], %281 {strides = array<i32>} : memref<2x8x128xf32, #tpu.memory_space<vmem>>, vector<1x8x128xf32>,
    %c0_106 = arith.constant 0 : index
    %c0_107 = arith.constant 0 : index
    %c0_108 = arith.constant 0 : index
    %282 = vector.load %arg10[%c0_106, %c0_107, %c0_108] : memref<2x8x128xf32, #tpu.memory_space<vmem>>, vector<1x8x128xf32>
    %283 = vector.shape_cast %282 : vector<1x8x128xf32> to vector<8x128xf32>
    %284 = vector.shape_cast %240 : vector<8x128xf32> to vector<1x8x128xf32>
    tpu.vector_store %arg10[%c0_106, %c0_107, %c0_108], %284 {strides = array<i32>} : memref<2x8x128xf32, #tpu.memory_space<vmem>>, vector<1x8x128xf32>,
    %c1_109 = arith.constant 1 : index
    %c0_110 = arith.constant 0 : index
    %c0_111 = arith.constant 0 : index
    %285 = vector.load %arg9[%c1_109, %c0_110, %c0_111] : memref<2x8x128xf32, #tpu.memory_space<vmem>>, vector<1x8x128xf32>
    %286 = vector.shape_cast %285 : vector<1x8x128xf32> to vector<8x128xf32>
    %287 = vector.shape_cast %275 : vector<8x128xf32> to vector<1x8x128xf32>
    tpu.vector_store %arg9[%c1_109, %c0_110, %c0_111], %287 {strides = array<i32>} : memref<2x8x128xf32, #tpu.memory_space<vmem>>, vector<1x8x128xf32>,
    %c1_112 = arith.constant 1 : index
    %c0_113 = arith.constant 0 : index
    %c0_114 = arith.constant 0 : index
    %288 = vector.load %arg10[%c1_112, %c0_113, %c0_114] : memref<2x8x128xf32, #tpu.memory_space<vmem>>, vector<1x8x128xf32>
    %289 = vector.shape_cast %288 : vector<1x8x128xf32> to vector<8x128xf32>
    %290 = vector.shape_cast %273 : vector<8x128xf32> to vector<1x8x128xf32>
    tpu.vector_store %arg10[%c1_112, %c0_113, %c0_114], %290 {strides = array<i32>} : memref<2x8x128xf32, #tpu.memory_space<vmem>>, vector<1x8x128xf32>,
    return
  }
  func.func @transform_0(%arg0: i32) -> (i32, i32, i32) {
    %c0_i32 = arith.constant 0 : i32
    %c0_i32_0 = arith.constant 0 : i32
    %c0_i32_1 = arith.constant 0 : i32
    return %arg0, %c0_i32, %c0_i32_0 : i32, i32, i32
  }
  func.func @transform_1(%arg0: i32) -> (i32, i32, i32) {
    %c0_i32 = arith.constant 0 : i32
    %c0_i32_0 = arith.constant 0 : i32
    %c0_i32_1 = arith.constant 0 : i32
    %c0_i32_2 = arith.constant 0 : i32
    return %c0_i32, %c0_i32_0, %c0_i32_1 : i32, i32, i32
  }
  func.func @transform_2(%arg0: i32) -> (i32, i32, i32) {
    %c0_i32 = arith.constant 0 : i32
    %c0_i32_0 = arith.constant 0 : i32
    %c0_i32_1 = arith.constant 0 : i32
    %c0_i32_2 = arith.constant 0 : i32
    return %c0_i32, %c0_i32_0, %c0_i32_1 : i32, i32, i32
  }
  func.func @transform_3(%arg0: i32) -> (i32, i32) {
    %c0_i32 = arith.constant 0 : i32
    %c0_i32_0 = arith.constant 0 : i32
    %c0_i32_1 = arith.constant 0 : i32
    return %c0_i32, %c0_i32_0 : i32, i32
  }
  func.func @transform_4(%arg0: i32) -> (i32, i32, i32) {
    %c0_i32 = arith.constant 0 : i32
    %c0_i32_0 = arith.constant 0 : i32
    %c0_i32_1 = arith.constant 0 : i32
    %c0_i32_2 = arith.constant 0 : i32
    return %c0_i32, %c0_i32_0, %c0_i32_1 : i32, i32, i32
  }
  func.func @transform_5(%arg0: i32) -> (i32, i32, i32) {
    %c0_i32 = arith.constant 0 : i32
    %c0_i32_0 = arith.constant 0 : i32
    %c0_i32_1 = arith.constant 0 : i32
    %c0_i32_2 = arith.constant 0 : i32
    return %c0_i32, %c0_i32_0, %c0_i32_1 : i32, i32, i32
  }
  func.func @transform_6(%arg0: i32) -> (i32, i32, i32) {
    %c0_i32 = arith.constant 0 : i32
    %c0_i32_0 = arith.constant 0 : i32
    %c0_i32_1 = arith.constant 0 : i32
    %c0_i32_2 = arith.constant 0 : i32
    return %c0_i32, %c0_i32_0, %c0_i32_1 : i32, i32, i32
  }
  func.func @transform_7(%arg0: i32) -> (i32, i32, i32) {
    %c0_i32 = arith.constant 0 : i32
    %c0_i32_0 = arith.constant 0 : i32
    %c0_i32_1 = arith.constant 0 : i32
    return %arg0, %c0_i32, %c0_i32_0 : i32, i32, i32
  }
  func.func @transform_8(%arg0: i32) -> (i32, i32, i32) {
    %c0_i32 = arith.constant 0 : i32
    %c0_i32_0 = arith.constant 0 : i32
    %c0_i32_1 = arith.constant 0 : i32
    %c0_i32_2 = arith.constant 0 : i32
    return %c0_i32, %c0_i32_0, %c0_i32_1 : i32, i32, i32
  }
  func.func @transform_9(%arg0: i32) -> (i32, i32, i32) {
    %c0_i32 = arith.constant 0 : i32
    %c0_i32_0 = arith.constant 0 : i32
    %c0_i32_1 = arith.constant 0 : i32
    %c0_i32_2 = arith.constant 0 : i32
    return %c0_i32, %c0_i32_0, %c0_i32_1 : i32, i32, i32
  }
}

</mosaic_0001>

<llo_original>
// kernel: tpu_custom_call.1
$region0: #{tpu_custom_call.1}
  #allocation0 [shape = 'u32[]', space=smem, size = 0x4, offset = 0x4, fixed_abs, tag = 'smem constant byte address 0x4 - core index']
  #allocation1 [shape = 'u32[144,128]{1,0:T(1,128)}', space=vmem, size = 0x12000, scoped, tag = 'internal scratch']
  %s0 = inlined_call_operand.hbm [shape: f32[8,8,512], index: 0, kind: input, shape index: {}]
  %s1 = inlined_call_operand.hbm [shape: f32[2,8,128], index: 1, kind: input, shape index: {}]
  %s2 = inlined_call_operand.hbm [shape: f32[2,8,128], index: 2, kind: input, shape index: {}]
  %s3 = inlined_call_operand.hbm [shape: f32[128,512], index: 3, kind: input, shape index: {}]
  %s4 = inlined_call_operand.hbm [shape: f32[1,128,512], index: 4, kind: input, shape index: {}]
  %s5 = inlined_call_operand.hbm [shape: f32[1,128,512], index: 5, kind: input, shape index: {}]
  %s6 = inlined_call_operand.vmem [shape: f32[1,1,512], index: 6, kind: input, shape index: {}]
  %s7 = inlined_call_operand.hbm [shape: f32[8,8,128], index: 7, kind: output, shape index: {0}]
  %s8 = inlined_call_operand.hbm [shape: f32[2,8,128], index: 8, kind: output, shape index: {1}]
  %s9 = inlined_call_operand.hbm [shape: f32[2,8,128], index: 9, kind: output, shape index: {2}]
  %10 = xla_tuple %s7, %s8, %s9
  %s11 = sld [smem:[#allocation0]]
  $region105: #{tpu_custom_call.1} parent=0
    _
  %s13 = ssub.s32 1, %s11
  %s14 = scalar_select 0, %s13, %s11
  $region1: #{tpu_custom_call.1} parent=0
    #allocation2 [shape = 'u8[131072]{0}', space=vmem, size = 0x20000, scoped, tag = 'input window, operand 0']
    #allocation3 [shape = 's32[2]{0}', space=sflag, size = 0x8, scoped, tag = 'scoped memory for tpu_custom_call.1']
    #allocation4 [shape = 's32[2]{0}', space=sflag, size = 0x8, scoped, tag = 'scoped memory for tpu_custom_call.1']
    #allocation5 [shape = 'u8[8192]{0}', space=vmem, size = 0x2000, scoped, tag = 'input window, operand 1, single buffered']
    #allocation6 [shape = 's32[1]{0}', space=sflag, size = 0x4, scoped, tag = 'scoped memory for tpu_custom_call.1']
    #allocation7 [shape = 'u8[8192]{0}', space=vmem, size = 0x2000, scoped, tag = 'input window, operand 2, single buffered']
    #allocation8 [shape = 'u8[262144]{0}', space=vmem, size = 0x40000, scoped, tag = 'input window, operand 3, single buffered']
    #allocation9 [shape = 's32[1]{0}', space=sflag, size = 0x4, scoped, tag = 'scoped memory for tpu_custom_call.1']
    #allocation10 [shape = 'u8[262144]{0}', space=vmem, size = 0x40000, scoped, tag = 'input window, operand 4, single buffered']
    #allocation11 [shape = 'u8[262144]{0}', space=vmem, size = 0x40000, scoped, tag = 'input window, operand 5, single buffered']
    #allocation12 [shape = 's32[1]{0}', space=sflag, size = 0x4, scoped, tag = 'scoped memory for tpu_custom_call.1']
    #allocation13 [shape = 'u8[32768]{0}', space=vmem, size = 0x8000, scoped, tag = 'output window, operand 0']
    #allocation14 [shape = 'u8[8192]{0}', space=vmem, size = 0x2000, scoped, tag = 'output window, operand 1, single buffered']
    #allocation15 [shape = 's32[1]{0}', space=sflag, size = 0x4, scoped, tag = 'scoped memory for tpu_custom_call.1']
    #allocation16 [shape = 'u8[8192]{0}', space=vmem, size = 0x2000, scoped, tag = 'output window, operand 2, single buffered']
    %15 = vsyncpa [#allocation3], 0
    %s16 = scalar_lea.sflag [#allocation3], 1
    %17 = vsyncpa %s16, 0
    %18 = vsyncpa [#allocation6], 0
    %19 = vsyncpa [#allocation9], 0
    %20 = vsyncpa [#allocation12], 0
    %21 = vsyncpa [#allocation4], 0
    %s22 = scalar_lea.sflag [#allocation4], 1
    %23 = vsyncpa %s22, 0
    %24 = vsyncpa [#allocation15], 0
    loop: start=0, step=1, limit=4
    $region2: #{tpu_custom_call.1} parent=1 // loop_pre_header
      _
    $region3: #{tpu_custom_call.1} parent=1 // loop_header
      %s26 = sphi 0, %s30
      %p27 = scmp.ge.s32.totalorder %s26, 4
      %s36 = sphi 0, %s38
      %s39 = sphi 0, %s36
      %s40 = sphi 0, %s39
      %s56 = sphi 0, %s40
      %s60 = sphi 0, %s60
      %s62 = sphi 0, %s60
      %s63 = sphi 0, %s62
      %s77 = sphi 0, %s63
      %s81 = sphi 0, %s81
      %s83 = sphi 0, %s81
      %s84 = sphi 0, %s83
      %s98 = sphi 0, %s84
      %s102 = sphi 0, %s102
      %s104 = sphi 0, %s102
      %s105 = sphi 0, %s104
      %s119 = sphi 0, %s105
      %s123 = sphi 0, %s123
      %s125 = sphi 0, %s123
      %s126 = sphi 0, %s125
      %s140 = sphi 0, %s126
      %s144 = sphi 0, %s144
      %s146 = sphi 0, %s144
      %s147 = sphi 0, %s146
      %s161 = sphi 0, %s147
      %s165 = sphi 0, %s165
      %s167 = sphi 0, %s165
      %s168 = sphi 0, %s167
      %s182 = sphi 0, %s168
      %s188 = sphi 0, %s190
      %s191 = sphi 0, %s188
      %s192 = sphi 0, %s191
      %s208 = sphi 0, %s192
      %s212 = sphi 0, %s212
      %s214 = sphi 0, %s212
      %s215 = sphi 0, %s214
      %s229 = sphi 0, %s215
      %s233 = sphi 0, %s233
      %s235 = sphi 0, %s233
      %s236 = sphi 0, %s235
      %s250 = sphi 0, %s236
    $region4: #{tpu_custom_call.1} parent=1 // loop_header_branch
      %29 = sbr.rel (%p27) target = $region8
    $region5: #{tpu_custom_call.1} parent=1 // loop_body
      %s31 = ssub.s32 %s26, 1
      %s32 = ssub.s32 %s26, 2
      %s33 = sadd.s32 %s26, 1
      %s34 = ssub.s32 %s26, %s33
      %p35 = scmp.eq.s32.totalorder %s34, 0
      %s37 = sadd.s32 %s36, 1
      %s38 = scalar_select %p35, %s36, %s37
      %p41 = pneg %p35
      %p42 = scmp.eq.s32.totalorder %s26, 1
      %p43 = por %p41, %p42
      %p44 = scmp.ne.s32.totalorder %s36, %s39
      %p45 = scmp.eq.s32.totalorder %s26, 0
      %p46 = por %p44, %p45
      %p47 = scmp.ne.s32.totalorder %s36, %s39
      %p48 = scmp.eq.s32.totalorder %s31, 1
      %p49 = por %p47, %p48
      %p50 = scmp.ne.s32.totalorder %s39, %s40
      %p51 = scmp.eq.s32.totalorder %s31, 0
      %p52 = por %p50, %p51
      %p53 = scmp.ne.s32.totalorder %s39, %s40
      %p54 = scmp.eq.s32.totalorder %s32, 1
      %p55 = por %p53, %p54
      %p57 = scmp.ne.s32.totalorder %s40, %s56
      %p58 = scmp.eq.s32.totalorder %s32, 0
      %p59 = por %p57, %p58
      %s61 = sadd.s32 %s60, 1
      %p64 = scmp.eq.s32.totalorder %s26, 1
      %p65 = scmp.ne.s32.totalorder %s60, %s62
      %p66 = scmp.eq.s32.totalorder %s26, 0
      %p67 = por %p65, %p66
      %p68 = scmp.ne.s32.totalorder %s60, %s62
      %p69 = scmp.eq.s32.totalorder %s31, 1
      %p70 = por %p68, %p69
      %p71 = scmp.ne.s32.totalorder %s62, %s63
      %p72 = scmp.eq.s32.totalorder %s31, 0
      %p73 = por %p71, %p72
      %p74 = scmp.ne.s32.totalorder %s62, %s63
      %p75 = scmp.eq.s32.totalorder %s32, 1
      %p76 = por %p74, %p75
      %p78 = scmp.ne.s32.totalorder %s63, %s77
      %p79 = scmp.eq.s32.totalorder %s32, 0
      %p80 = por %p78, %p79
      %s82 = sadd.s32 %s81, 1
      %p85 = scmp.eq.s32.totalorder %s26, 1
      %p86 = scmp.ne.s32.totalorder %s81, %s83
      %p87 = scmp.eq.s32.totalorder %s26, 0
      %p88 = por %p86, %p87
      %p89 = scmp.ne.s32.totalorder %s81, %s83
      %p90 = scmp.eq.s32.totalorder %s31, 1
      %p91 = por %p89, %p90
      %p92 = scmp.ne.s32.totalorder %s83, %s84
      %p93 = scmp.eq.s32.totalorder %s31, 0
      %p94 = por %p92, %p93
      %p95 = scmp.ne.s32.totalorder %s83, %s84
      %p96 = scmp.eq.s32.totalorder %s32, 1
      %p97 = por %p95, %p96
      %p99 = scmp.ne.s32.totalorder %s84, %s98
      %p100 = scmp.eq.s32.totalorder %s32, 0
      %p101 = por %p99, %p100
      %s103 = sadd.s32 %s102, 1
      %p106 = scmp.eq.s32.totalorder %s26, 1
      %p107 = scmp.ne.s32.totalorder %s102, %s104
      %p108 = scmp.eq.s32.totalorder %s26, 0
      %p109 = por %p107, %p108
      %p110 = scmp.ne.s32.totalorder %s102, %s104
      %p111 = scmp.eq.s32.totalorder %s31, 1
      %p112 = por %p110, %p111
      %p113 = scmp.ne.s32.totalorder %s104, %s105
      %p114 = scmp.eq.s32.totalorder %s31, 0
      %p115 = por %p113, %p114
      %p116 = scmp.ne.s32.totalorder %s104, %s105
      %p117 = scmp.eq.s32.totalorder %s32, 1
      %p118 = por %p116, %p117
      %p120 = scmp.ne.s32.totalorder %s105, %s119
      %p121 = scmp.eq.s32.totalorder %s32, 0
      %p122 = por %p120, %p121
      %s124 = sadd.s32 %s123, 1
      %p127 = scmp.eq.s32.totalorder %s26, 1
      %p128 = scmp.ne.s32.totalorder %s123, %s125
      %p129 = scmp.eq.s32.totalorder %s26, 0
      %p130 = por %p128, %p129
      %p131 = scmp.ne.s32.totalorder %s123, %s125
      %p132 = scmp.eq.s32.totalorder %s31, 1
      %p133 = por %p131, %p132
      %p134 = scmp.ne.s32.totalorder %s125, %s126
      %p135 = scmp.eq.s32.totalorder %s31, 0
      %p136 = por %p134, %p135
      %p137 = scmp.ne.s32.totalorder %s125, %s126
      %p138 = scmp.eq.s32.totalorder %s32, 1
      %p139 = por %p137, %p138
      %p141 = scmp.ne.s32.totalorder %s126, %s140
      %p142 = scmp.eq.s32.totalorder %s32, 0
      %p143 = por %p141, %p142
      %s145 = sadd.s32 %s144, 1
      %p148 = scmp.eq.s32.totalorder %s26, 1
      %p149 = scmp.ne.s32.totalorder %s144, %s146
      %p150 = scmp.eq.s32.totalorder %s26, 0
      %p151 = por %p149, %p150
      %p152 = scmp.ne.s32.totalorder %s144, %s146
      %p153 = scmp.eq.s32.totalorder %s31, 1
      %p154 = por %p152, %p153
      %p155 = scmp.ne.s32.totalorder %s146, %s147
      %p156 = scmp.eq.s32.totalorder %s31, 0
      %p157 = por %p155, %p156
      %p158 = scmp.ne.s32.totalorder %s146, %s147
      %p159 = scmp.eq.s32.totalorder %s32, 1
      %p160 = por %p158, %p159
      %p162 = scmp.ne.s32.totalorder %s147, %s161
      %p163 = scmp.eq.s32.totalorder %s32, 0
      %p164 = por %p162, %p163
      %s166 = sadd.s32 %s165, 1
      %p169 = scmp.eq.s32.totalorder %s26, 1
      %p170 = scmp.ne.s32.totalorder %s165, %s167
      %p171 = scmp.eq.s32.totalorder %s26, 0
      %p172 = por %p170, %p171
      %p173 = scmp.ne.s32.totalorder %s165, %s167
      %p174 = scmp.eq.s32.totalorder %s31, 1
      %p175 = por %p173, %p174
      %p176 = scmp.ne.s32.totalorder %s167, %s168
      %p177 = scmp.eq.s32.totalorder %s31, 0
      %p178 = por %p176, %p177
      %p179 = scmp.ne.s32.totalorder %s167, %s168
      %p180 = scmp.eq.s32.totalorder %s32, 1
      %p181 = por %p179, %p180
      %p183 = scmp.ne.s32.totalorder %s168, %s182
      %p184 = scmp.eq.s32.totalorder %s32, 0
      %p185 = por %p183, %p184
      %s186 = ssub.s32 %s26, %s33
      %p187 = scmp.eq.s32.totalorder %s186, 0
      %s189 = sadd.s32 %s188, 1
      %s190 = scalar_select %p187, %s188, %s189
      %p193 = pneg %p187
      %p194 = scmp.eq.s32.totalorder %s26, 1
      %p195 = por %p193, %p194
      %p196 = scmp.ne.s32.totalorder %s188, %s191
      %p197 = scmp.eq.s32.totalorder %s26, 0
      %p198 = por %p196, %p197
      %p199 = scmp.ne.s32.totalorder %s188, %s191
      %p200 = scmp.eq.s32.totalorder %s31, 1
      %p201 = por %p199, %p200
      %p202 = scmp.ne.s32.totalorder %s191, %s192
      %p203 = scmp.eq.s32.totalorder %s31, 0
      %p204 = por %p202, %p203
      %p205 = scmp.ne.s32.totalorder %s191, %s192
      %p206 = scmp.eq.s32.totalorder %s32, 1
      %p207 = por %p205, %p206
      %p209 = scmp.ne.s32.totalorder %s192, %s208
      %p210 = scmp.eq.s32.totalorder %s32, 0
      %p211 = por %p209, %p210
      %s213 = sadd.s32 %s212, 1
      %p216 = scmp.eq.s32.totalorder %s26, 1
      %p217 = scmp.ne.s32.totalorder %s212, %s214
      %p218 = scmp.eq.s32.totalorder %s26, 0
      %p219 = por %p217, %p218
      %p220 = scmp.ne.s32.totalorder %s212, %s214
      %p221 = scmp.eq.s32.totalorder %s31, 1
      %p222 = por %p220, %p221
      %p223 = scmp.ne.s32.totalorder %s214, %s215
      %p224 = scmp.eq.s32.totalorder %s31, 0
      %p225 = por %p223, %p224
      %p226 = scmp.ne.s32.totalorder %s214, %s215
      %p227 = scmp.eq.s32.totalorder %s32, 1
      %p228 = por %p226, %p227
      %p230 = scmp.ne.s32.totalorder %s215, %s229
      %p231 = scmp.eq.s32.totalorder %s32, 0
      %p232 = por %p230, %p231
      %s234 = sadd.s32 %s233, 1
      %p237 = scmp.eq.s32.totalorder %s26, 1
      %p238 = scmp.ne.s32.totalorder %s233, %s235
      %p239 = scmp.eq.s32.totalorder %s26, 0
      %p240 = por %p238, %p239
      %p241 = scmp.ne.s32.totalorder %s233, %s235
      %p242 = scmp.eq.s32.totalorder %s31, 1
      %p243 = por %p241, %p242
      %p244 = scmp.ne.s32.totalorder %s235, %s236
      %p245 = scmp.eq.s32.totalorder %s31, 0
      %p246 = por %p244, %p245
      %p247 = scmp.ne.s32.totalorder %s235, %s236
      %p248 = scmp.eq.s32.totalorder %s32, 1
      %p249 = por %p247, %p248
      %p251 = scmp.ne.s32.totalorder %s236, %s250
      %p252 = scmp.eq.s32.totalorder %s32, 0
      %p253 = por %p251, %p252
      %p254 = scmp.le.s32.totalorder 1, %s26
      %p255 = scmp.lt.s32.totalorder %s26, 3
      %p256 = pnand %p254, %p255
      %p257 = pneg %p256
      // Predicated region
      $region9: #{tpu_custom_call.1} parent=5 // pred_check
        _
      $region10: #{tpu_custom_call.1} parent=5 // pred_check_branch
        %259 = sbr.rel (%p256) target = $region12
      $region11: #{tpu_custom_call.1} parent=5 // pred_region
        %s260 = ssub.s32 %s26, 1
        // Predicated region
        $region13: #{tpu_custom_call.1} parent=11 // pred_check
          %p261 = pneg %p73
        $region14: #{tpu_custom_call.1} parent=11 // pred_check_branch
          %263 = sbr.rel (%p261) target = $region16
        $region15: #{tpu_custom_call.1} parent=11 // pred_region
          %s265 = ssub.s32 256, 256
          %266 = vsyncadd [#allocation6], %s265
          %s267 = sshll.u32 [#allocation5], 4
          %s268 = int_to_ptr.vmem [resolvable:$true] %s267
          %273 = dma.hbm_to_vmem [thread:$0]  %s1, 256, %s268, [#allocation6], 128, 128, 8
        $region16: #{tpu_custom_call.1} parent=11 // pred_fallthru
          _
        // Predicated region
        $region17: #{tpu_custom_call.1} parent=11 // pred_check
          %p274 = pneg %p94
        $region18: #{tpu_custom_call.1} parent=11 // pred_check_branch
          %276 = sbr.rel (%p274) target = $region20
        $region19: #{tpu_custom_call.1} parent=11 // pred_region
          %s278 = ssub.s32 256, 256
          %279 = vsyncadd [#allocation6], %s278
          %s280 = sshll.u32 [#allocation7], 4
          %s281 = int_to_ptr.vmem [resolvable:$true] %s280
          %286 = dma.hbm_to_vmem [thread:$0]  %s2, 256, %s281, [#allocation6], 128, 128, 8
        $region20: #{tpu_custom_call.1} parent=11 // pred_fallthru
          _
        // Predicated region
        $region21: #{tpu_custom_call.1} parent=11 // pred_check
          %p287 = pneg %p115
        $region22: #{tpu_custom_call.1} parent=11 // pred_check_branch
          %289 = sbr.rel (%p287) target = $region24
        $region23: #{tpu_custom_call.1} parent=11 // pred_region
          %s291 = ssub.s32 8192, 8192
          %292 = vsyncadd [#allocation9], %s291
          %s293 = sshll.u32 [#allocation8], 4
          %s294 = int_to_ptr.vmem [resolvable:$true] %s293
          %299 = dma.hbm_to_vmem [thread:$0]  %s3, 8192, %s294, [#allocation9], 512, 512, 32
        $region24: #{tpu_custom_call.1} parent=11 // pred_fallthru
          _
        // Predicated region
        $region25: #{tpu_custom_call.1} parent=11 // pred_check
          %p300 = pneg %p136
        $region26: #{tpu_custom_call.1} parent=11 // pred_check_branch
          %302 = sbr.rel (%p300) target = $region28
        $region27: #{tpu_custom_call.1} parent=11 // pred_region
          %s304 = ssub.s32 8192, 8192
          %305 = vsyncadd [#allocation9], %s304
          %s306 = sshll.u32 [#allocation10], 4
          %s307 = int_to_ptr.vmem [resolvable:$true] %s306
          %312 = dma.hbm_to_vmem [thread:$0]  %s4, 8192, %s307, [#allocation9], 512, 512, 32
        $region28: #{tpu_custom_call.1} parent=11 // pred_fallthru
          _
        // Predicated region
        $region29: #{tpu_custom_call.1} parent=11 // pred_check
          %p313 = pneg %p157
        $region30: #{tpu_custom_call.1} parent=11 // pred_check_branch
          %315 = sbr.rel (%p313) target = $region32
        $region31: #{tpu_custom_call.1} parent=11 // pred_region
          %s317 = ssub.s32 8192, 8192
          %318 = vsyncadd [#allocation12], %s317
          %s319 = sshll.u32 [#allocation11], 4
          %s320 = int_to_ptr.vmem [resolvable:$true] %s319
          %325 = dma.hbm_to_vmem [thread:$0]  %s5, 8192, %s320, [#allocation12], 512, 512, 32
        $region32: #{tpu_custom_call.1} parent=11 // pred_fallthru
          _
        // Predicated region
        $region33: #{tpu_custom_call.1} parent=11 // pred_check
          %p326 = pneg %p178
        $region34: #{tpu_custom_call.1} parent=11 // pred_check_branch
          %328 = sbr.rel (%p326) target = $region36
        $region35: #{tpu_custom_call.1} parent=11 // pred_region
          _
        $region36: #{tpu_custom_call.1} parent=11 // pred_fallthru
          _
      $region12: #{tpu_custom_call.1} parent=5 // pred_fallthru
        _
      %p329 = scmp.lt.s32.totalorder %s26, 2
      // Predicated region
      $region37: #{tpu_custom_call.1} parent=5 // pred_check
        %p330 = pneg %p329
      $region38: #{tpu_custom_call.1} parent=5 // pred_check_branch
        %332 = sbr.rel (%p330) target = $region40
      $region39: #{tpu_custom_call.1} parent=5 // pred_region
        // Predicated region
        $region41: #{tpu_custom_call.1} parent=39 // pred_check
          %p333 = pneg %p46
        $region42: #{tpu_custom_call.1} parent=39 // pred_check_branch
          %335 = sbr.rel (%p333) target = $region44
        $region43: #{tpu_custom_call.1} parent=39 // pred_region
          %s336 = sand.u32 %s36, 1
          %s337 = scalar_lea.sflag [#allocation3], %s336
          %s338 = sand.u32 %s36, 1
          %s339 = smul.addr %s338, 128
          %s340 = scalar_lea.vmem [#allocation2], %s339
          %s341 = smul.u32 4, %s26
          %s343 = ssub.s32 2048, 2048
          %344 = vsyncadd %s337, %s343
          %s345 = smul.addr %s341, 4
          %s346 = smul.addr %s345, 128
          %s347 = scalar_lea.hbm %s0, %s346
          %s348 = sshll.u32 %s340, 4
          %s349 = int_to_ptr.vmem [resolvable:$true] %s348
          %354 = dma.hbm_to_vmem [thread:$0]  %s347, 2048, %s349, %s337, 512, 512, 32
        $region44: #{tpu_custom_call.1} parent=39 // pred_fallthru
          _
      $region40: #{tpu_custom_call.1} parent=5 // pred_fallthru
        _
      %p355 = scmp.le.s32.totalorder 1, %s26
      %p356 = scmp.lt.s32.totalorder %s26, 3
      %p357 = pnand %p355, %p356
      %p358 = pneg %p357
      // Predicated region
      $region45: #{tpu_custom_call.1} parent=5 // pred_check
        _
      $region46: #{tpu_custom_call.1} parent=5 // pred_check_branch
        %360 = sbr.rel (%p357) target = $region48
      $region47: #{tpu_custom_call.1} parent=5 // pred_region
        %s361 = ssub.s32 %s26, 1
        %s362 = sand.u32 %s39, 1
        %s363 = scalar_lea.sflag [#allocation3], %s362
        %s364 = sand.u32 %s39, 1
        %s365 = smul.addr %s364, 128
        %s366 = scalar_lea.vmem [#allocation2], %s365
        // Predicated region
        $region49: #{tpu_custom_call.1} parent=47 // pred_check
          %p367 = pneg %p52
        $region50: #{tpu_custom_call.1} parent=47 // pred_check_branch
          %369 = sbr.rel (%p367) target = $region52
        $region51: #{tpu_custom_call.1} parent=47 // pred_region
          %370 = dma.done %s363, 2048
        $region52: #{tpu_custom_call.1} parent=47 // pred_fallthru
          _
        // Predicated region
        $region53: #{tpu_custom_call.1} parent=47 // pred_check
          %p371 = pneg %p73
        $region54: #{tpu_custom_call.1} parent=47 // pred_check_branch
          %373 = sbr.rel (%p371) target = $region56
        $region55: #{tpu_custom_call.1} parent=47 // pred_region
          %374 = dma.done [#allocation6], 256
        $region56: #{tpu_custom_call.1} parent=47 // pred_fallthru
          _
        // Predicated region
        $region57: #{tpu_custom_call.1} parent=47 // pred_check
          %p375 = pneg %p94
        $region58: #{tpu_custom_call.1} parent=47 // pred_check_branch
          %377 = sbr.rel (%p375) target = $region60
        $region59: #{tpu_custom_call.1} parent=47 // pred_region
          %378 = dma.done [#allocation6], 256
        $region60: #{tpu_custom_call.1} parent=47 // pred_fallthru
          _
        // Predicated region
        $region61: #{tpu_custom_call.1} parent=47 // pred_check
          %p379 = pneg %p115
        $region62: #{tpu_custom_call.1} parent=47 // pred_check_branch
          %381 = sbr.rel (%p379) target = $region64
        $region63: #{tpu_custom_call.1} parent=47 // pred_region
          %382 = dma.done [#allocation9], 8192
        $region64: #{tpu_custom_call.1} parent=47 // pred_fallthru
          _
        // Predicated region
        $region65: #{tpu_custom_call.1} parent=47 // pred_check
          %p383 = pneg %p136
        $region66: #{tpu_custom_call.1} parent=47 // pred_check_branch
          %385 = sbr.rel (%p383) target = $region68
        $region67: #{tpu_custom_call.1} parent=47 // pred_region
          %386 = dma.done [#allocation9], 8192
        $region68: #{tpu_custom_call.1} parent=47 // pred_fallthru
          _
        // Predicated region
        $region69: #{tpu_custom_call.1} parent=47 // pred_check
          %p387 = pneg %p157
        $region70: #{tpu_custom_call.1} parent=47 // pred_check_branch
          %389 = sbr.rel (%p387) target = $region72
        $region71: #{tpu_custom_call.1} parent=47 // pred_region
          %390 = dma.done [#allocation12], 8192
        $region72: #{tpu_custom_call.1} parent=47 // pred_fallthru
          _
        %s391 = sand.u32 %s39, 1
        %s392 = scalar_lea.sflag [#allocation3], %s391
        %s393 = sand.u32 %s39, 1
        %s394 = smul.addr %s393, 128
        %s395 = scalar_lea.vmem [#allocation2], %s394
        %p396 = pneg %p52
        %p397 = pneg %p49
        %p398 = pneg %p73
        %p399 = pneg %p70
        %p400 = pneg %p94
        %p401 = pneg %p91
        %p402 = pneg %p115
        %p403 = pneg %p112
        %p404 = pneg %p136
        %p405 = pneg %p133
        %p406 = pneg %p157
        %p407 = pneg %p154
        %p408 = pneg %p178
        %p409 = pneg %p175
        %p410 = pneg %p204
        %p411 = pneg %p201
        %s412 = sand.u32 %s191, 1
        %s413 = scalar_lea.sflag [#allocation4], %s412
        %s414 = sand.u32 %s191, 1
        %s415 = smul.addr %s414, 32
        %s416 = scalar_lea.vmem [#allocation13], %s415
        %p417 = pneg %p225
        %p418 = pneg %p222
        %p419 = pneg %p246
        %p420 = pneg %p243
        %s421 = smul.u32 4, %s31
        %s422 = smul.u32 4, %s31
        %p423 = scmp.eq.s32.totalorder %s31, 0
        // Predicated region
        $region73: #{tpu_custom_call.1} parent=47 // pred_check
          %p424 = pneg %p423
        $region74: #{tpu_custom_call.1} parent=47 // pred_check_branch
          %426 = sbr.rel (%p424) target = $region76
        $region75: #{tpu_custom_call.1} parent=47 // pred_region
          %v427 = vld [vmem:[#allocation5] sm:$0xff]
          %v428 = vld [vmem:[#allocation5 + $0x8] sm:$0xff]
          %429 = vst [vmem:[#allocation14] sm:$0xff] %v427
          %430 = vst [vmem:[#allocation14 + $0x8] sm:$0xff] %v428
          %v431 = vld [vmem:[#allocation7] sm:$0xff]
          %v432 = vld [vmem:[#allocation7 + $0x8] sm:$0xff]
          %433 = vst [vmem:[#allocation16] sm:$0xff] %v431
          %434 = vst [vmem:[#allocation16 + $0x8] sm:$0xff] %v432
        $region76: #{tpu_custom_call.1} parent=47 // pred_fallthru
          _
        %v435 = vld [vmem:[#allocation14] sm:$0xff]
        %s436 = scalar_lea.vmem [#allocation14], 8
        %v437 = vld [vmem:[%s436] sm:$0xff]
        %v438 = vld [vmem:[#allocation16] sm:$0xff]
        %s439 = scalar_lea.vmem [#allocation16], 8
        %v440 = vld [vmem:[%s439] sm:$0xff]
        %v441 = vld [vmem:[%s6] sm:$0xf]
        %v443 = vlaneseq
        %v444 = vshrl.u32 %v443, 7
        %v445 = vsub.s32 0, %v444
        %v446 = vrot.slane %v441, %v445
        %v447 = vlaneseq
        %v448 = vshrl.u32 %v447, 7
        %v449 = vsub.s32 1, %v448
        %v450 = vrot.slane %v441, %v449
        %v451 = vlaneseq
        %v452 = vshrl.u32 %v451, 7
        %v453 = vsub.s32 2, %v452
        %v454 = vrot.slane %v441, %v453
        %v455 = vlaneseq
        %v456 = vshrl.u32 %v455, 7
        %v457 = vsub.s32 3, %v456
        %v458 = vrot.slane %v441, %v457
        %v463 = vld [vmem:[%s366] sm:$0xff]
        %v464 = vld [vmem:[%s366 + $0x8] sm:$0xff]
        %v465 = vld [vmem:[%s366 + $0x10] sm:$0xff]
        %v466 = vld [vmem:[%s366 + $0x18] sm:$0xff]
        %v467 = vld [vmem:[#allocation8] sm:$0xff]
        %v468 = vld [vmem:[#allocation8 + $0x8] sm:$0xff]
        %v469 = vld [vmem:[#allocation8 + $0x10] sm:$0xff]
        %v470 = vld [vmem:[#allocation8 + $0x18] sm:$0xff]
        %v471 = vld [vmem:[#allocation8 + $0x20] sm:$0xff]
        %v472 = vld [vmem:[#allocation8 + $0x28] sm:$0xff]
        %v473 = vld [vmem:[#allocation8 + $0x30] sm:$0xff]
        %v474 = vld [vmem:[#allocation8 + $0x38] sm:$0xff]
        %v475 = vld [vmem:[#allocation8 + $0x40] sm:$0xff]
        %v476 = vld [vmem:[#allocation8 + $0x48] sm:$0xff]
        %v477 = vld [vmem:[#allocation8 + $0x50] sm:$0xff]
        %v478 = vld [vmem:[#allocation8 + $0x58] sm:$0xff]
        %v479 = vld [vmem:[#allocation8 + $0x60] sm:$0xff]
        %v480 = vld [vmem:[#allocation8 + $0x68] sm:$0xff]
        %v481 = vld [vmem:[#allocation8 + $0x70] sm:$0xff]
        %v482 = vld [vmem:[#allocation8 + $0x78] sm:$0xff]
        %v483 = vld [vmem:[#allocation8 + $0x80] sm:$0xff]
        %v484 = vld [vmem:[#allocation8 + $0x88] sm:$0xff]
        %v485 = vld [vmem:[#allocation8 + $0x90] sm:$0xff]
        %v486 = vld [vmem:[#allocation8 + $0x98] sm:$0xff]
        %v487 = vld [vmem:[#allocation8 + $0xa0] sm:$0xff]
        %v488 = vld [vmem:[#allocation8 + $0xa8] sm:$0xff]
        %v489 = vld [vmem:[#allocation8 + $0xb0] sm:$0xff]
        %v490 = vld [vmem:[#allocation8 + $0xb8] sm:$0xff]
        %v491 = vld [vmem:[#allocation8 + $0xc0] sm:$0xff]
        %v492 = vld [vmem:[#allocation8 + $0xc8] sm:$0xff]
        %v493 = vld [vmem:[#allocation8 + $0xd0] sm:$0xff]
        %v494 = vld [vmem:[#allocation8 + $0xd8] sm:$0xff]
        %v495 = vld [vmem:[#allocation8 + $0xe0] sm:$0xff]
        %v496 = vld [vmem:[#allocation8 + $0xe8] sm:$0xff]
        %v497 = vld [vmem:[#allocation8 + $0xf0] sm:$0xff]
        %v498 = vld [vmem:[#allocation8 + $0xf8] sm:$0xff]
        %v499 = vld [vmem:[#allocation8 + $0x100] sm:$0xff]
        %v500 = vld [vmem:[#allocation8 + $0x108] sm:$0xff]
        %v501 = vld [vmem:[#allocation8 + $0x110] sm:$0xff]
        %v502 = vld [vmem:[#allocation8 + $0x118] sm:$0xff]
        %v503 = vld [vmem:[#allocation8 + $0x120] sm:$0xff]
        %v504 = vld [vmem:[#allocation8 + $0x128] sm:$0xff]
        %v505 = vld [vmem:[#allocation8 + $0x130] sm:$0xff]
        %v506 = vld [vmem:[#allocation8 + $0x138] sm:$0xff]
        %v507 = vld [vmem:[#allocation8 + $0x140] sm:$0xff]
        %v508 = vld [vmem:[#allocation8 + $0x148] sm:$0xff]
        %v509 = vld [vmem:[#allocation8 + $0x150] sm:$0xff]
        %v510 = vld [vmem:[#allocation8 + $0x158] sm:$0xff]
        %v511 = vld [vmem:[#allocation8 + $0x160] sm:$0xff]
        %v512 = vld [vmem:[#allocation8 + $0x168] sm:$0xff]
        %v513 = vld [vmem:[#allocation8 + $0x170] sm:$0xff]
        %v514 = vld [vmem:[#allocation8 + $0x178] sm:$0xff]
        %v515 = vld [vmem:[#allocation8 + $0x180] sm:$0xff]
        %v516 = vld [vmem:[#allocation8 + $0x188] sm:$0xff]
        %v517 = vld [vmem:[#allocation8 + $0x190] sm:$0xff]
        %v518 = vld [vmem:[#allocation8 + $0x198] sm:$0xff]
        %v519 = vld [vmem:[#allocation8 + $0x1a0] sm:$0xff]
        %v520 = vld [vmem:[#allocation8 + $0x1a8] sm:$0xff]
        %v521 = vld [vmem:[#allocation8 + $0x1b0] sm:$0xff]
        %v522 = vld [vmem:[#allocation8 + $0x1b8] sm:$0xff]
        %v523 = vld [vmem:[#allocation8 + $0x1c0] sm:$0xff]
        %v524 = vld [vmem:[#allocation8 + $0x1c8] sm:$0xff]
        %v525 = vld [vmem:[#allocation8 + $0x1d0] sm:$0xff]
        %v526 = vld [vmem:[#allocation8 + $0x1d8] sm:$0xff]
        %v527 = vld [vmem:[#allocation8 + $0x1e0] sm:$0xff]
        %v528 = vld [vmem:[#allocation8 + $0x1e8] sm:$0xff]
        %v529 = vld [vmem:[#allocation8 + $0x1f0] sm:$0xff]
        %v530 = vld [vmem:[#allocation8 + $0x1f8] sm:$0xff]
        %531 = vmatprep.subr.mxu0 %v528
        %532 = vmatpush1.msra.mxu0 %v527
        %533 = vmatprep.subr.mxu0 %v524
        %534 = vmatpush1.msra.mxu0 %v523
        %535 = vmatprep.subr.mxu0 %v520
        %536 = vmatpush1.msra.mxu0 %v519
        %537 = vmatprep.subr.mxu0 %v516
        %538 = vmatpush1.msra.mxu0 %v515
        %539 = vmatprep.subr.mxu0 %v512
        %540 = vmatpush1.msra.mxu0 %v511
        %541 = vmatprep.subr.mxu0 %v508
        %542 = vmatpush1.msra.mxu0 %v507
        %543 = vmatprep.subr.mxu0 %v504
        %544 = vmatpush1.msra.mxu0 %v503
        %545 = vmatprep.subr.mxu0 %v500
        %546 = vmatpush1.msra.mxu0 %v499
        %547 = vmatprep.subr.mxu0 %v496
        %548 = vmatpush1.msra.mxu0 %v495
        %549 = vmatprep.subr.mxu0 %v492
        %550 = vmatpush1.msra.mxu0 %v491
        %551 = vmatprep.subr.mxu0 %v488
        %552 = vmatpush1.msra.mxu0 %v487
        %553 = vmatprep.subr.mxu0 %v484
        %554 = vmatpush1.msra.mxu0 %v483
        %555 = vmatprep.subr.mxu0 %v480
        %556 = vmatpush1.msra.mxu0 %v479
        %557 = vmatprep.subr.mxu0 %v476
        %558 = vmatpush1.msra.mxu0 %v475
        %559 = vmatprep.subr.mxu0 %v472
        %560 = vmatpush1.msra.mxu0 %v471
        %561 = vmatprep.subr.mxu0 %v468
        %562 = vmatpush1.msra.mxu0 %v467
        %563 = vmatprep.subr.mxu0 0.0
        %564 = vmatpush2.msra.mxu0 0.0
        %565 = vmatprep.subr.mxu0 0.0
        %566 = vmatpush2.msra.mxu0 0.0
        %567 = vmatprep.subr.mxu0 0.0
        %568 = vmatpush2.msra.mxu0 0.0
        %569 = vmatprep.subr.mxu0 0.0
        %570 = vmatpush2.msra.mxu0 0.0
        %571 = vmatprep.subr.mxu0 0.0
        %572 = vmatpush2.msra.mxu0 0.0
        %573 = vmatprep.subr.mxu0 0.0
        %574 = vmatpush2.msra.mxu0 0.0
        %575 = vmatprep.subr.mxu0 0.0
        %576 = vmatpush2.msra.mxu0 0.0
        %577 = vmatprep.subr.mxu0 0.0
        %578 = vmatpush2.msra.mxu0 0.0
        %579 = vmatprep.subr.mxu0 0.0
        %580 = vmatpush2.msra.mxu0 0.0
        %581 = vmatprep.subr.mxu0 0.0
        %582 = vmatpush2.msra.mxu0 0.0
        %583 = vmatprep.subr.mxu0 0.0
        %584 = vmatpush2.msra.mxu0 0.0
        %585 = vmatprep.subr.mxu0 0.0
        %586 = vmatpush2.msra.mxu0 0.0
        %587 = vmatprep.subr.mxu0 0.0
        %588 = vmatpush2.msra.mxu0 0.0
        %589 = vmatprep.subr.mxu0 0.0
        %590 = vmatpush2.msra.mxu0 0.0
        %591 = vmatprep.subr.mxu0 0.0
        %592 = vmatpush2.msra.mxu0 0.0
        %593 = vmatprep.subr.mxu0 0.0
        %594 = vmatpush2.msra.mxu0 0.0
        %595 = vmatprep.mubr.f32.mxu0 0.0
        %596 = vmatmul.mubr.f32.gmra.mxu0 %v435
        %v597 = vpop.f32.mrf.mxu0
        %v598 = vadd.f32 0.0, %v597
        %v599 = vpop.f32.mrf.mxu0
        %v600 = vadd.f32 0.0, %v599
        %601 = vdwg.mxu0
        %602 = vmatprep.subr.mxu0 %v530
        %603 = vmatpush1.msra.mxu0 %v529
        %604 = vmatprep.subr.mxu0 %v526
        %605 = vmatpush1.msra.mxu0 %v525
        %606 = vmatprep.subr.mxu0 %v522
        %607 = vmatpush1.msra.mxu0 %v521
        %608 = vmatprep.subr.mxu0 %v518
        %609 = vmatpush1.msra.mxu0 %v517
        %610 = vmatprep.subr.mxu0 %v514
        %611 = vmatpush1.msra.mxu0 %v513
        %612 = vmatprep.subr.mxu0 %v510
        %613 = vmatpush1.msra.mxu0 %v509
        %614 = vmatprep.subr.mxu0 %v506
        %615 = vmatpush1.msra.mxu0 %v505
        %616 = vmatprep.subr.mxu0 %v502
        %617 = vmatpush1.msra.mxu0 %v501
        %618 = vmatprep.subr.mxu0 %v498
        %619 = vmatpush1.msra.mxu0 %v497
        %620 = vmatprep.subr.mxu0 %v494
        %621 = vmatpush1.msra.mxu0 %v493
        %622 = vmatprep.subr.mxu0 %v490
        %623 = vmatpush1.msra.mxu0 %v489
        %624 = vmatprep.subr.mxu0 %v486
        %625 = vmatpush1.msra.mxu0 %v485
        %626 = vmatprep.subr.mxu0 %v482
        %627 = vmatpush1.msra.mxu0 %v481
        %628 = vmatprep.subr.mxu0 %v478
        %629 = vmatpush1.msra.mxu0 %v477
        %630 = vmatprep.subr.mxu0 %v474
        %631 = vmatpush1.msra.mxu0 %v473
        %632 = vmatprep.subr.mxu0 %v470
        %633 = vmatpush1.msra.mxu0 %v469
        %634 = vmatprep.subr.mxu0 0.0
        %635 = vmatpush2.msra.mxu0 0.0
        %636 = vmatprep.subr.mxu0 0.0
        %637 = vmatpush2.msra.mxu0 0.0
        %638 = vmatprep.subr.mxu0 0.0
        %639 = vmatpush2.msra.mxu0 0.0
        %640 = vmatprep.subr.mxu0 0.0
        %641 = vmatpush2.msra.mxu0 0.0
        %642 = vmatprep.subr.mxu0 0.0
        %643 = vmatpush2.msra.mxu0 0.0
        %644 = vmatprep.subr.mxu0 0.0
        %645 = vmatpush2.msra.mxu0 0.0
        %646 = vmatprep.subr.mxu0 0.0
        %647 = vmatpush2.msra.mxu0 0.0
        %648 = vmatprep.subr.mxu0 0.0
        %649 = vmatpush2.msra.mxu0 0.0
        %650 = vmatprep.subr.mxu0 0.0
        %651 = vmatpush2.msra.mxu0 0.0
        %652 = vmatprep.subr.mxu0 0.0
        %653 = vmatpush2.msra.mxu0 0.0
        %654 = vmatprep.subr.mxu0 0.0
        %655 = vmatpush2.msra.mxu0 0.0
        %656 = vmatprep.subr.mxu0 0.0
        %657 = vmatpush2.msra.mxu0 0.0
        %658 = vmatprep.subr.mxu0 0.0
        %659 = vmatpush2.msra.mxu0 0.0
        %660 = vmatprep.subr.mxu0 0.0
        %661 = vmatpush2.msra.mxu0 0.0
        %662 = vmatprep.subr.mxu0 0.0
        %663 = vmatpush2.msra.mxu0 0.0
        %664 = vmatprep.subr.mxu0 0.0
        %665 = vmatpush2.msra.mxu0 0.0
        %666 = vmatprep.mubr.f32.mxu0 0.0
        %667 = vmatmul.mubr.f32.gmra.mxu0 %v435
        %v668 = vpop.f32.mrf.mxu0
        %v669 = vadd.f32 0.0, %v668
        %v670 = vpop.f32.mrf.mxu0
        %v671 = vadd.f32 0.0, %v670
        %672 = vdwg.mxu0
        %v673 = vadd.f32 %v463, %v598
        %v674 = vadd.f32 %v464, %v600
        %v675 = vadd.f32 %v465, %v669
        %v676 = vadd.f32 %v466, %v671
        %v677 = vxor.u32 %v673, 2147483648
        %v678 = vmul.f32 %v677, 1.442695
        %v679 = vpow.pop %v678
        %v680 = vadd.f32 %v679, 1.0
        %v681 = vrcp.pop %v680
        %v682 = vmul.f32 1.0, %v681
        %v683 = vxor.u32 %v674, 2147483648
        %v684 = vmul.f32 %v683, 1.442695
        %v685 = vpow.pop %v684
        %v686 = vadd.f32 %v685, 1.0
        %v687 = vrcp.pop %v686
        %v688 = vmul.f32 1.0, %v687
        %v689 = vtanh.pop %v675
        %v690 = vxor.u32 %v676, 2147483648
        %v691 = vmul.f32 %v690, 1.442695
        %v692 = vpow.pop %v691
        %v693 = vadd.f32 %v692, 1.0
        %v694 = vrcp.pop %v693
        %v695 = vmul.f32 1.0, %v694
        %v696 = vmul.f32 %v688, %v438
        %v697 = vmul.f32 %v682, %v689
        %v698 = vadd.f32 %v696, %v697
        %v699 = vtanh.pop %v698
        %v700 = vmul.f32 %v695, %v699
        %v701 = vld [vmem:[#allocation10] sm:$0xff]
        %v702 = vld [vmem:[#allocation10 + $0x8] sm:$0xff]
        %v703 = vld [vmem:[#allocation10 + $0x10] sm:$0xff]
        %v704 = vld [vmem:[#allocation10 + $0x18] sm:$0xff]
        %v705 = vld [vmem:[#allocation10 + $0x20] sm:$0xff]
        %v706 = vld [vmem:[#allocation10 + $0x28] sm:$0xff]
        %v707 = vld [vmem:[#allocation10 + $0x30] sm:$0xff]
        %v708 = vld [vmem:[#allocation10 + $0x38] sm:$0xff]
        %v709 = vld [vmem:[#allocation10 + $0x40] sm:$0xff]
        %v710 = vld [vmem:[#allocation10 + $0x48] sm:$0xff]
        %v711 = vld [vmem:[#allocation10 + $0x50] sm:$0xff]
        %v712 = vld [vmem:[#allocation10 + $0x58] sm:$0xff]
        %v713 = vld [vmem:[#allocation10 + $0x60] sm:$0xff]
        %v714 = vld [vmem:[#allocation10 + $0x68] sm:$0xff]
        %v715 = vld [vmem:[#allocation10 + $0x70] sm:$0xff]
        %v716 = vld [vmem:[#allocation10 + $0x78] sm:$0xff]
        %v717 = vld [vmem:[#allocation10 + $0x80] sm:$0xff]
        %v718 = vld [vmem:[#allocation10 + $0x88] sm:$0xff]
        %v719 = vld [vmem:[#allocation10 + $0x90] sm:$0xff]
        %v720 = vld [vmem:[#allocation10 + $0x98] sm:$0xff]
        %v721 = vld [vmem:[#allocation10 + $0xa0] sm:$0xff]
        %v722 = vld [vmem:[#allocation10 + $0xa8] sm:$0xff]
        %v723 = vld [vmem:[#allocation10 + $0xb0] sm:$0xff]
        %v724 = vld [vmem:[#allocation10 + $0xb8] sm:$0xff]
        %v725 = vld [vmem:[#allocation10 + $0xc0] sm:$0xff]
        %v726 = vld [vmem:[#allocation10 + $0xc8] sm:$0xff]
        %v727 = vld [vmem:[#allocation10 + $0xd0] sm:$0xff]
        %v728 = vld [vmem:[#allocation10 + $0xd8] sm:$0xff]
        %v729 = vld [vmem:[#allocation10 + $0xe0] sm:$0xff]
        %v730 = vld [vmem:[#allocation10 + $0xe8] sm:$0xff]
        %v731 = vld [vmem:[#allocation10 + $0xf0] sm:$0xff]
        %v732 = vld [vmem:[#allocation10 + $0xf8] sm:$0xff]
        %v733 = vld [vmem:[#allocation10 + $0x100] sm:$0xff]
        %v734 = vld [vmem:[#allocation10 + $0x108] sm:$0xff]
        %v735 = vld [vmem:[#allocation10 + $0x110] sm:$0xff]
        %v736 = vld [vmem:[#allocation10 + $0x118] sm:$0xff]
        %v737 = vld [vmem:[#allocation10 + $0x120] sm:$0xff]
        %v738 = vld [vmem:[#allocation10 + $0x128] sm:$0xff]
        %v739 = vld [vmem:[#allocation10 + $0x130] sm:$0xff]
        %v740 = vld [vmem:[#allocation10 + $0x138] sm:$0xff]
        %v741 = vld [vmem:[#allocation10 + $0x140] sm:$0xff]
        %v742 = vld [vmem:[#allocation10 + $0x148] sm:$0xff]
        %v743 = vld [vmem:[#allocation10 + $0x150] sm:$0xff]
        %v744 = vld [vmem:[#allocation10 + $0x158] sm:$0xff]
        %v745 = vld [vmem:[#allocation10 + $0x160] sm:$0xff]
        %v746 = vld [vmem:[#allocation10 + $0x168] sm:$0xff]
        %v747 = vld [vmem:[#allocation10 + $0x170] sm:$0xff]
        %v748 = vld [vmem:[#allocation10 + $0x178] sm:$0xff]
        %v749 = vld [vmem:[#allocation10 + $0x180] sm:$0xff]
        %v750 = vld [vmem:[#allocation10 + $0x188] sm:$0xff]
        %v751 = vld [vmem:[#allocation10 + $0x190] sm:$0xff]
        %v752 = vld [vmem:[#allocation10 + $0x198] sm:$0xff]
        %v753 = vld [vmem:[#allocation10 + $0x1a0] sm:$0xff]
        %v754 = vld [vmem:[#allocation10 + $0x1a8] sm:$0xff]
        %v755 = vld [vmem:[#allocation10 + $0x1b0] sm:$0xff]
        %v756 = vld [vmem:[#allocation10 + $0x1b8] sm:$0xff]
        %v757 = vld [vmem:[#allocation10 + $0x1c0] sm:$0xff]
        %v758 = vld [vmem:[#allocation10 + $0x1c8] sm:$0xff]
        %v759 = vld [vmem:[#allocation10 + $0x1d0] sm:$0xff]
        %v760 = vld [vmem:[#allocation10 + $0x1d8] sm:$0xff]
        %v761 = vld [vmem:[#allocation10 + $0x1e0] sm:$0xff]
        %v762 = vld [vmem:[#allocation10 + $0x1e8] sm:$0xff]
        %v763 = vld [vmem:[#allocation10 + $0x1f0] sm:$0xff]
        %v764 = vld [vmem:[#allocation10 + $0x1f8] sm:$0xff]
        %v765 = vld [vmem:[#allocation11] sm:$0xff]
        %v766 = vld [vmem:[#allocation11 + $0x8] sm:$0xff]
        %v767 = vld [vmem:[#allocation11 + $0x10] sm:$0xff]
        %v768 = vld [vmem:[#allocation11 + $0x18] sm:$0xff]
        %v769 = vld [vmem:[#allocation11 + $0x20] sm:$0xff]
        %v770 = vld [vmem:[#allocation11 + $0x28] sm:$0xff]
        %v771 = vld [vmem:[#allocation11 + $0x30] sm:$0xff]
        %v772 = vld [vmem:[#allocation11 + $0x38] sm:$0xff]
        %v773 = vld [vmem:[#allocation11 + $0x40] sm:$0xff]
        %v774 = vld [vmem:[#allocation11 + $0x48] sm:$0xff]
        %v775 = vld [vmem:[#allocation11 + $0x50] sm:$0xff]
        %v776 = vld [vmem:[#allocation11 + $0x58] sm:$0xff]
        %v777 = vld [vmem:[#allocation11 + $0x60] sm:$0xff]
        %v778 = vld [vmem:[#allocation11 + $0x68] sm:$0xff]
        %v779 = vld [vmem:[#allocation11 + $0x70] sm:$0xff]
        %v780 = vld [vmem:[#allocation11 + $0x78] sm:$0xff]
        %v781 = vld [vmem:[#allocation11 + $0x80] sm:$0xff]
        %v782 = vld [vmem:[#allocation11 + $0x88] sm:$0xff]
        %v783 = vld [vmem:[#allocation11 + $0x90] sm:$0xff]
        %v784 = vld [vmem:[#allocation11 + $0x98] sm:$0xff]
        %v785 = vld [vmem:[#allocation11 + $0xa0] sm:$0xff]
        %v786 = vld [vmem:[#allocation11 + $0xa8] sm:$0xff]
        %v787 = vld [vmem:[#allocation11 + $0xb0] sm:$0xff]
        %v788 = vld [vmem:[#allocation11 + $0xb8] sm:$0xff]
        %v789 = vld [vmem:[#allocation11 + $0xc0] sm:$0xff]
        %v790 = vld [vmem:[#allocation11 + $0xc8] sm:$0xff]
        %v791 = vld [vmem:[#allocation11 + $0xd0] sm:$0xff]
        %v792 = vld [vmem:[#allocation11 + $0xd8] sm:$0xff]
        %v793 = vld [vmem:[#allocation11 + $0xe0] sm:$0xff]
        %v794 = vld [vmem:[#allocation11 + $0xe8] sm:$0xff]
        %v795 = vld [vmem:[#allocation11 + $0xf0] sm:$0xff]
        %v796 = vld [vmem:[#allocation11 + $0xf8] sm:$0xff]
        %v797 = vld [vmem:[#allocation11 + $0x100] sm:$0xff]
        %v798 = vld [vmem:[#allocation11 + $0x108] sm:$0xff]
        %v799 = vld [vmem:[#allocation11 + $0x110] sm:$0xff]
        %v800 = vld [vmem:[#allocation11 + $0x118] sm:$0xff]
        %v801 = vld [vmem:[#allocation11 + $0x120] sm:$0xff]
        %v802 = vld [vmem:[#allocation11 + $0x128] sm:$0xff]
        %v803 = vld [vmem:[#allocation11 + $0x130] sm:$0xff]
        %v804 = vld [vmem:[#allocation11 + $0x138] sm:$0xff]
        %v805 = vld [vmem:[#allocation11 + $0x140] sm:$0xff]
        %v806 = vld [vmem:[#allocation11 + $0x148] sm:$0xff]
        %v807 = vld [vmem:[#allocation11 + $0x150] sm:$0xff]
        %v808 = vld [vmem:[#allocation11 + $0x158] sm:$0xff]
        %v809 = vld [vmem:[#allocation11 + $0x160] sm:$0xff]
        %v810 = vld [vmem:[#allocation11 + $0x168] sm:$0xff]
        %v811 = vld [vmem:[#allocation11 + $0x170] sm:$0xff]
        %v812 = vld [vmem:[#allocation11 + $0x178] sm:$0xff]
        %v813 = vld [vmem:[#allocation11 + $0x180] sm:$0xff]
        %v814 = vld [vmem:[#allocation11 + $0x188] sm:$0xff]
        %v815 = vld [vmem:[#allocation11 + $0x190] sm:$0xff]
        %v816 = vld [vmem:[#allocation11 + $0x198] sm:$0xff]
        %v817 = vld [vmem:[#allocation11 + $0x1a0] sm:$0xff]
        %v818 = vld [vmem:[#allocation11 + $0x1a8] sm:$0xff]
        %v819 = vld [vmem:[#allocation11 + $0x1b0] sm:$0xff]
        %v820 = vld [vmem:[#allocation11 + $0x1b8] sm:$0xff]
        %v821 = vld [vmem:[#allocation11 + $0x1c0] sm:$0xff]
        %v822 = vld [vmem:[#allocation11 + $0x1c8] sm:$0xff]
        %v823 = vld [vmem:[#allocation11 + $0x1d0] sm:$0xff]
        %v824 = vld [vmem:[#allocation11 + $0x1d8] sm:$0xff]
        %v825 = vld [vmem:[#allocation11 + $0x1e0] sm:$0xff]
        %v826 = vld [vmem:[#allocation11 + $0x1e8] sm:$0xff]
        %v827 = vld [vmem:[#allocation11 + $0x1f0] sm:$0xff]
        %v828 = vld [vmem:[#allocation11 + $0x1f8] sm:$0xff]
        %829 = vmatprep.subr.mxu0 %v826
        %830 = vmatpush1.msra.mxu0 %v825
        %831 = vmatprep.subr.mxu0 %v822
        %832 = vmatpush1.msra.mxu0 %v821
        %833 = vmatprep.subr.mxu0 %v818
        %834 = vmatpush1.msra.mxu0 %v817
        %835 = vmatprep.subr.mxu0 %v814
        %836 = vmatpush1.msra.mxu0 %v813
        %837 = vmatprep.subr.mxu0 %v810
        %838 = vmatpush1.msra.mxu0 %v809
        %839 = vmatprep.subr.mxu0 %v806
        %840 = vmatpush1.msra.mxu0 %v805
        %841 = vmatprep.subr.mxu0 %v802
        %842 = vmatpush1.msra.mxu0 %v801
        %843 = vmatprep.subr.mxu0 %v798
        %844 = vmatpush1.msra.mxu0 %v797
        %845 = vmatprep.subr.mxu0 %v794
        %846 = vmatpush1.msra.mxu0 %v793
        %847 = vmatprep.subr.mxu0 %v790
        %848 = vmatpush1.msra.mxu0 %v789
        %849 = vmatprep.subr.mxu0 %v786
        %850 = vmatpush1.msra.mxu0 %v785
        %851 = vmatprep.subr.mxu0 %v782
        %852 = vmatpush1.msra.mxu0 %v781
        %853 = vmatprep.subr.mxu0 %v778
        %854 = vmatpush1.msra.mxu0 %v777
        %855 = vmatprep.subr.mxu0 %v774
        %856 = vmatpush1.msra.mxu0 %v773
        %857 = vmatprep.subr.mxu0 %v770
        %858 = vmatpush1.msra.mxu0 %v769
        %859 = vmatprep.subr.mxu0 %v766
        %860 = vmatpush1.msra.mxu0 %v765
        %861 = vmatprep.subr.mxu0 0.0
        %862 = vmatpush2.msra.mxu0 0.0
        %863 = vmatprep.subr.mxu0 0.0
        %864 = vmatpush2.msra.mxu0 0.0
        %865 = vmatprep.subr.mxu0 0.0
        %866 = vmatpush2.msra.mxu0 0.0
        %867 = vmatprep.subr.mxu0 0.0
        %868 = vmatpush2.msra.mxu0 0.0
        %869 = vmatprep.subr.mxu0 0.0
        %870 = vmatpush2.msra.mxu0 0.0
        %871 = vmatprep.subr.mxu0 0.0
        %872 = vmatpush2.msra.mxu0 0.0
        %873 = vmatprep.subr.mxu0 0.0
        %874 = vmatpush2.msra.mxu0 0.0
        %875 = vmatprep.subr.mxu0 0.0
        %876 = vmatpush2.msra.mxu0 0.0
        %877 = vmatprep.subr.mxu0 0.0
        %878 = vmatpush2.msra.mxu0 0.0
        %879 = vmatprep.subr.mxu0 0.0
        %880 = vmatpush2.msra.mxu0 0.0
        %881 = vmatprep.subr.mxu0 0.0
        %882 = vmatpush2.msra.mxu0 0.0
        %883 = vmatprep.subr.mxu0 0.0
        %884 = vmatpush2.msra.mxu0 0.0
        %885 = vmatprep.subr.mxu0 0.0
        %886 = vmatpush2.msra.mxu0 0.0
        %887 = vmatprep.subr.mxu0 0.0
        %888 = vmatpush2.msra.mxu0 0.0
        %889 = vmatprep.subr.mxu0 0.0
        %890 = vmatpush2.msra.mxu0 0.0
        %891 = vmatprep.subr.mxu0 0.0
        %892 = vmatpush2.msra.mxu0 0.0
        %893 = vmatprep.mubr.f32.mxu0 0.0
        %894 = vmatmul.mubr.f32.gmra.mxu0 %v437
        %v895 = vpop.f32.mrf.mxu0
        %v896 = vadd.f32 0.0, %v895
        %v897 = vpop.f32.mrf.mxu0
        %v898 = vadd.f32 0.0, %v897
        %899 = vdwg.mxu0
        %900 = vmatprep.subr.mxu0 %v828
        %901 = vmatpush1.msra.mxu0 %v827
        %902 = vmatprep.subr.mxu0 %v824
        %903 = vmatpush1.msra.mxu0 %v823
        %904 = vmatprep.subr.mxu0 %v820
        %905 = vmatpush1.msra.mxu0 %v819
        %906 = vmatprep.subr.mxu0 %v816
        %907 = vmatpush1.msra.mxu0 %v815
        %908 = vmatprep.subr.mxu0 %v812
        %909 = vmatpush1.msra.mxu0 %v811
        %910 = vmatprep.subr.mxu0 %v808
        %911 = vmatpush1.msra.mxu0 %v807
        %912 = vmatprep.subr.mxu0 %v804
        %913 = vmatpush1.msra.mxu0 %v803
        %914 = vmatprep.subr.mxu0 %v800
        %915 = vmatpush1.msra.mxu0 %v799
        %916 = vmatprep.subr.mxu0 %v796
        %917 = vmatpush1.msra.mxu0 %v795
        %918 = vmatprep.subr.mxu0 %v792
        %919 = vmatpush1.msra.mxu0 %v791
        %920 = vmatprep.subr.mxu0 %v788
        %921 = vmatpush1.msra.mxu0 %v787
        %922 = vmatprep.subr.mxu0 %v784
        %923 = vmatpush1.msra.mxu0 %v783
        %924 = vmatprep.subr.mxu0 %v780
        %925 = vmatpush1.msra.mxu0 %v779
        %926 = vmatprep.subr.mxu0 %v776
        %927 = vmatpush1.msra.mxu0 %v775
        %928 = vmatprep.subr.mxu0 %v772
        %929 = vmatpush1.msra.mxu0 %v771
        %930 = vmatprep.subr.mxu0 %v768
        %931 = vmatpush1.msra.mxu0 %v767
        %932 = vmatprep.subr.mxu0 0.0
        %933 = vmatpush2.msra.mxu0 0.0
        %934 = vmatprep.subr.mxu0 0.0
        %935 = vmatpush2.msra.mxu0 0.0
        %936 = vmatprep.subr.mxu0 0.0
        %937 = vmatpush2.msra.mxu0 0.0
        %938 = vmatprep.subr.mxu0 0.0
        %939 = vmatpush2.msra.mxu0 0.0
        %940 = vmatprep.subr.mxu0 0.0
        %941 = vmatpush2.msra.mxu0 0.0
        %942 = vmatprep.subr.mxu0 0.0
        %943 = vmatpush2.msra.mxu0 0.0
        %944 = vmatprep.subr.mxu0 0.0
        %945 = vmatpush2.msra.mxu0 0.0
        %946 = vmatprep.subr.mxu0 0.0
        %947 = vmatpush2.msra.mxu0 0.0
        %948 = vmatprep.subr.mxu0 0.0
        %949 = vmatpush2.msra.mxu0 0.0
        %950 = vmatprep.subr.mxu0 0.0
        %951 = vmatpush2.msra.mxu0 0.0
        %952 = vmatprep.subr.mxu0 0.0
        %953 = vmatpush2.msra.mxu0 0.0
        %954 = vmatprep.subr.mxu0 0.0
        %955 = vmatpush2.msra.mxu0 0.0
        %956 = vmatprep.subr.mxu0 0.0
        %957 = vmatpush2.msra.mxu0 0.0
        %958 = vmatprep.subr.mxu0 0.0
        %959 = vmatpush2.msra.mxu0 0.0
        %960 = vmatprep.subr.mxu0 0.0
        %961 = vmatpush2.msra.mxu0 0.0
        %962 = vmatprep.subr.mxu0 0.0
        %963 = vmatpush2.msra.mxu0 0.0
        %964 = vmatprep.mubr.f32.mxu0 0.0
        %965 = vmatmul.mubr.f32.gmra.mxu0 %v437
        %v966 = vpop.f32.mrf.mxu0
        %v967 = vadd.f32 0.0, %v966
        %v968 = vpop.f32.mrf.mxu0
        %v969 = vadd.f32 0.0, %v968
        %970 = vdwg.mxu0
        %971 = vmatprep.subr.mxu0 %v762
        %972 = vmatpush1.msra.mxu0 %v761
        %973 = vmatprep.subr.mxu0 %v758
        %974 = vmatpush1.msra.mxu0 %v757
        %975 = vmatprep.subr.mxu0 %v754
        %976 = vmatpush1.msra.mxu0 %v753
        %977 = vmatprep.subr.mxu0 %v750
        %978 = vmatpush1.msra.mxu0 %v749
        %979 = vmatprep.subr.mxu0 %v746
        %980 = vmatpush1.msra.mxu0 %v745
        %981 = vmatprep.subr.mxu0 %v742
        %982 = vmatpush1.msra.mxu0 %v741
        %983 = vmatprep.subr.mxu0 %v738
        %984 = vmatpush1.msra.mxu0 %v737
        %985 = vmatprep.subr.mxu0 %v734
        %986 = vmatpush1.msra.mxu0 %v733
        %987 = vmatprep.subr.mxu0 %v730
        %988 = vmatpush1.msra.mxu0 %v729
        %989 = vmatprep.subr.mxu0 %v726
        %990 = vmatpush1.msra.mxu0 %v725
        %991 = vmatprep.subr.mxu0 %v722
        %992 = vmatpush1.msra.mxu0 %v721
        %993 = vmatprep.subr.mxu0 %v718
        %994 = vmatpush1.msra.mxu0 %v717
        %995 = vmatprep.subr.mxu0 %v714
        %996 = vmatpush1.msra.mxu0 %v713
        %997 = vmatprep.subr.mxu0 %v710
        %998 = vmatpush1.msra.mxu0 %v709
        %999 = vmatprep.subr.mxu0 %v706
        %1000 = vmatpush1.msra.mxu0 %v705
        %1001 = vmatprep.subr.mxu0 %v702
        %1002 = vmatpush1.msra.mxu0 %v701
        %1003 = vmatprep.subr.mxu0 0.0
        %1004 = vmatpush2.msra.mxu0 0.0
        %1005 = vmatprep.subr.mxu0 0.0
        %1006 = vmatpush2.msra.mxu0 0.0
        %1007 = vmatprep.subr.mxu0 0.0
        %1008 = vmatpush2.msra.mxu0 0.0
        %1009 = vmatprep.subr.mxu0 0.0
        %1010 = vmatpush2.msra.mxu0 0.0
        %1011 = vmatprep.subr.mxu0 0.0
        %1012 = vmatpush2.msra.mxu0 0.0
        %1013 = vmatprep.subr.mxu0 0.0
        %1014 = vmatpush2.msra.mxu0 0.0
        %1015 = vmatprep.subr.mxu0 0.0
        %1016 = vmatpush2.msra.mxu0 0.0
        %1017 = vmatprep.subr.mxu0 0.0
        %1018 = vmatpush2.msra.mxu0 0.0
        %1019 = vmatprep.subr.mxu0 0.0
        %1020 = vmatpush2.msra.mxu0 0.0
        %1021 = vmatprep.subr.mxu0 0.0
        %1022 = vmatpush2.msra.mxu0 0.0
        %1023 = vmatprep.subr.mxu0 0.0
        %1024 = vmatpush2.msra.mxu0 0.0
        %1025 = vmatprep.subr.mxu0 0.0
        %1026 = vmatpush2.msra.mxu0 0.0
        %1027 = vmatprep.subr.mxu0 0.0
        %1028 = vmatpush2.msra.mxu0 0.0
        %1029 = vmatprep.subr.mxu0 0.0
        %1030 = vmatpush2.msra.mxu0 0.0
        %1031 = vmatprep.subr.mxu0 0.0
        %1032 = vmatpush2.msra.mxu0 0.0
        %1033 = vmatprep.subr.mxu0 0.0
        %1034 = vmatpush2.msra.mxu0 0.0
        %1035 = vmatprep.mubr.f32.mxu0 0.0
        %1036 = vmatmul.mubr.f32.gmra.mxu0 %v700
        %v1037 = vpop.f32.mrf.mxu0
        %v1038 = vadd.f32 %v896, %v1037
        %v1039 = vpop.f32.mrf.mxu0
        %v1040 = vadd.f32 %v898, %v1039
        %1041 = vdwg.mxu0
        %1042 = vmatprep.subr.mxu0 %v764
        %1043 = vmatpush1.msra.mxu0 %v763
        %1044 = vmatprep.subr.mxu0 %v760
        %1045 = vmatpush1.msra.mxu0 %v759
        %1046 = vmatprep.subr.mxu0 %v756
        %1047 = vmatpush1.msra.mxu0 %v755
        %1048 = vmatprep.subr.mxu0 %v752
        %1049 = vmatpush1.msra.mxu0 %v751
        %1050 = vmatprep.subr.mxu0 %v748
        %1051 = vmatpush1.msra.mxu0 %v747
        %1052 = vmatprep.subr.mxu0 %v744
        %1053 = vmatpush1.msra.mxu0 %v743
        %1054 = vmatprep.subr.mxu0 %v740
        %1055 = vmatpush1.msra.mxu0 %v739
        %1056 = vmatprep.subr.mxu0 %v736
        %1057 = vmatpush1.msra.mxu0 %v735
        %1058 = vmatprep.subr.mxu0 %v732
        %1059 = vmatpush1.msra.mxu0 %v731
        %1060 = vmatprep.subr.mxu0 %v728
        %1061 = vmatpush1.msra.mxu0 %v727
        %1062 = vmatprep.subr.mxu0 %v724
        %1063 = vmatpush1.msra.mxu0 %v723
        %1064 = vmatprep.subr.mxu0 %v720
        %1065 = vmatpush1.msra.mxu0 %v719
        %1066 = vmatprep.subr.mxu0 %v716
        %1067 = vmatpush1.msra.mxu0 %v715
        %1068 = vmatprep.subr.mxu0 %v712
        %1069 = vmatpush1.msra.mxu0 %v711
        %1070 = vmatprep.subr.mxu0 %v708
        %1071 = vmatpush1.msra.mxu0 %v707
        %1072 = vmatprep.subr.mxu0 %v704
        %1073 = vmatpush1.msra.mxu0 %v703
        %1074 = vmatprep.subr.mxu0 0.0
        %1075 = vmatpush2.msra.mxu0 0.0
        %1076 = vmatprep.subr.mxu0 0.0
        %1077 = vmatpush2.msra.mxu0 0.0
        %1078 = vmatprep.subr.mxu0 0.0
        %1079 = vmatpush2.msra.mxu0 0.0
        %1080 = vmatprep.subr.mxu0 0.0
        %1081 = vmatpush2.msra.mxu0 0.0
        %1082 = vmatprep.subr.mxu0 0.0
        %1083 = vmatpush2.msra.mxu0 0.0
        %1084 = vmatprep.subr.mxu0 0.0
        %1085 = vmatpush2.msra.mxu0 0.0
        %1086 = vmatprep.subr.mxu0 0.0
        %1087 = vmatpush2.msra.mxu0 0.0
        %1088 = vmatprep.subr.mxu0 0.0
        %1089 = vmatpush2.msra.mxu0 0.0
        %1090 = vmatprep.subr.mxu0 0.0
        %1091 = vmatpush2.msra.mxu0 0.0
        %1092 = vmatprep.subr.mxu0 0.0
        %1093 = vmatpush2.msra.mxu0 0.0
        %1094 = vmatprep.subr.mxu0 0.0
        %1095 = vmatpush2.msra.mxu0 0.0
        %1096 = vmatprep.subr.mxu0 0.0
        %1097 = vmatpush2.msra.mxu0 0.0
        %1098 = vmatprep.subr.mxu0 0.0
        %1099 = vmatpush2.msra.mxu0 0.0
        %1100 = vmatprep.subr.mxu0 0.0
        %1101 = vmatpush2.msra.mxu0 0.0
        %1102 = vmatprep.subr.mxu0 0.0
        %1103 = vmatpush2.msra.mxu0 0.0
        %1104 = vmatprep.subr.mxu0 0.0
        %1105 = vmatpush2.msra.mxu0 0.0
        %1106 = vmatprep.mubr.f32.mxu0 0.0
        %1107 = vmatmul.mubr.f32.gmra.mxu0 %v700
        %v1108 = vpop.f32.mrf.mxu0
        %v1109 = vadd.f32 %v967, %v1108
        %v1110 = vpop.f32.mrf.mxu0
        %v1111 = vadd.f32 %v969, %v1110
        %1112 = vdwg.mxu0
        %v1113 = vadd.f32 %v1038, %v446
        %v1114 = vadd.f32 %v1040, %v450
        %v1115 = vadd.f32 %v1109, %v454
        %v1116 = vadd.f32 %v1111, %v458
        %v1117 = vxor.u32 %v1113, 2147483648
        %v1118 = vmul.f32 %v1117, 1.442695
        %v1119 = vpow.pop %v1118
        %v1120 = vadd.f32 %v1119, 1.0
        %v1121 = vrcp.pop %v1120
        %v1122 = vmul.f32 1.0, %v1121
        %v1123 = vxor.u32 %v1114, 2147483648
        %v1124 = vmul.f32 %v1123, 1.442695
        %v1125 = vpow.pop %v1124
        %v1126 = vadd.f32 %v1125, 1.0
        %v1127 = vrcp.pop %v1126
        %v1128 = vmul.f32 1.0, %v1127
        %v1129 = vtanh.pop %v1115
        %v1130 = vxor.u32 %v1116, 2147483648
        %v1131 = vmul.f32 %v1130, 1.442695
        %v1132 = vpow.pop %v1131
        %v1133 = vadd.f32 %v1132, 1.0
        %v1134 = vrcp.pop %v1133
        %v1135 = vmul.f32 1.0, %v1134
        %v1136 = vmul.f32 %v1128, %v440
        %v1137 = vmul.f32 %v1122, %v1129
        %v1138 = vadd.f32 %v1136, %v1137
        %v1139 = vtanh.pop %v1138
        %v1140 = vmul.f32 %v1135, %v1139
        %1141 = vst [vmem:[%s416] sm:$0xff] %v1140
        %s1142 = scalar_lea.vmem %s366, 32 [#allocation2]
        %v1143 = vld [vmem:[%s1142] sm:$0xff]
        %v1144 = vld [vmem:[%s1142 + $0x8] sm:$0xff]
        %v1145 = vld [vmem:[%s1142 + $0x10] sm:$0xff]
        %v1146 = vld [vmem:[%s1142 + $0x18] sm:$0xff]
        %v1147 = vld [vmem:[#allocation8] sm:$0xff]
        %v1148 = vld [vmem:[#allocation8 + $0x8] sm:$0xff]
        %v1149 = vld [vmem:[#allocation8 + $0x10] sm:$0xff]
        %v1150 = vld [vmem:[#allocation8 + $0x18] sm:$0xff]
        %v1151 = vld [vmem:[#allocation8 + $0x20] sm:$0xff]
        %v1152 = vld [vmem:[#allocation8 + $0x28] sm:$0xff]
        %v1153 = vld [vmem:[#allocation8 + $0x30] sm:$0xff]
        %v1154 = vld [vmem:[#allocation8 + $0x38] sm:$0xff]
        %v1155 = vld [vmem:[#allocation8 + $0x40] sm:$0xff]
        %v1156 = vld [vmem:[#allocation8 + $0x48] sm:$0xff]
        %v1157 = vld [vmem:[#allocation8 + $0x50] sm:$0xff]
        %v1158 = vld [vmem:[#allocation8 + $0x58] sm:$0xff]
        %v1159 = vld [vmem:[#allocation8 + $0x60] sm:$0xff]
        %v1160 = vld [vmem:[#allocation8 + $0x68] sm:$0xff]
        %v1161 = vld [vmem:[#allocation8 + $0x70] sm:$0xff]
        %v1162 = vld [vmem:[#allocation8 + $0x78] sm:$0xff]
        %v1163 = vld [vmem:[#allocation8 + $0x80] sm:$0xff]
        %v1164 = vld [vmem:[#allocation8 + $0x88] sm:$0xff]
        %v1165 = vld [vmem:[#allocation8 + $0x90] sm:$0xff]
        %v1166 = vld [vmem:[#allocation8 + $0x98] sm:$0xff]
        %v1167 = vld [vmem:[#allocation8 + $0xa0] sm:$0xff]
        %v1168 = vld [vmem:[#allocation8 + $0xa8] sm:$0xff]
        %v1169 = vld [vmem:[#allocation8 + $0xb0] sm:$0xff]
        %v1170 = vld [vmem:[#allocation8 + $0xb8] sm:$0xff]
        %v1171 = vld [vmem:[#allocation8 + $0xc0] sm:$0xff]
        %v1172 = vld [vmem:[#allocation8 + $0xc8] sm:$0xff]
        %v1173 = vld [vmem:[#allocation8 + $0xd0] sm:$0xff]
        %v1174 = vld [vmem:[#allocation8 + $0xd8] sm:$0xff]
        %v1175 = vld [vmem:[#allocation8 + $0xe0] sm:$0xff]
        %v1176 = vld [vmem:[#allocation8 + $0xe8] sm:$0xff]
        %v1177 = vld [vmem:[#allocation8 + $0xf0] sm:$0xff]
        %v1178 = vld [vmem:[#allocation8 + $0xf8] sm:$0xff]
        %v1179 = vld [vmem:[#allocation8 + $0x100] sm:$0xff]
        %v1180 = vld [vmem:[#allocation8 + $0x108] sm:$0xff]
        %v1181 = vld [vmem:[#allocation8 + $0x110] sm:$0xff]
        %v1182 = vld [vmem:[#allocation8 + $0x118] sm:$0xff]
        %v1183 = vld [vmem:[#allocation8 + $0x120] sm:$0xff]
        %v1184 = vld [vmem:[#allocation8 + $0x128] sm:$0xff]
        %v1185 = vld [vmem:[#allocation8 + $0x130] sm:$0xff]
        %v1186 = vld [vmem:[#allocation8 + $0x138] sm:$0xff]
        %v1187 = vld [vmem:[#allocation8 + $0x140] sm:$0xff]
        %v1188 = vld [vmem:[#allocation8 + $0x148] sm:$0xff]
        %v1189 = vld [vmem:[#allocation8 + $0x150] sm:$0xff]
        %v1190 = vld [vmem:[#allocation8 + $0x158] sm:$0xff]
        %v1191 = vld [vmem:[#allocation8 + $0x160] sm:$0xff]
        %v1192 = vld [vmem:[#allocation8 + $0x168] sm:$0xff]
        %v1193 = vld [vmem:[#allocation8 + $0x170] sm:$0xff]
        %v1194 = vld [vmem:[#allocation8 + $0x178] sm:$0xff]
        %v1195 = vld [vmem:[#allocation8 + $0x180] sm:$0xff]
        %v1196 = vld [vmem:[#allocation8 + $0x188] sm:$0xff]
        %v1197 = vld [vmem:[#allocation8 + $0x190] sm:$0xff]
        %v1198 = vld [vmem:[#allocation8 + $0x198] sm:$0xff]
        %v1199 = vld [vmem:[#allocation8 + $0x1a0] sm:$0xff]
        %v1200 = vld [vmem:[#allocation8 + $0x1a8] sm:$0xff]
        %v1201 = vld [vmem:[#allocation8 + $0x1b0] sm:$0xff]
        %v1202 = vld [vmem:[#allocation8 + $0x1b8] sm:$0xff]
        %v1203 = vld [vmem:[#allocation8 + $0x1c0] sm:$0xff]
        %v1204 = vld [vmem:[#allocation8 + $0x1c8] sm:$0xff]
        %v1205 = vld [vmem:[#allocation8 + $0x1d0] sm:$0xff]
        %v1206 = vld [vmem:[#allocation8 + $0x1d8] sm:$0xff]
        %v1207 = vld [vmem:[#allocation8 + $0x1e0] sm:$0xff]
        %v1208 = vld [vmem:[#allocation8 + $0x1e8] sm:$0xff]
        %v1209 = vld [vmem:[#allocation8 + $0x1f0] sm:$0xff]
        %v1210 = vld [vmem:[#allocation8 + $0x1f8] sm:$0xff]
        %1211 = vmatprep.subr.mxu0 %v1208
        %1212 = vmatpush1.msra.mxu0 %v1207
        %1213 = vmatprep.subr.mxu0 %v1204
        %1214 = vmatpush1.msra.mxu0 %v1203
        %1215 = vmatprep.subr.mxu0 %v1200
        %1216 = vmatpush1.msra.mxu0 %v1199
        %1217 = vmatprep.subr.mxu0 %v1196
        %1218 = vmatpush1.msra.mxu0 %v1195
        %1219 = vmatprep.subr.mxu0 %v1192
        %1220 = vmatpush1.msra.mxu0 %v1191
        %1221 = vmatprep.subr.mxu0 %v1188
        %1222 = vmatpush1.msra.mxu0 %v1187
        %1223 = vmatprep.subr.mxu0 %v1184
        %1224 = vmatpush1.msra.mxu0 %v1183
        %1225 = vmatprep.subr.mxu0 %v1180
        %1226 = vmatpush1.msra.mxu0 %v1179
        %1227 = vmatprep.subr.mxu0 %v1176
        %1228 = vmatpush1.msra.mxu0 %v1175
        %1229 = vmatprep.subr.mxu0 %v1172
        %1230 = vmatpush1.msra.mxu0 %v1171
        %1231 = vmatprep.subr.mxu0 %v1168
        %1232 = vmatpush1.msra.mxu0 %v1167
        %1233 = vmatprep.subr.mxu0 %v1164
        %1234 = vmatpush1.msra.mxu0 %v1163
        %1235 = vmatprep.subr.mxu0 %v1160
        %1236 = vmatpush1.msra.mxu0 %v1159
        %1237 = vmatprep.subr.mxu0 %v1156
        %1238 = vmatpush1.msra.mxu0 %v1155
        %1239 = vmatprep.subr.mxu0 %v1152
        %1240 = vmatpush1.msra.mxu0 %v1151
        %1241 = vmatprep.subr.mxu0 %v1148
        %1242 = vmatpush1.msra.mxu0 %v1147
        %1243 = vmatprep.subr.mxu0 0.0
        %1244 = vmatpush2.msra.mxu0 0.0
        %1245 = vmatprep.subr.mxu0 0.0
        %1246 = vmatpush2.msra.mxu0 0.0
        %1247 = vmatprep.subr.mxu0 0.0
        %1248 = vmatpush2.msra.mxu0 0.0
        %1249 = vmatprep.subr.mxu0 0.0
        %1250 = vmatpush2.msra.mxu0 0.0
        %1251 = vmatprep.subr.mxu0 0.0
        %1252 = vmatpush2.msra.mxu0 0.0
        %1253 = vmatprep.subr.mxu0 0.0
        %1254 = vmatpush2.msra.mxu0 0.0
        %1255 = vmatprep.subr.mxu0 0.0
        %1256 = vmatpush2.msra.mxu0 0.0
        %1257 = vmatprep.subr.mxu0 0.0
        %1258 = vmatpush2.msra.mxu0 0.0
        %1259 = vmatprep.subr.mxu0 0.0
        %1260 = vmatpush2.msra.mxu0 0.0
        %1261 = vmatprep.subr.mxu0 0.0
        %1262 = vmatpush2.msra.mxu0 0.0
        %1263 = vmatprep.subr.mxu0 0.0
        %1264 = vmatpush2.msra.mxu0 0.0
        %1265 = vmatprep.subr.mxu0 0.0
        %1266 = vmatpush2.msra.mxu0 0.0
        %1267 = vmatprep.subr.mxu0 0.0
        %1268 = vmatpush2.msra.mxu0 0.0
        %1269 = vmatprep.subr.mxu0 0.0
        %1270 = vmatpush2.msra.mxu0 0.0
        %1271 = vmatprep.subr.mxu0 0.0
        %1272 = vmatpush2.msra.mxu0 0.0
        %1273 = vmatprep.subr.mxu0 0.0
        %1274 = vmatpush2.msra.mxu0 0.0
        %1275 = vmatprep.mubr.f32.mxu0 0.0
        %1276 = vmatmul.mubr.f32.gmra.mxu0 %v700
        %v1277 = vpop.f32.mrf.mxu0
        %v1278 = vadd.f32 0.0, %v1277
        %v1279 = vpop.f32.mrf.mxu0
        %v1280 = vadd.f32 0.0, %v1279
        %1281 = vdwg.mxu0
        %1282 = vmatprep.subr.mxu0 %v1210
        %1283 = vmatpush1.msra.mxu0 %v1209
        %1284 = vmatprep.subr.mxu0 %v1206
        %1285 = vmatpush1.msra.mxu0 %v1205
        %1286 = vmatprep.subr.mxu0 %v1202
        %1287 = vmatpush1.msra.mxu0 %v1201
        %1288 = vmatprep.subr.mxu0 %v1198
        %1289 = vmatpush1.msra.mxu0 %v1197
        %1290 = vmatprep.subr.mxu0 %v1194
        %1291 = vmatpush1.msra.mxu0 %v1193
        %1292 = vmatprep.subr.mxu0 %v1190
        %1293 = vmatpush1.msra.mxu0 %v1189
        %1294 = vmatprep.subr.mxu0 %v1186
        %1295 = vmatpush1.msra.mxu0 %v1185
        %1296 = vmatprep.subr.mxu0 %v1182
        %1297 = vmatpush1.msra.mxu0 %v1181
        %1298 = vmatprep.subr.mxu0 %v1178
        %1299 = vmatpush1.msra.mxu0 %v1177
        %1300 = vmatprep.subr.mxu0 %v1174
        %1301 = vmatpush1.msra.mxu0 %v1173
        %1302 = vmatprep.subr.mxu0 %v1170
        %1303 = vmatpush1.msra.mxu0 %v1169
        %1304 = vmatprep.subr.mxu0 %v1166
        %1305 = vmatpush1.msra.mxu0 %v1165
        %1306 = vmatprep.subr.mxu0 %v1162
        %1307 = vmatpush1.msra.mxu0 %v1161
        %1308 = vmatprep.subr.mxu0 %v1158
        %1309 = vmatpush1.msra.mxu0 %v1157
        %1310 = vmatprep.subr.mxu0 %v1154
        %1311 = vmatpush1.msra.mxu0 %v1153
        %1312 = vmatprep.subr.mxu0 %v1150
        %1313 = vmatpush1.msra.mxu0 %v1149
        %1314 = vmatprep.subr.mxu0 0.0
        %1315 = vmatpush2.msra.mxu0 0.0
        %1316 = vmatprep.subr.mxu0 0.0
        %1317 = vmatpush2.msra.mxu0 0.0
        %1318 = vmatprep.subr.mxu0 0.0
        %1319 = vmatpush2.msra.mxu0 0.0
        %1320 = vmatprep.subr.mxu0 0.0
        %1321 = vmatpush2.msra.mxu0 0.0
        %1322 = vmatprep.subr.mxu0 0.0
        %1323 = vmatpush2.msra.mxu0 0.0
        %1324 = vmatprep.subr.mxu0 0.0
        %1325 = vmatpush2.msra.mxu0 0.0
        %1326 = vmatprep.subr.mxu0 0.0
        %1327 = vmatpush2.msra.mxu0 0.0
        %1328 = vmatprep.subr.mxu0 0.0
        %1329 = vmatpush2.msra.mxu0 0.0
        %1330 = vmatprep.subr.mxu0 0.0
        %1331 = vmatpush2.msra.mxu0 0.0
        %1332 = vmatprep.subr.mxu0 0.0
        %1333 = vmatpush2.msra.mxu0 0.0
        %1334 = vmatprep.subr.mxu0 0.0
        %1335 = vmatpush2.msra.mxu0 0.0
        %1336 = vmatprep.subr.mxu0 0.0
        %1337 = vmatpush2.msra.mxu0 0.0
        %1338 = vmatprep.subr.mxu0 0.0
        %1339 = vmatpush2.msra.mxu0 0.0
        %1340 = vmatprep.subr.mxu0 0.0
        %1341 = vmatpush2.msra.mxu0 0.0
        %1342 = vmatprep.subr.mxu0 0.0
        %1343 = vmatpush2.msra.mxu0 0.0
        %1344 = vmatprep.subr.mxu0 0.0
        %1345 = vmatpush2.msra.mxu0 0.0
        %1346 = vmatprep.mubr.f32.mxu0 0.0
        %1347 = vmatmul.mubr.f32.gmra.mxu0 %v700
        %v1348 = vpop.f32.mrf.mxu0
        %v1349 = vadd.f32 0.0, %v1348
        %v1350 = vpop.f32.mrf.mxu0
        %v1351 = vadd.f32 0.0, %v1350
        %1352 = vdwg.mxu0
        %v1353 = vadd.f32 %v1143, %v1278
        %v1354 = vadd.f32 %v1144, %v1280
        %v1355 = vadd.f32 %v1145, %v1349
        %v1356 = vadd.f32 %v1146, %v1351
        %v1357 = vxor.u32 %v1353, 2147483648
        %v1358 = vmul.f32 %v1357, 1.442695
        %v1359 = vpow.pop %v1358
        %v1360 = vadd.f32 %v1359, 1.0
        %v1361 = vrcp.pop %v1360
        %v1362 = vmul.f32 1.0, %v1361
        %v1363 = vxor.u32 %v1354, 2147483648
        %v1364 = vmul.f32 %v1363, 1.442695
        %v1365 = vpow.pop %v1364
        %v1366 = vadd.f32 %v1365, 1.0
        %v1367 = vrcp.pop %v1366
        %v1368 = vmul.f32 1.0, %v1367
        %v1369 = vtanh.pop %v1355
        %v1370 = vxor.u32 %v1356, 2147483648
        %v1371 = vmul.f32 %v1370, 1.442695
        %v1372 = vpow.pop %v1371
        %v1373 = vadd.f32 %v1372, 1.0
        %v1374 = vrcp.pop %v1373
        %v1375 = vmul.f32 1.0, %v1374
        %v1376 = vmul.f32 %v1368, %v698
        %v1377 = vmul.f32 %v1362, %v1369
        %v1378 = vadd.f32 %v1376, %v1377
        %v1379 = vtanh.pop %v1378
        %v1380 = vmul.f32 %v1375, %v1379
        %v1381 = vld [vmem:[#allocation10] sm:$0xff]
        %v1382 = vld [vmem:[#allocation10 + $0x8] sm:$0xff]
        %v1383 = vld [vmem:[#allocation10 + $0x10] sm:$0xff]
        %v1384 = vld [vmem:[#allocation10 + $0x18] sm:$0xff]
        %v1385 = vld [vmem:[#allocation10 + $0x20] sm:$0xff]
        %v1386 = vld [vmem:[#allocation10 + $0x28] sm:$0xff]
        %v1387 = vld [vmem:[#allocation10 + $0x30] sm:$0xff]
        %v1388 = vld [vmem:[#allocation10 + $0x38] sm:$0xff]
        %v1389 = vld [vmem:[#allocation10 + $0x40] sm:$0xff]
        %v1390 = vld [vmem:[#allocation10 + $0x48] sm:$0xff]
        %v1391 = vld [vmem:[#allocation10 + $0x50] sm:$0xff]
        %v1392 = vld [vmem:[#allocation10 + $0x58] sm:$0xff]
        %v1393 = vld [vmem:[#allocation10 + $0x60] sm:$0xff]
        %v1394 = vld [vmem:[#allocation10 + $0x68] sm:$0xff]
        %v1395 = vld [vmem:[#allocation10 + $0x70] sm:$0xff]
        %v1396 = vld [vmem:[#allocation10 + $0x78] sm:$0xff]
        %v1397 = vld [vmem:[#allocation10 + $0x80] sm:$0xff]
        %v1398 = vld [vmem:[#allocation10 + $0x88] sm:$0xff]
        %v1399 = vld [vmem:[#allocation10 + $0x90] sm:$0xff]
        %v1400 = vld [vmem:[#allocation10 + $0x98] sm:$0xff]
        %v1401 = vld [vmem:[#allocation10 + $0xa0] sm:$0xff]
        %v1402 = vld [vmem:[#allocation10 + $0xa8] sm:$0xff]
        %v1403 = vld [vmem:[#allocation10 + $0xb0] sm:$0xff]
        %v1404 = vld [vmem:[#allocation10 + $0xb8] sm:$0xff]
        %v1405 = vld [vmem:[#allocation10 + $0xc0] sm:$0xff]
        %v1406 = vld [vmem:[#allocation10 + $0xc8] sm:$0xff]
        %v1407 = vld [vmem:[#allocation10 + $0xd0] sm:$0xff]
        %v1408 = vld [vmem:[#allocation10 + $0xd8] sm:$0xff]
        %v1409 = vld [vmem:[#allocation10 + $0xe0] sm:$0xff]
        %v1410 = vld [vmem:[#allocation10 + $0xe8] sm:$0xff]
        %v1411 = vld [vmem:[#allocation10 + $0xf0] sm:$0xff]
        %v1412 = vld [vmem:[#allocation10 + $0xf8] sm:$0xff]
        %v1413 = vld [vmem:[#allocation10 + $0x100] sm:$0xff]
        %v1414 = vld [vmem:[#allocation10 + $0x108] sm:$0xff]
        %v1415 = vld [vmem:[#allocation10 + $0x110] sm:$0xff]
        %v1416 = vld [vmem:[#allocation10 + $0x118] sm:$0xff]
        %v1417 = vld [vmem:[#allocation10 + $0x120] sm:$0xff]
        %v1418 = vld [vmem:[#allocation10 + $0x128] sm:$0xff]
        %v1419 = vld [vmem:[#allocation10 + $0x130] sm:$0xff]
        %v1420 = vld [vmem:[#allocation10 + $0x138] sm:$0xff]
        %v1421 = vld [vmem:[#allocation10 + $0x140] sm:$0xff]
        %v1422 = vld [vmem:[#allocation10 + $0x148] sm:$0xff]
        %v1423 = vld [vmem:[#allocation10 + $0x150] sm:$0xff]
        %v1424 = vld [vmem:[#allocation10 + $0x158] sm:$0xff]
        %v1425 = vld [vmem:[#allocation10 + $0x160] sm:$0xff]
        %v1426 = vld [vmem:[#allocation10 + $0x168] sm:$0xff]
        %v1427 = vld [vmem:[#allocation10 + $0x170] sm:$0xff]
        %v1428 = vld [vmem:[#allocation10 + $0x178] sm:$0xff]
        %v1429 = vld [vmem:[#allocation10 + $0x180] sm:$0xff]
        %v1430 = vld [vmem:[#allocation10 + $0x188] sm:$0xff]
        %v1431 = vld [vmem:[#allocation10 + $0x190] sm:$0xff]
        %v1432 = vld [vmem:[#allocation10 + $0x198] sm:$0xff]
        %v1433 = vld [vmem:[#allocation10 + $0x1a0] sm:$0xff]
        %v1434 = vld [vmem:[#allocation10 + $0x1a8] sm:$0xff]
        %v1435 = vld [vmem:[#allocation10 + $0x1b0] sm:$0xff]
        %v1436 = vld [vmem:[#allocation10 + $0x1b8] sm:$0xff]
        %v1437 = vld [vmem:[#allocation10 + $0x1c0] sm:$0xff]
        %v1438 = vld [vmem:[#allocation10 + $0x1c8] sm:$0xff]
        %v1439 = vld [vmem:[#allocation10 + $0x1d0] sm:$0xff]
        %v1440 = vld [vmem:[#allocation10 + $0x1d8] sm:$0xff]
        %v1441 = vld [vmem:[#allocation10 + $0x1e0] sm:$0xff]
        %v1442 = vld [vmem:[#allocation10 + $0x1e8] sm:$0xff]
        %v1443 = vld [vmem:[#allocation10 + $0x1f0] sm:$0xff]
        %v1444 = vld [vmem:[#allocation10 + $0x1f8] sm:$0xff]
        %v1445 = vld [vmem:[#allocation11] sm:$0xff]
        %v1446 = vld [vmem:[#allocation11 + $0x8] sm:$0xff]
        %v1447 = vld [vmem:[#allocation11 + $0x10] sm:$0xff]
        %v1448 = vld [vmem:[#allocation11 + $0x18] sm:$0xff]
        %v1449 = vld [vmem:[#allocation11 + $0x20] sm:$0xff]
        %v1450 = vld [vmem:[#allocation11 + $0x28] sm:$0xff]
        %v1451 = vld [vmem:[#allocation11 + $0x30] sm:$0xff]
        %v1452 = vld [vmem:[#allocation11 + $0x38] sm:$0xff]
        %v1453 = vld [vmem:[#allocation11 + $0x40] sm:$0xff]
        %v1454 = vld [vmem:[#allocation11 + $0x48] sm:$0xff]
        %v1455 = vld [vmem:[#allocation11 + $0x50] sm:$0xff]
        %v1456 = vld [vmem:[#allocation11 + $0x58] sm:$0xff]
        %v1457 = vld [vmem:[#allocation11 + $0x60] sm:$0xff]
        %v1458 = vld [vmem:[#allocation11 + $0x68] sm:$0xff]
        %v1459 = vld [vmem:[#allocation11 + $0x70] sm:$0xff]
        %v1460 = vld [vmem:[#allocation11 + $0x78] sm:$0xff]
        %v1461 = vld [vmem:[#allocation11 + $0x80] sm:$0xff]
        %v1462 = vld [vmem:[#allocation11 + $0x88] sm:$0xff]
        %v1463 = vld [vmem:[#allocation11 + $0x90] sm:$0xff]
        %v1464 = vld [vmem:[#allocation11 + $0x98] sm:$0xff]
        %v1465 = vld [vmem:[#allocation11 + $0xa0] sm:$0xff]
        %v1466 = vld [vmem:[#allocation11 + $0xa8] sm:$0xff]
        %v1467 = vld [vmem:[#allocation11 + $0xb0] sm:$0xff]
        %v1468 = vld [vmem:[#allocation11 + $0xb8] sm:$0xff]
        %v1469 = vld [vmem:[#allocation11 + $0xc0] sm:$0xff]
        %v1470 = vld [vmem:[#allocation11 + $0xc8] sm:$0xff]
        %v1471 = vld [vmem:[#allocation11 + $0xd0] sm:$0xff]
        %v1472 = vld [vmem:[#allocation11 + $0xd8] sm:$0xff]
        %v1473 = vld [vmem:[#allocation11 + $0xe0] sm:$0xff]
        %v1474 = vld [vmem:[#allocation11 + $0xe8] sm:$0xff]
        %v1475 = vld [vmem:[#allocation11 + $0xf0] sm:$0xff]
        %v1476 = vld [vmem:[#allocation11 + $0xf8] sm:$0xff]
        %v1477 = vld [vmem:[#allocation11 + $0x100] sm:$0xff]
        %v1478 = vld [vmem:[#allocation11 + $0x108] sm:$0xff]
        %v1479 = vld [vmem:[#allocation11 + $0x110] sm:$0xff]
        %v1480 = vld [vmem:[#allocation11 + $0x118] sm:$0xff]
        %v1481 = vld [vmem:[#allocation11 + $0x120] sm:$0xff]
        %v1482 = vld [vmem:[#allocation11 + $0x128] sm:$0xff]
        %v1483 = vld [vmem:[#allocation11 + $0x130] sm:$0xff]
        %v1484 = vld [vmem:[#allocation11 + $0x138] sm:$0xff]
        %v1485 = vld [vmem:[#allocation11 + $0x140] sm:$0xff]
        %v1486 = vld [vmem:[#allocation11 + $0x148] sm:$0xff]
        %v1487 = vld [vmem:[#allocation11 + $0x150] sm:$0xff]
        %v1488 = vld [vmem:[#allocation11 + $0x158] sm:$0xff]
        %v1489 = vld [vmem:[#allocation11 + $0x160] sm:$0xff]
        %v1490 = vld [vmem:[#allocation11 + $0x168] sm:$0xff]
        %v1491 = vld [vmem:[#allocation11 + $0x170] sm:$0xff]
        %v1492 = vld [vmem:[#allocation11 + $0x178] sm:$0xff]
        %v1493 = vld [vmem:[#allocation11 + $0x180] sm:$0xff]
        %v1494 = vld [vmem:[#allocation11 + $0x188] sm:$0xff]
        %v1495 = vld [vmem:[#allocation11 + $0x190] sm:$0xff]
        %v1496 = vld [vmem:[#allocation11 + $0x198] sm:$0xff]
        %v1497 = vld [vmem:[#allocation11 + $0x1a0] sm:$0xff]
        %v1498 = vld [vmem:[#allocation11 + $0x1a8] sm:$0xff]
        %v1499 = vld [vmem:[#allocation11 + $0x1b0] sm:$0xff]
        %v1500 = vld [vmem:[#allocation11 + $0x1b8] sm:$0xff]
        %v1501 = vld [vmem:[#allocation11 + $0x1c0] sm:$0xff]
        %v1502 = vld [vmem:[#allocation11 + $0x1c8] sm:$0xff]
        %v1503 = vld [vmem:[#allocation11 + $0x1d0] sm:$0xff]
        %v1504 = vld [vmem:[#allocation11 + $0x1d8] sm:$0xff]
        %v1505 = vld [vmem:[#allocation11 + $0x1e0] sm:$0xff]
        %v1506 = vld [vmem:[#allocation11 + $0x1e8] sm:$0xff]
        %v1507 = vld [vmem:[#allocation11 + $0x1f0] sm:$0xff]
        %v1508 = vld [vmem:[#allocation11 + $0x1f8] sm:$0xff]
        %1509 = vmatprep.subr.mxu0 %v1506
        %1510 = vmatpush1.msra.mxu0 %v1505
        %1511 = vmatprep.subr.mxu0 %v1502
        %1512 = vmatpush1.msra.mxu0 %v1501
        %1513 = vmatprep.subr.mxu0 %v1498
        %1514 = vmatpush1.msra.mxu0 %v1497
        %1515 = vmatprep.subr.mxu0 %v1494
        %1516 = vmatpush1.msra.mxu0 %v1493
        %1517 = vmatprep.subr.mxu0 %v1490
        %1518 = vmatpush1.msra.mxu0 %v1489
        %1519 = vmatprep.subr.mxu0 %v1486
        %1520 = vmatpush1.msra.mxu0 %v1485
        %1521 = vmatprep.subr.mxu0 %v1482
        %1522 = vmatpush1.msra.mxu0 %v1481
        %1523 = vmatprep.subr.mxu0 %v1478
        %1524 = vmatpush1.msra.mxu0 %v1477
        %1525 = vmatprep.subr.mxu0 %v1474
        %1526 = vmatpush1.msra.mxu0 %v1473
        %1527 = vmatprep.subr.mxu0 %v1470
        %1528 = vmatpush1.msra.mxu0 %v1469
        %1529 = vmatprep.subr.mxu0 %v1466
        %1530 = vmatpush1.msra.mxu0 %v1465
        %1531 = vmatprep.subr.mxu0 %v1462
        %1532 = vmatpush1.msra.mxu0 %v1461
        %1533 = vmatprep.subr.mxu0 %v1458
        %1534 = vmatpush1.msra.mxu0 %v1457
        %1535 = vmatprep.subr.mxu0 %v1454
        %1536 = vmatpush1.msra.mxu0 %v1453
        %1537 = vmatprep.subr.mxu0 %v1450
        %1538 = vmatpush1.msra.mxu0 %v1449
        %1539 = vmatprep.subr.mxu0 %v1446
        %1540 = vmatpush1.msra.mxu0 %v1445
        %1541 = vmatprep.subr.mxu0 0.0
        %1542 = vmatpush2.msra.mxu0 0.0
        %1543 = vmatprep.subr.mxu0 0.0
        %1544 = vmatpush2.msra.mxu0 0.0
        %1545 = vmatprep.subr.mxu0 0.0
        %1546 = vmatpush2.msra.mxu0 0.0
        %1547 = vmatprep.subr.mxu0 0.0
        %1548 = vmatpush2.msra.mxu0 0.0
        %1549 = vmatprep.subr.mxu0 0.0
        %1550 = vmatpush2.msra.mxu0 0.0
        %1551 = vmatprep.subr.mxu0 0.0
        %1552 = vmatpush2.msra.mxu0 0.0
        %1553 = vmatprep.subr.mxu0 0.0
        %1554 = vmatpush2.msra.mxu0 0.0
        %1555 = vmatprep.subr.mxu0 0.0
        %1556 = vmatpush2.msra.mxu0 0.0
        %1557 = vmatprep.subr.mxu0 0.0
        %1558 = vmatpush2.msra.mxu0 0.0
        %1559 = vmatprep.subr.mxu0 0.0
        %1560 = vmatpush2.msra.mxu0 0.0
        %1561 = vmatprep.subr.mxu0 0.0
        %1562 = vmatpush2.msra.mxu0 0.0
        %1563 = vmatprep.subr.mxu0 0.0
        %1564 = vmatpush2.msra.mxu0 0.0
        %1565 = vmatprep.subr.mxu0 0.0
        %1566 = vmatpush2.msra.mxu0 0.0
        %1567 = vmatprep.subr.mxu0 0.0
        %1568 = vmatpush2.msra.mxu0 0.0
        %1569 = vmatprep.subr.mxu0 0.0
        %1570 = vmatpush2.msra.mxu0 0.0
        %1571 = vmatprep.subr.mxu0 0.0
        %1572 = vmatpush2.msra.mxu0 0.0
        %1573 = vmatprep.mubr.f32.mxu0 0.0
        %1574 = vmatmul.mubr.f32.gmra.mxu0 %v1140
        %v1575 = vpop.f32.mrf.mxu0
        %v1576 = vadd.f32 0.0, %v1575
        %v1577 = vpop.f32.mrf.mxu0
        %v1578 = vadd.f32 0.0, %v1577
        %1579 = vdwg.mxu0
        %1580 = vmatprep.subr.mxu0 %v1508
        %1581 = vmatpush1.msra.mxu0 %v1507
        %1582 = vmatprep.subr.mxu0 %v1504
        %1583 = vmatpush1.msra.mxu0 %v1503
        %1584 = vmatprep.subr.mxu0 %v1500
        %1585 = vmatpush1.msra.mxu0 %v1499
        %1586 = vmatprep.subr.mxu0 %v1496
        %1587 = vmatpush1.msra.mxu0 %v1495
        %1588 = vmatprep.subr.mxu0 %v1492
        %1589 = vmatpush1.msra.mxu0 %v1491
        %1590 = vmatprep.subr.mxu0 %v1488
        %1591 = vmatpush1.msra.mxu0 %v1487
        %1592 = vmatprep.subr.mxu0 %v1484
        %1593 = vmatpush1.msra.mxu0 %v1483
        %1594 = vmatprep.subr.mxu0 %v1480
        %1595 = vmatpush1.msra.mxu0 %v1479
        %1596 = vmatprep.subr.mxu0 %v1476
        %1597 = vmatpush1.msra.mxu0 %v1475
        %1598 = vmatprep.subr.mxu0 %v1472
        %1599 = vmatpush1.msra.mxu0 %v1471
        %1600 = vmatprep.subr.mxu0 %v1468
        %1601 = vmatpush1.msra.mxu0 %v1467
        %1602 = vmatprep.subr.mxu0 %v1464
        %1603 = vmatpush1.msra.mxu0 %v1463
        %1604 = vmatprep.subr.mxu0 %v1460
        %1605 = vmatpush1.msra.mxu0 %v1459
        %1606 = vmatprep.subr.mxu0 %v1456
        %1607 = vmatpush1.msra.mxu0 %v1455
        %1608 = vmatprep.subr.mxu0 %v1452
        %1609 = vmatpush1.msra.mxu0 %v1451
        %1610 = vmatprep.subr.mxu0 %v1448
        %1611 = vmatpush1.msra.mxu0 %v1447
        %1612 = vmatprep.subr.mxu0 0.0
        %1613 = vmatpush2.msra.mxu0 0.0
        %1614 = vmatprep.subr.mxu0 0.0
        %1615 = vmatpush2.msra.mxu0 0.0
        %1616 = vmatprep.subr.mxu0 0.0
        %1617 = vmatpush2.msra.mxu0 0.0
        %1618 = vmatprep.subr.mxu0 0.0
        %1619 = vmatpush2.msra.mxu0 0.0
        %1620 = vmatprep.subr.mxu0 0.0
        %1621 = vmatpush2.msra.mxu0 0.0
        %1622 = vmatprep.subr.mxu0 0.0
        %1623 = vmatpush2.msra.mxu0 0.0
        %1624 = vmatprep.subr.mxu0 0.0
        %1625 = vmatpush2.msra.mxu0 0.0
        %1626 = vmatprep.subr.mxu0 0.0
        %1627 = vmatpush2.msra.mxu0 0.0
        %1628 = vmatprep.subr.mxu0 0.0
        %1629 = vmatpush2.msra.mxu0 0.0
        %1630 = vmatprep.subr.mxu0 0.0
        %1631 = vmatpush2.msra.mxu0 0.0
        %1632 = vmatprep.subr.mxu0 0.0
        %1633 = vmatpush2.msra.mxu0 0.0
        %1634 = vmatprep.subr.mxu0 0.0
        %1635 = vmatpush2.msra.mxu0 0.0
        %1636 = vmatprep.subr.mxu0 0.0
        %1637 = vmatpush2.msra.mxu0 0.0
        %1638 = vmatprep.subr.mxu0 0.0
        %1639 = vmatpush2.msra.mxu0 0.0
        %1640 = vmatprep.subr.mxu0 0.0
        %1641 = vmatpush2.msra.mxu0 0.0
        %1642 = vmatprep.subr.mxu0 0.0
        %1643 = vmatpush2.msra.mxu0 0.0
        %1644 = vmatprep.mubr.f32.mxu0 0.0
        %1645 = vmatmul.mubr.f32.gmra.mxu0 %v1140
        %v1646 = vpop.f32.mrf.mxu0
        %v1647 = vadd.f32 0.0, %v1646
        %v1648 = vpop.f32.mrf.mxu0
        %v1649 = vadd.f32 0.0, %v1648
        %1650 = vdwg.mxu0
        %1651 = vmatprep.subr.mxu0 %v1442
        %1652 = vmatpush1.msra.mxu0 %v1441
        %1653 = vmatprep.subr.mxu0 %v1438
        %1654 = vmatpush1.msra.mxu0 %v1437
        %1655 = vmatprep.subr.mxu0 %v1434
        %1656 = vmatpush1.msra.mxu0 %v1433
        %1657 = vmatprep.subr.mxu0 %v1430
        %1658 = vmatpush1.msra.mxu0 %v1429
        %1659 = vmatprep.subr.mxu0 %v1426
        %1660 = vmatpush1.msra.mxu0 %v1425
        %1661 = vmatprep.subr.mxu0 %v1422
        %1662 = vmatpush1.msra.mxu0 %v1421
        %1663 = vmatprep.subr.mxu0 %v1418
        %1664 = vmatpush1.msra.mxu0 %v1417
        %1665 = vmatprep.subr.mxu0 %v1414
        %1666 = vmatpush1.msra.mxu0 %v1413
        %1667 = vmatprep.subr.mxu0 %v1410
        %1668 = vmatpush1.msra.mxu0 %v1409
        %1669 = vmatprep.subr.mxu0 %v1406
        %1670 = vmatpush1.msra.mxu0 %v1405
        %1671 = vmatprep.subr.mxu0 %v1402
        %1672 = vmatpush1.msra.mxu0 %v1401
        %1673 = vmatprep.subr.mxu0 %v1398
        %1674 = vmatpush1.msra.mxu0 %v1397
        %1675 = vmatprep.subr.mxu0 %v1394
        %1676 = vmatpush1.msra.mxu0 %v1393
        %1677 = vmatprep.subr.mxu0 %v1390
        %1678 = vmatpush1.msra.mxu0 %v1389
        %1679 = vmatprep.subr.mxu0 %v1386
        %1680 = vmatpush1.msra.mxu0 %v1385
        %1681 = vmatprep.subr.mxu0 %v1382
        %1682 = vmatpush1.msra.mxu0 %v1381
        %1683 = vmatprep.subr.mxu0 0.0
        %1684 = vmatpush2.msra.mxu0 0.0
        %1685 = vmatprep.subr.mxu0 0.0
        %1686 = vmatpush2.msra.mxu0 0.0
        %1687 = vmatprep.subr.mxu0 0.0
        %1688 = vmatpush2.msra.mxu0 0.0
        %1689 = vmatprep.subr.mxu0 0.0
        %1690 = vmatpush2.msra.mxu0 0.0
        %1691 = vmatprep.subr.mxu0 0.0
        %1692 = vmatpush2.msra.mxu0 0.0
        %1693 = vmatprep.subr.mxu0 0.0
        %1694 = vmatpush2.msra.mxu0 0.0
        %1695 = vmatprep.subr.mxu0 0.0
        %1696 = vmatpush2.msra.mxu0 0.0
        %1697 = vmatprep.subr.mxu0 0.0
        %1698 = vmatpush2.msra.mxu0 0.0
        %1699 = vmatprep.subr.mxu0 0.0
        %1700 = vmatpush2.msra.mxu0 0.0
        %1701 = vmatprep.subr.mxu0 0.0
        %1702 = vmatpush2.msra.mxu0 0.0
        %1703 = vmatprep.subr.mxu0 0.0
        %1704 = vmatpush2.msra.mxu0 0.0
        %1705 = vmatprep.subr.mxu0 0.0
        %1706 = vmatpush2.msra.mxu0 0.0
        %1707 = vmatprep.subr.mxu0 0.0
        %1708 = vmatpush2.msra.mxu0 0.0
        %1709 = vmatprep.subr.mxu0 0.0
        %1710 = vmatpush2.msra.mxu0 0.0
        %1711 = vmatprep.subr.mxu0 0.0
        %1712 = vmatpush2.msra.mxu0 0.0
        %1713 = vmatprep.subr.mxu0 0.0
        %1714 = vmatpush2.msra.mxu0 0.0
        %1715 = vmatprep.mubr.f32.mxu0 0.0
        %1716 = vmatmul.mubr.f32.gmra.mxu0 %v1380
        %v1717 = vpop.f32.mrf.mxu0
        %v1718 = vadd.f32 %v1576, %v1717
        %v1719 = vpop.f32.mrf.mxu0
        %v1720 = vadd.f32 %v1578, %v1719
        %1721 = vdwg.mxu0
        %1722 = vmatprep.subr.mxu0 %v1444
        %1723 = vmatpush1.msra.mxu0 %v1443
        %1724 = vmatprep.subr.mxu0 %v1440
        %1725 = vmatpush1.msra.mxu0 %v1439
        %1726 = vmatprep.subr.mxu0 %v1436
        %1727 = vmatpush1.msra.mxu0 %v1435
        %1728 = vmatprep.subr.mxu0 %v1432
        %1729 = vmatpush1.msra.mxu0 %v1431
        %1730 = vmatprep.subr.mxu0 %v1428
        %1731 = vmatpush1.msra.mxu0 %v1427
        %1732 = vmatprep.subr.mxu0 %v1424
        %1733 = vmatpush1.msra.mxu0 %v1423
        %1734 = vmatprep.subr.mxu0 %v1420
        %1735 = vmatpush1.msra.mxu0 %v1419
        %1736 = vmatprep.subr.mxu0 %v1416
        %1737 = vmatpush1.msra.mxu0 %v1415
        %1738 = vmatprep.subr.mxu0 %v1412
        %1739 = vmatpush1.msra.mxu0 %v1411
        %1740 = vmatprep.subr.mxu0 %v1408
        %1741 = vmatpush1.msra.mxu0 %v1407
        %1742 = vmatprep.subr.mxu0 %v1404
        %1743 = vmatpush1.msra.mxu0 %v1403
        %1744 = vmatprep.subr.mxu0 %v1400
        %1745 = vmatpush1.msra.mxu0 %v1399
        %1746 = vmatprep.subr.mxu0 %v1396
        %1747 = vmatpush1.msra.mxu0 %v1395
        %1748 = vmatprep.subr.mxu0 %v1392
        %1749 = vmatpush1.msra.mxu0 %v1391
        %1750 = vmatprep.subr.mxu0 %v1388
        %1751 = vmatpush1.msra.mxu0 %v1387
        %1752 = vmatprep.subr.mxu0 %v1384
        %1753 = vmatpush1.msra.mxu0 %v1383
        %1754 = vmatprep.subr.mxu0 0.0
        %1755 = vmatpush2.msra.mxu0 0.0
        %1756 = vmatprep.subr.mxu0 0.0
        %1757 = vmatpush2.msra.mxu0 0.0
        %1758 = vmatprep.subr.mxu0 0.0
        %1759 = vmatpush2.msra.mxu0 0.0
        %1760 = vmatprep.subr.mxu0 0.0
        %1761 = vmatpush2.msra.mxu0 0.0
        %1762 = vmatprep.subr.mxu0 0.0
        %1763 = vmatpush2.msra.mxu0 0.0
        %1764 = vmatprep.subr.mxu0 0.0
        %1765 = vmatpush2.msra.mxu0 0.0
        %1766 = vmatprep.subr.mxu0 0.0
        %1767 = vmatpush2.msra.mxu0 0.0
        %1768 = vmatprep.subr.mxu0 0.0
        %1769 = vmatpush2.msra.mxu0 0.0
        %1770 = vmatprep.subr.mxu0 0.0
        %1771 = vmatpush2.msra.mxu0 0.0
        %1772 = vmatprep.subr.mxu0 0.0
        %1773 = vmatpush2.msra.mxu0 0.0
        %1774 = vmatprep.subr.mxu0 0.0
        %1775 = vmatpush2.msra.mxu0 0.0
        %1776 = vmatprep.subr.mxu0 0.0
        %1777 = vmatpush2.msra.mxu0 0.0
        %1778 = vmatprep.subr.mxu0 0.0
        %1779 = vmatpush2.msra.mxu0 0.0
        %1780 = vmatprep.subr.mxu0 0.0
        %1781 = vmatpush2.msra.mxu0 0.0
        %1782 = vmatprep.subr.mxu0 0.0
        %1783 = vmatpush2.msra.mxu0 0.0
        %1784 = vmatprep.subr.mxu0 0.0
        %1785 = vmatpush2.msra.mxu0 0.0
        %1786 = vmatprep.mubr.f32.mxu0 0.0
        %1787 = vmatmul.mubr.f32.gmra.mxu0 %v1380
        %v1788 = vpop.f32.mrf.mxu0
        %v1789 = vadd.f32 %v1647, %v1788
        %v1790 = vpop.f32.mrf.mxu0
        %v1791 = vadd.f32 %v1649, %v1790
        %1792 = vdwg.mxu0
        %v1793 = vadd.f32 %v1718, %v446
        %v1794 = vadd.f32 %v1720, %v450
        %v1795 = vadd.f32 %v1789, %v454
        %v1796 = vadd.f32 %v1791, %v458
        %v1797 = vxor.u32 %v1793, 2147483648
        %v1798 = vmul.f32 %v1797, 1.442695
        %v1799 = vpow.pop %v1798
        %v1800 = vadd.f32 %v1799, 1.0
        %v1801 = vrcp.pop %v1800
        %v1802 = vmul.f32 1.0, %v1801
        %v1803 = vxor.u32 %v1794, 2147483648
        %v1804 = vmul.f32 %v1803, 1.442695
        %v1805 = vpow.pop %v1804
        %v1806 = vadd.f32 %v1805, 1.0
        %v1807 = vrcp.pop %v1806
        %v1808 = vmul.f32 1.0, %v1807
        %v1809 = vtanh.pop %v1795
        %v1810 = vxor.u32 %v1796, 2147483648
        %v1811 = vmul.f32 %v1810, 1.442695
        %v1812 = vpow.pop %v1811
        %v1813 = vadd.f32 %v1812, 1.0
        %v1814 = vrcp.pop %v1813
        %v1815 = vmul.f32 1.0, %v1814
        %v1816 = vmul.f32 %v1808, %v1138
        %v1817 = vmul.f32 %v1802, %v1809
        %v1818 = vadd.f32 %v1816, %v1817
        %v1819 = vtanh.pop %v1818
        %v1820 = vmul.f32 %v1815, %v1819
        %s1821 = scalar_lea.vmem %s416, 8 [#allocation13]
        %1822 = vst [vmem:[%s1821] sm:$0xff] %v1820
        %s1823 = scalar_lea.vmem %s366, 64 [#allocation2]
        %v1824 = vld [vmem:[%s1823] sm:$0xff]
        %v1825 = vld [vmem:[%s1823 + $0x8] sm:$0xff]
        %v1826 = vld [vmem:[%s1823 + $0x10] sm:$0xff]
        %v1827 = vld [vmem:[%s1823 + $0x18] sm:$0xff]
        %v1828 = vld [vmem:[#allocation8] sm:$0xff]
        %v1829 = vld [vmem:[#allocation8 + $0x8] sm:$0xff]
        %v1830 = vld [vmem:[#allocation8 + $0x10] sm:$0xff]
        %v1831 = vld [vmem:[#allocation8 + $0x18] sm:$0xff]
        %v1832 = vld [vmem:[#allocation8 + $0x20] sm:$0xff]
        %v1833 = vld [vmem:[#allocation8 + $0x28] sm:$0xff]
        %v1834 = vld [vmem:[#allocation8 + $0x30] sm:$0xff]
        %v1835 = vld [vmem:[#allocation8 + $0x38] sm:$0xff]
        %v1836 = vld [vmem:[#allocation8 + $0x40] sm:$0xff]
        %v1837 = vld [vmem:[#allocation8 + $0x48] sm:$0xff]
        %v1838 = vld [vmem:[#allocation8 + $0x50] sm:$0xff]
        %v1839 = vld [vmem:[#allocation8 + $0x58] sm:$0xff]
        %v1840 = vld [vmem:[#allocation8 + $0x60] sm:$0xff]
        %v1841 = vld [vmem:[#allocation8 + $0x68] sm:$0xff]
        %v1842 = vld [vmem:[#allocation8 + $0x70] sm:$0xff]
        %v1843 = vld [vmem:[#allocation8 + $0x78] sm:$0xff]
        %v1844 = vld [vmem:[#allocation8 + $0x80] sm:$0xff]
        %v1845 = vld [vmem:[#allocation8 + $0x88] sm:$0xff]
        %v1846 = vld [vmem:[#allocation8 + $0x90] sm:$0xff]
        %v1847 = vld [vmem:[#allocation8 + $0x98] sm:$0xff]
        %v1848 = vld [vmem:[#allocation8 + $0xa0] sm:$0xff]
        %v1849 = vld [vmem:[#allocation8 + $0xa8] sm:$0xff]
        %v1850 = vld [vmem:[#allocation8 + $0xb0] sm:$0xff]
        %v1851 = vld [vmem:[#allocation8 + $0xb8] sm:$0xff]
        %v1852 = vld [vmem:[#allocation8 + $0xc0] sm:$0xff]
        %v1853 = vld [vmem:[#allocation8 + $0xc8] sm:$0xff]
        %v1854 = vld [vmem:[#allocation8 + $0xd0] sm:$0xff]
        %v1855 = vld [vmem:[#allocation8 + $0xd8] sm:$0xff]
        %v1856 = vld [vmem:[#allocation8 + $0xe0] sm:$0xff]
        %v1857 = vld [vmem:[#allocation8 + $0xe8] sm:$0xff]
        %v1858 = vld [vmem:[#allocation8 + $0xf0] sm:$0xff]
        %v1859 = vld [vmem:[#allocation8 + $0xf8] sm:$0xff]
        %v1860 = vld [vmem:[#allocation8 + $0x100] sm:$0xff]
        %v1861 = vld [vmem:[#allocation8 + $0x108] sm:$0xff]
        %v1862 = vld [vmem:[#allocation8 + $0x110] sm:$0xff]
        %v1863 = vld [vmem:[#allocation8 + $0x118] sm:$0xff]
        %v1864 = vld [vmem:[#allocation8 + $0x120] sm:$0xff]
        %v1865 = vld [vmem:[#allocation8 + $0x128] sm:$0xff]
        %v1866 = vld [vmem:[#allocation8 + $0x130] sm:$0xff]
        %v1867 = vld [vmem:[#allocation8 + $0x138] sm:$0xff]
        %v1868 = vld [vmem:[#allocation8 + $0x140] sm:$0xff]
        %v1869 = vld [vmem:[#allocation8 + $0x148] sm:$0xff]
        %v1870 = vld [vmem:[#allocation8 + $0x150] sm:$0xff]
        %v1871 = vld [vmem:[#allocation8 + $0x158] sm:$0xff]
        %v1872 = vld [vmem:[#allocation8 + $0x160] sm:$0xff]
        %v1873 = vld [vmem:[#allocation8 + $0x168] sm:$0xff]
        %v1874 = vld [vmem:[#allocation8 + $0x170] sm:$0xff]
        %v1875 = vld [vmem:[#allocation8 + $0x178] sm:$0xff]
        %v1876 = vld [vmem:[#allocation8 + $0x180] sm:$0xff]
        %v1877 = vld [vmem:[#allocation8 + $0x188] sm:$0xff]
        %v1878 = vld [vmem:[#allocation8 + $0x190] sm:$0xff]
        %v1879 = vld [vmem:[#allocation8 + $0x198] sm:$0xff]
        %v1880 = vld [vmem:[#allocation8 + $0x1a0] sm:$0xff]
        %v1881 = vld [vmem:[#allocation8 + $0x1a8] sm:$0xff]
        %v1882 = vld [vmem:[#allocation8 + $0x1b0] sm:$0xff]
        %v1883 = vld [vmem:[#allocation8 + $0x1b8] sm:$0xff]
        %v1884 = vld [vmem:[#allocation8 + $0x1c0] sm:$0xff]
        %v1885 = vld [vmem:[#allocation8 + $0x1c8] sm:$0xff]
        %v1886 = vld [vmem:[#allocation8 + $0x1d0] sm:$0xff]
        %v1887 = vld [vmem:[#allocation8 + $0x1d8] sm:$0xff]
        %v1888 = vld [vmem:[#allocation8 + $0x1e0] sm:$0xff]
        %v1889 = vld [vmem:[#allocation8 + $0x1e8] sm:$0xff]
        %v1890 = vld [vmem:[#allocation8 + $0x1f0] sm:$0xff]
        %v1891 = vld [vmem:[#allocation8 + $0x1f8] sm:$0xff]
        %1892 = vmatprep.subr.mxu0 %v1889
        %1893 = vmatpush1.msra.mxu0 %v1888
        %1894 = vmatprep.subr.mxu0 %v1885
        %1895 = vmatpush1.msra.mxu0 %v1884
        %1896 = vmatprep.subr.mxu0 %v1881
        %1897 = vmatpush1.msra.mxu0 %v1880
        %1898 = vmatprep.subr.mxu0 %v1877
        %1899 = vmatpush1.msra.mxu0 %v1876
        %1900 = vmatprep.subr.mxu0 %v1873
        %1901 = vmatpush1.msra.mxu0 %v1872
        %1902 = vmatprep.subr.mxu0 %v1869
        %1903 = vmatpush1.msra.mxu0 %v1868
        %1904 = vmatprep.subr.mxu0 %v1865
        %1905 = vmatpush1.msra.mxu0 %v1864
        %1906 = vmatprep.subr.mxu0 %v1861
        %1907 = vmatpush1.msra.mxu0 %v1860
        %1908 = vmatprep.subr.mxu0 %v1857
        %1909 = vmatpush1.msra.mxu0 %v1856
        %1910 = vmatprep.subr.mxu0 %v1853
        %1911 = vmatpush1.msra.mxu0 %v1852
        %1912 = vmatprep.subr.mxu0 %v1849
        %1913 = vmatpush1.msra.mxu0 %v1848
        %1914 = vmatprep.subr.mxu0 %v1845
        %1915 = vmatpush1.msra.mxu0 %v1844
        %1916 = vmatprep.subr.mxu0 %v1841
        %1917 = vmatpush1.msra.mxu0 %v1840
        %1918 = vmatprep.subr.mxu0 %v1837
        %1919 = vmatpush1.msra.mxu0 %v1836
        %1920 = vmatprep.subr.mxu0 %v1833
        %1921 = vmatpush1.msra.mxu0 %v1832
        %1922 = vmatprep.subr.mxu0 %v1829
        %1923 = vmatpush1.msra.mxu0 %v1828
        %1924 = vmatprep.subr.mxu0 0.0
        %1925 = vmatpush2.msra.mxu0 0.0
        %1926 = vmatprep.subr.mxu0 0.0
        %1927 = vmatpush2.msra.mxu0 0.0
        %1928 = vmatprep.subr.mxu0 0.0
        %1929 = vmatpush2.msra.mxu0 0.0
        %1930 = vmatprep.subr.mxu0 0.0
        %1931 = vmatpush2.msra.mxu0 0.0
        %1932 = vmatprep.subr.mxu0 0.0
        %1933 = vmatpush2.msra.mxu0 0.0
        %1934 = vmatprep.subr.mxu0 0.0
        %1935 = vmatpush2.msra.mxu0 0.0
        %1936 = vmatprep.subr.mxu0 0.0
        %1937 = vmatpush2.msra.mxu0 0.0
        %1938 = vmatprep.subr.mxu0 0.0
        %1939 = vmatpush2.msra.mxu0 0.0
        %1940 = vmatprep.subr.mxu0 0.0
        %1941 = vmatpush2.msra.mxu0 0.0
        %1942 = vmatprep.subr.mxu0 0.0
        %1943 = vmatpush2.msra.mxu0 0.0
        %1944 = vmatprep.subr.mxu0 0.0
        %1945 = vmatpush2.msra.mxu0 0.0
        %1946 = vmatprep.subr.mxu0 0.0
        %1947 = vmatpush2.msra.mxu0 0.0
        %1948 = vmatprep.subr.mxu0 0.0
        %1949 = vmatpush2.msra.mxu0 0.0
        %1950 = vmatprep.subr.mxu0 0.0
        %1951 = vmatpush2.msra.mxu0 0.0
        %1952 = vmatprep.subr.mxu0 0.0
        %1953 = vmatpush2.msra.mxu0 0.0
        %1954 = vmatprep.subr.mxu0 0.0
        %1955 = vmatpush2.msra.mxu0 0.0
        %1956 = vmatprep.mubr.f32.mxu0 0.0
        %1957 = vmatmul.mubr.f32.gmra.mxu0 %v1380
        %v1958 = vpop.f32.mrf.mxu0
        %v1959 = vadd.f32 0.0, %v1958
        %v1960 = vpop.f32.mrf.mxu0
        %v1961 = vadd.f32 0.0, %v1960
        %1962 = vdwg.mxu0
        %1963 = vmatprep.subr.mxu0 %v1891
        %1964 = vmatpush1.msra.mxu0 %v1890
        %1965 = vmatprep.subr.mxu0 %v1887
        %1966 = vmatpush1.msra.mxu0 %v1886
        %1967 = vmatprep.subr.mxu0 %v1883
        %1968 = vmatpush1.msra.mxu0 %v1882
        %1969 = vmatprep.subr.mxu0 %v1879
        %1970 = vmatpush1.msra.mxu0 %v1878
        %1971 = vmatprep.subr.mxu0 %v1875
        %1972 = vmatpush1.msra.mxu0 %v1874
        %1973 = vmatprep.subr.mxu0 %v1871
        %1974 = vmatpush1.msra.mxu0 %v1870
        %1975 = vmatprep.subr.mxu0 %v1867
        %1976 = vmatpush1.msra.mxu0 %v1866
        %1977 = vmatprep.subr.mxu0 %v1863
        %1978 = vmatpush1.msra.mxu0 %v1862
        %1979 = vmatprep.subr.mxu0 %v1859
        %1980 = vmatpush1.msra.mxu0 %v1858
        %1981 = vmatprep.subr.mxu0 %v1855
        %1982 = vmatpush1.msra.mxu0 %v1854
        %1983 = vmatprep.subr.mxu0 %v1851
        %1984 = vmatpush1.msra.mxu0 %v1850
        %1985 = vmatprep.subr.mxu0 %v1847
        %1986 = vmatpush1.msra.mxu0 %v1846
        %1987 = vmatprep.subr.mxu0 %v1843
        %1988 = vmatpush1.msra.mxu0 %v1842
        %1989 = vmatprep.subr.mxu0 %v1839
        %1990 = vmatpush1.msra.mxu0 %v1838
        %1991 = vmatprep.subr.mxu0 %v1835
        %1992 = vmatpush1.msra.mxu0 %v1834
        %1993 = vmatprep.subr.mxu0 %v1831
        %1994 = vmatpush1.msra.mxu0 %v1830
        %1995 = vmatprep.subr.mxu0 0.0
        %1996 = vmatpush2.msra.mxu0 0.0
        %1997 = vmatprep.subr.mxu0 0.0
        %1998 = vmatpush2.msra.mxu0 0.0
        %1999 = vmatprep.subr.mxu0 0.0
        %2000 = vmatpush2.msra.mxu0 0.0
        %2001 = vmatprep.subr.mxu0 0.0
        %2002 = vmatpush2.msra.mxu0 0.0
        %2003 = vmatprep.subr.mxu0 0.0
        %2004 = vmatpush2.msra.mxu0 0.0
        %2005 = vmatprep.subr.mxu0 0.0
        %2006 = vmatpush2.msra.mxu0 0.0
        %2007 = vmatprep.subr.mxu0 0.0
        %2008 = vmatpush2.msra.mxu0 0.0
        %2009 = vmatprep.subr.mxu0 0.0
        %2010 = vmatpush2.msra.mxu0 0.0
        %2011 = vmatprep.subr.mxu0 0.0
        %2012 = vmatpush2.msra.mxu0 0.0
        %2013 = vmatprep.subr.mxu0 0.0
        %2014 = vmatpush2.msra.mxu0 0.0
        %2015 = vmatprep.subr.mxu0 0.0
        %2016 = vmatpush2.msra.mxu0 0.0
        %2017 = vmatprep.subr.mxu0 0.0
        %2018 = vmatpush2.msra.mxu0 0.0
        %2019 = vmatprep.subr.mxu0 0.0
        %2020 = vmatpush2.msra.mxu0 0.0
        %2021 = vmatprep.subr.mxu0 0.0
        %2022 = vmatpush2.msra.mxu0 0.0
        %2023 = vmatprep.subr.mxu0 0.0
        %2024 = vmatpush2.msra.mxu0 0.0
        %2025 = vmatprep.subr.mxu0 0.0
        %2026 = vmatpush2.msra.mxu0 0.0
        %2027 = vmatprep.mubr.f32.mxu0 0.0
        %2028 = vmatmul.mubr.f32.gmra.mxu0 %v1380
        %v2029 = vpop.f32.mrf.mxu0
        %v2030 = vadd.f32 0.0, %v2029
        %v2031 = vpop.f32.mrf.mxu0
        %v2032 = vadd.f32 0.0, %v2031
        %2033 = vdwg.mxu0
        %v2034 = vadd.f32 %v1824, %v1959
        %v2035 = vadd.f32 %v1825, %v1961
        %v2036 = vadd.f32 %v1826, %v2030
        %v2037 = vadd.f32 %v1827, %v2032
        %v2038 = vxor.u32 %v2034, 2147483648
        %v2039 = vmul.f32 %v2038, 1.442695
        %v2040 = vpow.pop %v2039
        %v2041 = vadd.f32 %v2040, 1.0
        %v2042 = vrcp.pop %v2041
        %v2043 = vmul.f32 1.0, %v2042
        %v2044 = vxor.u32 %v2035, 2147483648
        %v2045 = vmul.f32 %v2044, 1.442695
        %v2046 = vpow.pop %v2045
        %v2047 = vadd.f32 %v2046, 1.0
        %v2048 = vrcp.pop %v2047
        %v2049 = vmul.f32 1.0, %v2048
        %v2050 = vtanh.pop %v2036
        %v2051 = vxor.u32 %v2037, 2147483648
        %v2052 = vmul.f32 %v2051, 1.442695
        %v2053 = vpow.pop %v2052
        %v2054 = vadd.f32 %v2053, 1.0
        %v2055 = vrcp.pop %v2054
        %v2056 = vmul.f32 1.0, %v2055
        %v2057 = vmul.f32 %v2049, %v1378
        %v2058 = vmul.f32 %v2043, %v2050
        %v2059 = vadd.f32 %v2057, %v2058
        %v2060 = vtanh.pop %v2059
        %v2061 = vmul.f32 %v2056, %v2060
        %v2062 = vld [vmem:[#allocation10] sm:$0xff]
        %v2063 = vld [vmem:[#allocation10 + $0x8] sm:$0xff]
        %v2064 = vld [vmem:[#allocation10 + $0x10] sm:$0xff]
        %v2065 = vld [vmem:[#allocation10 + $0x18] sm:$0xff]
        %v2066 = vld [vmem:[#allocation10 + $0x20] sm:$0xff]
        %v2067 = vld [vmem:[#allocation10 + $0x28] sm:$0xff]
        %v2068 = vld [vmem:[#allocation10 + $0x30] sm:$0xff]
        %v2069 = vld [vmem:[#allocation10 + $0x38] sm:$0xff]
        %v2070 = vld [vmem:[#allocation10 + $0x40] sm:$0xff]
        %v2071 = vld [vmem:[#allocation10 + $0x48] sm:$0xff]
        %v2072 = vld [vmem:[#allocation10 + $0x50] sm:$0xff]
        %v2073 = vld [vmem:[#allocation10 + $0x58] sm:$0xff]
        %v2074 = vld [vmem:[#allocation10 + $0x60] sm:$0xff]
        %v2075 = vld [vmem:[#allocation10 + $0x68] sm:$0xff]
        %v2076 = vld [vmem:[#allocation10 + $0x70] sm:$0xff]
        %v2077 = vld [vmem:[#allocation10 + $0x78] sm:$0xff]
        %v2078 = vld [vmem:[#allocation10 + $0x80] sm:$0xff]
        %v2079 = vld [vmem:[#allocation10 + $0x88] sm:$0xff]
        %v2080 = vld [vmem:[#allocation10 + $0x90] sm:$0xff]
        %v2081 = vld [vmem:[#allocation10 + $0x98] sm:$0xff]
        %v2082 = vld [vmem:[#allocation10 + $0xa0] sm:$0xff]
        %v2083 = vld [vmem:[#allocation10 + $0xa8] sm:$0xff]
        %v2084 = vld [vmem:[#allocation10 + $0xb0] sm:$0xff]
        %v2085 = vld [vmem:[#allocation10 + $0xb8] sm:$0xff]
        %v2086 = vld [vmem:[#allocation10 + $0xc0] sm:$0xff]
        %v2087 = vld [vmem:[#allocation10 + $0xc8] sm:$0xff]
        %v2088 = vld [vmem:[#allocation10 + $0xd0] sm:$0xff]
        %v2089 = vld [vmem:[#allocation10 + $0xd8] sm:$0xff]
        %v2090 = vld [vmem:[#allocation10 + $0xe0] sm:$0xff]
        %v2091 = vld [vmem:[#allocation10 + $0xe8] sm:$0xff]
        %v2092 = vld [vmem:[#allocation10 + $0xf0] sm:$0xff]
        %v2093 = vld [vmem:[#allocation10 + $0xf8] sm:$0xff]
        %v2094 = vld [vmem:[#allocation10 + $0x100] sm:$0xff]
        %v2095 = vld [vmem:[#allocation10 + $0x108] sm:$0xff]
        %v2096 = vld [vmem:[#allocation10 + $0x110] sm:$0xff]
        %v2097 = vld [vmem:[#allocation10 + $0x118] sm:$0xff]
        %v2098 = vld [vmem:[#allocation10 + $0x120] sm:$0xff]
        %v2099 = vld [vmem:[#allocation10 + $0x128] sm:$0xff]
        %v2100 = vld [vmem:[#allocation10 + $0x130] sm:$0xff]
        %v2101 = vld [vmem:[#allocation10 + $0x138] sm:$0xff]
        %v2102 = vld [vmem:[#allocation10 + $0x140] sm:$0xff]
        %v2103 = vld [vmem:[#allocation10 + $0x148] sm:$0xff]
        %v2104 = vld [vmem:[#allocation10 + $0x150] sm:$0xff]
        %v2105 = vld [vmem:[#allocation10 + $0x158] sm:$0xff]
        %v2106 = vld [vmem:[#allocation10 + $0x160] sm:$0xff]
        %v2107 = vld [vmem:[#allocation10 + $0x168] sm:$0xff]
        %v2108 = vld [vmem:[#allocation10 + $0x170] sm:$0xff]
        %v2109 = vld [vmem:[#allocation10 + $0x178] sm:$0xff]
        %v2110 = vld [vmem:[#allocation10 + $0x180] sm:$0xff]
        %v2111 = vld [vmem:[#allocation10 + $0x188] sm:$0xff]
        %v2112 = vld [vmem:[#allocation10 + $0x190] sm:$0xff]
        %v2113 = vld [vmem:[#allocation10 + $0x198] sm:$0xff]
        %v2114 = vld [vmem:[#allocation10 + $0x1a0] sm:$0xff]
        %v2115 = vld [vmem:[#allocation10 + $0x1a8] sm:$0xff]
        %v2116 = vld [vmem:[#allocation10 + $0x1b0] sm:$0xff]
        %v2117 = vld [vmem:[#allocation10 + $0x1b8] sm:$0xff]
        %v2118 = vld [vmem:[#allocation10 + $0x1c0] sm:$0xff]
        %v2119 = vld [vmem:[#allocation10 + $0x1c8] sm:$0xff]
        %v2120 = vld [vmem:[#allocation10 + $0x1d0] sm:$0xff]
        %v2121 = vld [vmem:[#allocation10 + $0x1d8] sm:$0xff]
        %v2122 = vld [vmem:[#allocation10 + $0x1e0] sm:$0xff]
        %v2123 = vld [vmem:[#allocation10 + $0x1e8] sm:$0xff]
        %v2124 = vld [vmem:[#allocation10 + $0x1f0] sm:$0xff]
        %v2125 = vld [vmem:[#allocation10 + $0x1f8] sm:$0xff]
        %v2126 = vld [vmem:[#allocation11] sm:$0xff]
        %v2127 = vld [vmem:[#allocation11 + $0x8] sm:$0xff]
        %v2128 = vld [vmem:[#allocation11 + $0x10] sm:$0xff]
        %v2129 = vld [vmem:[#allocation11 + $0x18] sm:$0xff]
        %v2130 = vld [vmem:[#allocation11 + $0x20] sm:$0xff]
        %v2131 = vld [vmem:[#allocation11 + $0x28] sm:$0xff]
        %v2132 = vld [vmem:[#allocation11 + $0x30] sm:$0xff]
        %v2133 = vld [vmem:[#allocation11 + $0x38] sm:$0xff]
        %v2134 = vld [vmem:[#allocation11 + $0x40] sm:$0xff]
        %v2135 = vld [vmem:[#allocation11 + $0x48] sm:$0xff]
        %v2136 = vld [vmem:[#allocation11 + $0x50] sm:$0xff]
        %v2137 = vld [vmem:[#allocation11 + $0x58] sm:$0xff]
        %v2138 = vld [vmem:[#allocation11 + $0x60] sm:$0xff]
        %v2139 = vld [vmem:[#allocation11 + $0x68] sm:$0xff]
        %v2140 = vld [vmem:[#allocation11 + $0x70] sm:$0xff]
        %v2141 = vld [vmem:[#allocation11 + $0x78] sm:$0xff]
        %v2142 = vld [vmem:[#allocation11 + $0x80] sm:$0xff]
        %v2143 = vld [vmem:[#allocation11 + $0x88] sm:$0xff]
        %v2144 = vld [vmem:[#allocation11 + $0x90] sm:$0xff]
        %v2145 = vld [vmem:[#allocation11 + $0x98] sm:$0xff]
        %v2146 = vld [vmem:[#allocation11 + $0xa0] sm:$0xff]
        %v2147 = vld [vmem:[#allocation11 + $0xa8] sm:$0xff]
        %v2148 = vld [vmem:[#allocation11 + $0xb0] sm:$0xff]
        %v2149 = vld [vmem:[#allocation11 + $0xb8] sm:$0xff]
        %v2150 = vld [vmem:[#allocation11 + $0xc0] sm:$0xff]
        %v2151 = vld [vmem:[#allocation11 + $0xc8] sm:$0xff]
        %v2152 = vld [vmem:[#allocation11 + $0xd0] sm:$0xff]
        %v2153 = vld [vmem:[#allocation11 + $0xd8] sm:$0xff]
        %v2154 = vld [vmem:[#allocation11 + $0xe0] sm:$0xff]
        %v2155 = vld [vmem:[#allocation11 + $0xe8] sm:$0xff]
        %v2156 = vld [vmem:[#allocation11 + $0xf0] sm:$0xff]
        %v2157 = vld [vmem:[#allocation11 + $0xf8] sm:$0xff]
        %v2158 = vld [vmem:[#allocation11 + $0x100] sm:$0xff]
        %v2159 = vld [vmem:[#allocation11 + $0x108] sm:$0xff]
        %v2160 = vld [vmem:[#allocation11 + $0x110] sm:$0xff]
        %v2161 = vld [vmem:[#allocation11 + $0x118] sm:$0xff]
        %v2162 = vld [vmem:[#allocation11 + $0x120] sm:$0xff]
        %v2163 = vld [vmem:[#allocation11 + $0x128] sm:$0xff]
        %v2164 = vld [vmem:[#allocation11 + $0x130] sm:$0xff]
        %v2165 = vld [vmem:[#allocation11 + $0x138] sm:$0xff]
        %v2166 = vld [vmem:[#allocation11 + $0x140] sm:$0xff]
        %v2167 = vld [vmem:[#allocation11 + $0x148] sm:$0xff]
        %v2168 = vld [vmem:[#allocation11 + $0x150] sm:$0xff]
        %v2169 = vld [vmem:[#allocation11 + $0x158] sm:$0xff]
        %v2170 = vld [vmem:[#allocation11 + $0x160] sm:$0xff]
        %v2171 = vld [vmem:[#allocation11 + $0x168] sm:$0xff]
        %v2172 = vld [vmem:[#allocation11 + $0x170] sm:$0xff]
        %v2173 = vld [vmem:[#allocation11 + $0x178] sm:$0xff]
        %v2174 = vld [vmem:[#allocation11 + $0x180] sm:$0xff]
        %v2175 = vld [vmem:[#allocation11 + $0x188] sm:$0xff]
        %v2176 = vld [vmem:[#allocation11 + $0x190] sm:$0xff]
        %v2177 = vld [vmem:[#allocation11 + $0x198] sm:$0xff]
        %v2178 = vld [vmem:[#allocation11 + $0x1a0] sm:$0xff]
        %v2179 = vld [vmem:[#allocation11 + $0x1a8] sm:$0xff]
        %v2180 = vld [vmem:[#allocation11 + $0x1b0] sm:$0xff]
        %v2181 = vld [vmem:[#allocation11 + $0x1b8] sm:$0xff]
        %v2182 = vld [vmem:[#allocation11 + $0x1c0] sm:$0xff]
        %v2183 = vld [vmem:[#allocation11 + $0x1c8] sm:$0xff]
        %v2184 = vld [vmem:[#allocation11 + $0x1d0] sm:$0xff]
        %v2185 = vld [vmem:[#allocation11 + $0x1d8] sm:$0xff]
        %v2186 = vld [vmem:[#allocation11 + $0x1e0] sm:$0xff]
        %v2187 = vld [vmem:[#allocation11 + $0x1e8] sm:$0xff]
        %v2188 = vld [vmem:[#allocation11 + $0x1f0] sm:$0xff]
        %v2189 = vld [vmem:[#allocation11 + $0x1f8] sm:$0xff]
        %2190 = vmatprep.subr.mxu0 %v2187
        %2191 = vmatpush1.msra.mxu0 %v2186
        %2192 = vmatprep.subr.mxu0 %v2183
        %2193 = vmatpush1.msra.mxu0 %v2182
        %2194 = vmatprep.subr.mxu0 %v2179
        %2195 = vmatpush1.msra.mxu0 %v2178
        %2196 = vmatprep.subr.mxu0 %v2175
        %2197 = vmatpush1.msra.mxu0 %v2174
        %2198 = vmatprep.subr.mxu0 %v2171
        %2199 = vmatpush1.msra.mxu0 %v2170
        %2200 = vmatprep.subr.mxu0 %v2167
        %2201 = vmatpush1.msra.mxu0 %v2166
        %2202 = vmatprep.subr.mxu0 %v2163
        %2203 = vmatpush1.msra.mxu0 %v2162
        %2204 = vmatprep.subr.mxu0 %v2159
        %2205 = vmatpush1.msra.mxu0 %v2158
        %2206 = vmatprep.subr.mxu0 %v2155
        %2207 = vmatpush1.msra.mxu0 %v2154
        %2208 = vmatprep.subr.mxu0 %v2151
        %2209 = vmatpush1.msra.mxu0 %v2150
        %2210 = vmatprep.subr.mxu0 %v2147
        %2211 = vmatpush1.msra.mxu0 %v2146
        %2212 = vmatprep.subr.mxu0 %v2143
        %2213 = vmatpush1.msra.mxu0 %v2142
        %2214 = vmatprep.subr.mxu0 %v2139
        %2215 = vmatpush1.msra.mxu0 %v2138
        %2216 = vmatprep.subr.mxu0 %v2135
        %2217 = vmatpush1.msra.mxu0 %v2134
        %2218 = vmatprep.subr.mxu0 %v2131
        %2219 = vmatpush1.msra.mxu0 %v2130
        %2220 = vmatprep.subr.mxu0 %v2127
        %2221 = vmatpush1.msra.mxu0 %v2126
        %2222 = vmatprep.subr.mxu0 0.0
        %2223 = vmatpush2.msra.mxu0 0.0
        %2224 = vmatprep.subr.mxu0 0.0
        %2225 = vmatpush2.msra.mxu0 0.0
        %2226 = vmatprep.subr.mxu0 0.0
        %2227 = vmatpush2.msra.mxu0 0.0
        %2228 = vmatprep.subr.mxu0 0.0
        %2229 = vmatpush2.msra.mxu0 0.0
        %2230 = vmatprep.subr.mxu0 0.0
        %2231 = vmatpush2.msra.mxu0 0.0
        %2232 = vmatprep.subr.mxu0 0.0
        %2233 = vmatpush2.msra.mxu0 0.0
        %2234 = vmatprep.subr.mxu0 0.0
        %2235 = vmatpush2.msra.mxu0 0.0
        %2236 = vmatprep.subr.mxu0 0.0
        %2237 = vmatpush2.msra.mxu0 0.0
        %2238 = vmatprep.subr.mxu0 0.0
        %2239 = vmatpush2.msra.mxu0 0.0
        %2240 = vmatprep.subr.mxu0 0.0
        %2241 = vmatpush2.msra.mxu0 0.0
        %2242 = vmatprep.subr.mxu0 0.0
        %2243 = vmatpush2.msra.mxu0 0.0
        %2244 = vmatprep.subr.mxu0 0.0
        %2245 = vmatpush2.msra.mxu0 0.0
        %2246 = vmatprep.subr.mxu0 0.0
        %2247 = vmatpush2.msra.mxu0 0.0
        %2248 = vmatprep.subr.mxu0 0.0
        %2249 = vmatpush2.msra.mxu0 0.0
        %2250 = vmatprep.subr.mxu0 0.0
        %2251 = vmatpush2.msra.mxu0 0.0
        %2252 = vmatprep.subr.mxu0 0.0
        %2253 = vmatpush2.msra.mxu0 0.0
        %2254 = vmatprep.mubr.f32.mxu0 0.0
        %2255 = vmatmul.mubr.f32.gmra.mxu0 %v1820
        %v2256 = vpop.f32.mrf.mxu0
        %v2257 = vadd.f32 0.0, %v2256
        %v2258 = vpop.f32.mrf.mxu0
        %v2259 = vadd.f32 0.0, %v2258
        %2260 = vdwg.mxu0
        %2261 = vmatprep.subr.mxu0 %v2189
        %2262 = vmatpush1.msra.mxu0 %v2188
        %2263 = vmatprep.subr.mxu0 %v2185
        %2264 = vmatpush1.msra.mxu0 %v2184
        %2265 = vmatprep.subr.mxu0 %v2181
        %2266 = vmatpush1.msra.mxu0 %v2180
        %2267 = vmatprep.subr.mxu0 %v2177
        %2268 = vmatpush1.msra.mxu0 %v2176
        %2269 = vmatprep.subr.mxu0 %v2173
        %2270 = vmatpush1.msra.mxu0 %v2172
        %2271 = vmatprep.subr.mxu0 %v2169
        %2272 = vmatpush1.msra.mxu0 %v2168
        %2273 = vmatprep.subr.mxu0 %v2165
        %2274 = vmatpush1.msra.mxu0 %v2164
        %2275 = vmatprep.subr.mxu0 %v2161
        %2276 = vmatpush1.msra.mxu0 %v2160
        %2277 = vmatprep.subr.mxu0 %v2157
        %2278 = vmatpush1.msra.mxu0 %v2156
        %2279 = vmatprep.subr.mxu0 %v2153
        %2280 = vmatpush1.msra.mxu0 %v2152
        %2281 = vmatprep.subr.mxu0 %v2149
        %2282 = vmatpush1.msra.mxu0 %v2148
        %2283 = vmatprep.subr.mxu0 %v2145
        %2284 = vmatpush1.msra.mxu0 %v2144
        %2285 = vmatprep.subr.mxu0 %v2141
        %2286 = vmatpush1.msra.mxu0 %v2140
        %2287 = vmatprep.subr.mxu0 %v2137
        %2288 = vmatpush1.msra.mxu0 %v2136
        %2289 = vmatprep.subr.mxu0 %v2133
        %2290 = vmatpush1.msra.mxu0 %v2132
        %2291 = vmatprep.subr.mxu0 %v2129
        %2292 = vmatpush1.msra.mxu0 %v2128
        %2293 = vmatprep.subr.mxu0 0.0
        %2294 = vmatpush2.msra.mxu0 0.0
        %2295 = vmatprep.subr.mxu0 0.0
        %2296 = vmatpush2.msra.mxu0 0.0
        %2297 = vmatprep.subr.mxu0 0.0
        %2298 = vmatpush2.msra.mxu0 0.0
        %2299 = vmatprep.subr.mxu0 0.0
        %2300 = vmatpush2.msra.mxu0 0.0
        %2301 = vmatprep.subr.mxu0 0.0
        %2302 = vmatpush2.msra.mxu0 0.0
        %2303 = vmatprep.subr.mxu0 0.0
        %2304 = vmatpush2.msra.mxu0 0.0
        %2305 = vmatprep.subr.mxu0 0.0
        %2306 = vmatpush2.msra.mxu0 0.0
        %2307 = vmatprep.subr.mxu0 0.0
        %2308 = vmatpush2.msra.mxu0 0.0
        %2309 = vmatprep.subr.mxu0 0.0
        %2310 = vmatpush2.msra.mxu0 0.0
        %2311 = vmatprep.subr.mxu0 0.0
        %2312 = vmatpush2.msra.mxu0 0.0
        %2313 = vmatprep.subr.mxu0 0.0
        %2314 = vmatpush2.msra.mxu0 0.0
        %2315 = vmatprep.subr.mxu0 0.0
        %2316 = vmatpush2.msra.mxu0 0.0
        %2317 = vmatprep.subr.mxu0 0.0
        %2318 = vmatpush2.msra.mxu0 0.0
        %2319 = vmatprep.subr.mxu0 0.0
        %2320 = vmatpush2.msra.mxu0 0.0
        %2321 = vmatprep.subr.mxu0 0.0
        %2322 = vmatpush2.msra.mxu0 0.0
        %2323 = vmatprep.subr.mxu0 0.0
        %2324 = vmatpush2.msra.mxu0 0.0
        %2325 = vmatprep.mubr.f32.mxu0 0.0
        %2326 = vmatmul.mubr.f32.gmra.mxu0 %v1820
        %v2327 = vpop.f32.mrf.mxu0
        %v2328 = vadd.f32 0.0, %v2327
        %v2329 = vpop.f32.mrf.mxu0
        %v2330 = vadd.f32 0.0, %v2329
        %2331 = vdwg.mxu0
        %2332 = vmatprep.subr.mxu0 %v2123
        %2333 = vmatpush1.msra.mxu0 %v2122
        %2334 = vmatprep.subr.mxu0 %v2119
        %2335 = vmatpush1.msra.mxu0 %v2118
        %2336 = vmatprep.subr.mxu0 %v2115
        %2337 = vmatpush1.msra.mxu0 %v2114
        %2338 = vmatprep.subr.mxu0 %v2111
        %2339 = vmatpush1.msra.mxu0 %v2110
        %2340 = vmatprep.subr.mxu0 %v2107
        %2341 = vmatpush1.msra.mxu0 %v2106
        %2342 = vmatprep.subr.mxu0 %v2103
        %2343 = vmatpush1.msra.mxu0 %v2102
        %2344 = vmatprep.subr.mxu0 %v2099
        %2345 = vmatpush1.msra.mxu0 %v2098
        %2346 = vmatprep.subr.mxu0 %v2095
        %2347 = vmatpush1.msra.mxu0 %v2094
        %2348 = vmatprep.subr.mxu0 %v2091
        %2349 = vmatpush1.msra.mxu0 %v2090
        %2350 = vmatprep.subr.mxu0 %v2087
        %2351 = vmatpush1.msra.mxu0 %v2086
        %2352 = vmatprep.subr.mxu0 %v2083
        %2353 = vmatpush1.msra.mxu0 %v2082
        %2354 = vmatprep.subr.mxu0 %v2079
        %2355 = vmatpush1.msra.mxu0 %v2078
        %2356 = vmatprep.subr.mxu0 %v2075
        %2357 = vmatpush1.msra.mxu0 %v2074
        %2358 = vmatprep.subr.mxu0 %v2071
        %2359 = vmatpush1.msra.mxu0 %v2070
        %2360 = vmatprep.subr.mxu0 %v2067
        %2361 = vmatpush1.msra.mxu0 %v2066
        %2362 = vmatprep.subr.mxu0 %v2063
        %2363 = vmatpush1.msra.mxu0 %v2062
        %2364 = vmatprep.subr.mxu0 0.0
        %2365 = vmatpush2.msra.mxu0 0.0
        %2366 = vmatprep.subr.mxu0 0.0
        %2367 = vmatpush2.msra.mxu0 0.0
        %2368 = vmatprep.subr.mxu0 0.0
        %2369 = vmatpush2.msra.mxu0 0.0
        %2370 = vmatprep.subr.mxu0 0.0
        %2371 = vmatpush2.msra.mxu0 0.0
        %2372 = vmatprep.subr.mxu0 0.0
        %2373 = vmatpush2.msra.mxu0 0.0
        %2374 = vmatprep.subr.mxu0 0.0
        %2375 = vmatpush2.msra.mxu0 0.0
        %2376 = vmatprep.subr.mxu0 0.0
        %2377 = vmatpush2.msra.mxu0 0.0
        %2378 = vmatprep.subr.mxu0 0.0
        %2379 = vmatpush2.msra.mxu0 0.0
        %2380 = vmatprep.subr.mxu0 0.0
        %2381 = vmatpush2.msra.mxu0 0.0
        %2382 = vmatprep.subr.mxu0 0.0
        %2383 = vmatpush2.msra.mxu0 0.0
        %2384 = vmatprep.subr.mxu0 0.0
        %2385 = vmatpush2.msra.mxu0 0.0
        %2386 = vmatprep.subr.mxu0 0.0
        %2387 = vmatpush2.msra.mxu0 0.0
        %2388 = vmatprep.subr.mxu0 0.0
        %2389 = vmatpush2.msra.mxu0 0.0
        %2390 = vmatprep.subr.mxu0 0.0
        %2391 = vmatpush2.msra.mxu0 0.0
        %2392 = vmatprep.subr.mxu0 0.0
        %2393 = vmatpush2.msra.mxu0 0.0
        %2394 = vmatprep.subr.mxu0 0.0
        %2395 = vmatpush2.msra.mxu0 0.0
        %2396 = vmatprep.mubr.f32.mxu0 0.0
        %2397 = vmatmul.mubr.f32.gmra.mxu0 %v2061
        %v2398 = vpop.f32.mrf.mxu0
        %v2399 = vadd.f32 %v2257, %v2398
        %v2400 = vpop.f32.mrf.mxu0
        %v2401 = vadd.f32 %v2259, %v2400
        %2402 = vdwg.mxu0
        %2403 = vmatprep.subr.mxu0 %v2125
        %2404 = vmatpush1.msra.mxu0 %v2124
        %2405 = vmatprep.subr.mxu0 %v2121
        %2406 = vmatpush1.msra.mxu0 %v2120
        %2407 = vmatprep.subr.mxu0 %v2117
        %2408 = vmatpush1.msra.mxu0 %v2116
        %2409 = vmatprep.subr.mxu0 %v2113
        %2410 = vmatpush1.msra.mxu0 %v2112
        %2411 = vmatprep.subr.mxu0 %v2109
        %2412 = vmatpush1.msra.mxu0 %v2108
        %2413 = vmatprep.subr.mxu0 %v2105
        %2414 = vmatpush1.msra.mxu0 %v2104
        %2415 = vmatprep.subr.mxu0 %v2101
        %2416 = vmatpush1.msra.mxu0 %v2100
        %2417 = vmatprep.subr.mxu0 %v2097
        %2418 = vmatpush1.msra.mxu0 %v2096
        %2419 = vmatprep.subr.mxu0 %v2093
        %2420 = vmatpush1.msra.mxu0 %v2092
        %2421 = vmatprep.subr.mxu0 %v2089
        %2422 = vmatpush1.msra.mxu0 %v2088
        %2423 = vmatprep.subr.mxu0 %v2085
        %2424 = vmatpush1.msra.mxu0 %v2084
        %2425 = vmatprep.subr.mxu0 %v2081
        %2426 = vmatpush1.msra.mxu0 %v2080
        %2427 = vmatprep.subr.mxu0 %v2077
        %2428 = vmatpush1.msra.mxu0 %v2076
        %2429 = vmatprep.subr.mxu0 %v2073
        %2430 = vmatpush1.msra.mxu0 %v2072
        %2431 = vmatprep.subr.mxu0 %v2069
        %2432 = vmatpush1.msra.mxu0 %v2068
        %2433 = vmatprep.subr.mxu0 %v2065
        %2434 = vmatpush1.msra.mxu0 %v2064
        %2435 = vmatprep.subr.mxu0 0.0
        %2436 = vmatpush2.msra.mxu0 0.0
        %2437 = vmatprep.subr.mxu0 0.0
        %2438 = vmatpush2.msra.mxu0 0.0
        %2439 = vmatprep.subr.mxu0 0.0
        %2440 = vmatpush2.msra.mxu0 0.0
        %2441 = vmatprep.subr.mxu0 0.0
        %2442 = vmatpush2.msra.mxu0 0.0
        %2443 = vmatprep.subr.mxu0 0.0
        %2444 = vmatpush2.msra.mxu0 0.0
        %2445 = vmatprep.subr.mxu0 0.0
        %2446 = vmatpush2.msra.mxu0 0.0
        %2447 = vmatprep.subr.mxu0 0.0
        %2448 = vmatpush2.msra.mxu0 0.0
        %2449 = vmatprep.subr.mxu0 0.0
        %2450 = vmatpush2.msra.mxu0 0.0
        %2451 = vmatprep.subr.mxu0 0.0
        %2452 = vmatpush2.msra.mxu0 0.0
        %2453 = vmatprep.subr.mxu0 0.0
        %2454 = vmatpush2.msra.mxu0 0.0
        %2455 = vmatprep.subr.mxu0 0.0
        %2456 = vmatpush2.msra.mxu0 0.0
        %2457 = vmatprep.subr.mxu0 0.0
        %2458 = vmatpush2.msra.mxu0 0.0
        %2459 = vmatprep.subr.mxu0 0.0
        %2460 = vmatpush2.msra.mxu0 0.0
        %2461 = vmatprep.subr.mxu0 0.0
        %2462 = vmatpush2.msra.mxu0 0.0
        %2463 = vmatprep.subr.mxu0 0.0
        %2464 = vmatpush2.msra.mxu0 0.0
        %2465 = vmatprep.subr.mxu0 0.0
        %2466 = vmatpush2.msra.mxu0 0.0
        %2467 = vmatprep.mubr.f32.mxu0 0.0
        %2468 = vmatmul.mubr.f32.gmra.mxu0 %v2061
        %v2469 = vpop.f32.mrf.mxu0
        %v2470 = vadd.f32 %v2328, %v2469
        %v2471 = vpop.f32.mrf.mxu0
        %v2472 = vadd.f32 %v2330, %v2471
        %2473 = vdwg.mxu0
        %v2474 = vadd.f32 %v2399, %v446
        %v2475 = vadd.f32 %v2401, %v450
        %v2476 = vadd.f32 %v2470, %v454
        %v2477 = vadd.f32 %v2472, %v458
        %v2478 = vxor.u32 %v2474, 2147483648
        %v2479 = vmul.f32 %v2478, 1.442695
        %v2480 = vpow.pop %v2479
        %v2481 = vadd.f32 %v2480, 1.0
        %v2482 = vrcp.pop %v2481
        %v2483 = vmul.f32 1.0, %v2482
        %v2484 = vxor.u32 %v2475, 2147483648
        %v2485 = vmul.f32 %v2484, 1.442695
        %v2486 = vpow.pop %v2485
        %v2487 = vadd.f32 %v2486, 1.0
        %v2488 = vrcp.pop %v2487
        %v2489 = vmul.f32 1.0, %v2488
        %v2490 = vtanh.pop %v2476
        %v2491 = vxor.u32 %v2477, 2147483648
        %v2492 = vmul.f32 %v2491, 1.442695
        %v2493 = vpow.pop %v2492
        %v2494 = vadd.f32 %v2493, 1.0
        %v2495 = vrcp.pop %v2494
        %v2496 = vmul.f32 1.0, %v2495
        %v2497 = vmul.f32 %v2489, %v1818
        %v2498 = vmul.f32 %v2483, %v2490
        %v2499 = vadd.f32 %v2497, %v2498
        %v2500 = vtanh.pop %v2499
        %v2501 = vmul.f32 %v2496, %v2500
        %s2502 = scalar_lea.vmem %s416, 16 [#allocation13]
        %2503 = vst [vmem:[%s2502] sm:$0xff] %v2501
        %s2504 = scalar_lea.vmem %s366, 96 [#allocation2]
        %v2505 = vld [vmem:[%s2504] sm:$0xff]
        %v2506 = vld [vmem:[%s2504 + $0x8] sm:$0xff]
        %v2507 = vld [vmem:[%s2504 + $0x10] sm:$0xff]
        %v2508 = vld [vmem:[%s2504 + $0x18] sm:$0xff]
        %v2509 = vld [vmem:[#allocation8] sm:$0xff]
        %v2510 = vld [vmem:[#allocation8 + $0x8] sm:$0xff]
        %v2511 = vld [vmem:[#allocation8 + $0x10] sm:$0xff]
        %v2512 = vld [vmem:[#allocation8 + $0x18] sm:$0xff]
        %v2513 = vld [vmem:[#allocation8 + $0x20] sm:$0xff]
        %v2514 = vld [vmem:[#allocation8 + $0x28] sm:$0xff]
        %v2515 = vld [vmem:[#allocation8 + $0x30] sm:$0xff]
        %v2516 = vld [vmem:[#allocation8 + $0x38] sm:$0xff]
        %v2517 = vld [vmem:[#allocation8 + $0x40] sm:$0xff]
        %v2518 = vld [vmem:[#allocation8 + $0x48] sm:$0xff]
        %v2519 = vld [vmem:[#allocation8 + $0x50] sm:$0xff]
        %v2520 = vld [vmem:[#allocation8 + $0x58] sm:$0xff]
        %v2521 = vld [vmem:[#allocation8 + $0x60] sm:$0xff]
        %v2522 = vld [vmem:[#allocation8 + $0x68] sm:$0xff]
        %v2523 = vld [vmem:[#allocation8 + $0x70] sm:$0xff]
        %v2524 = vld [vmem:[#allocation8 + $0x78] sm:$0xff]
        %v2525 = vld [vmem:[#allocation8 + $0x80] sm:$0xff]
        %v2526 = vld [vmem:[#allocation8 + $0x88] sm:$0xff]
        %v2527 = vld [vmem:[#allocation8 + $0x90] sm:$0xff]
        %v2528 = vld [vmem:[#allocation8 + $0x98] sm:$0xff]
        %v2529 = vld [vmem:[#allocation8 + $0xa0] sm:$0xff]
        %v2530 = vld [vmem:[#allocation8 + $0xa8] sm:$0xff]
        %v2531 = vld [vmem:[#allocation8 + $0xb0] sm:$0xff]
        %v2532 = vld [vmem:[#allocation8 + $0xb8] sm:$0xff]
        %v2533 = vld [vmem:[#allocation8 + $0xc0] sm:$0xff]
        %v2534 = vld [vmem:[#allocation8 + $0xc8] sm:$0xff]
        %v2535 = vld [vmem:[#allocation8 + $0xd0] sm:$0xff]
        %v2536 = vld [vmem:[#allocation8 + $0xd8] sm:$0xff]
        %v2537 = vld [vmem:[#allocation8 + $0xe0] sm:$0xff]
        %v2538 = vld [vmem:[#allocation8 + $0xe8] sm:$0xff]
        %v2539 = vld [vmem:[#allocation8 + $0xf0] sm:$0xff]
        %v2540 = vld [vmem:[#allocation8 + $0xf8] sm:$0xff]
        %v2541 = vld [vmem:[#allocation8 + $0x100] sm:$0xff]
        %v2542 = vld [vmem:[#allocation8 + $0x108] sm:$0xff]
        %v2543 = vld [vmem:[#allocation8 + $0x110] sm:$0xff]
        %v2544 = vld [vmem:[#allocation8 + $0x118] sm:$0xff]
        %v2545 = vld [vmem:[#allocation8 + $0x120] sm:$0xff]
        %v2546 = vld [vmem:[#allocation8 + $0x128] sm:$0xff]
        %v2547 = vld [vmem:[#allocation8 + $0x130] sm:$0xff]
        %v2548 = vld [vmem:[#allocation8 + $0x138] sm:$0xff]
        %v2549 = vld [vmem:[#allocation8 + $0x140] sm:$0xff]
        %v2550 = vld [vmem:[#allocation8 + $0x148] sm:$0xff]
        %v2551 = vld [vmem:[#allocation8 + $0x150] sm:$0xff]
        %v2552 = vld [vmem:[#allocation8 + $0x158] sm:$0xff]
        %v2553 = vld [vmem:[#allocation8 + $0x160] sm:$0xff]
        %v2554 = vld [vmem:[#allocation8 + $0x168] sm:$0xff]
        %v2555 = vld [vmem:[#allocation8 + $0x170] sm:$0xff]
        %v2556 = vld [vmem:[#allocation8 + $0x178] sm:$0xff]
        %v2557 = vld [vmem:[#allocation8 + $0x180] sm:$0xff]
        %v2558 = vld [vmem:[#allocation8 + $0x188] sm:$0xff]
        %v2559 = vld [vmem:[#allocation8 + $0x190] sm:$0xff]
        %v2560 = vld [vmem:[#allocation8 + $0x198] sm:$0xff]
        %v2561 = vld [vmem:[#allocation8 + $0x1a0] sm:$0xff]
        %v2562 = vld [vmem:[#allocation8 + $0x1a8] sm:$0xff]
        %v2563 = vld [vmem:[#allocation8 + $0x1b0] sm:$0xff]
        %v2564 = vld [vmem:[#allocation8 + $0x1b8] sm:$0xff]
        %v2565 = vld [vmem:[#allocation8 + $0x1c0] sm:$0xff]
        %v2566 = vld [vmem:[#allocation8 + $0x1c8] sm:$0xff]
        %v2567 = vld [vmem:[#allocation8 + $0x1d0] sm:$0xff]
        %v2568 = vld [vmem:[#allocation8 + $0x1d8] sm:$0xff]
        %v2569 = vld [vmem:[#allocation8 + $0x1e0] sm:$0xff]
        %v2570 = vld [vmem:[#allocation8 + $0x1e8] sm:$0xff]
        %v2571 = vld [vmem:[#allocation8 + $0x1f0] sm:$0xff]
        %v2572 = vld [vmem:[#allocation8 + $0x1f8] sm:$0xff]
        %2573 = vmatprep.subr.mxu0 %v2570
        %2574 = vmatpush1.msra.mxu0 %v2569
        %2575 = vmatprep.subr.mxu0 %v2566
        %2576 = vmatpush1.msra.mxu0 %v2565
        %2577 = vmatprep.subr.mxu0 %v2562
        %2578 = vmatpush1.msra.mxu0 %v2561
        %2579 = vmatprep.subr.mxu0 %v2558
        %2580 = vmatpush1.msra.mxu0 %v2557
        %2581 = vmatprep.subr.mxu0 %v2554
        %2582 = vmatpush1.msra.mxu0 %v2553
        %2583 = vmatprep.subr.mxu0 %v2550
        %2584 = vmatpush1.msra.mxu0 %v2549
        %2585 = vmatprep.subr.mxu0 %v2546
        %2586 = vmatpush1.msra.mxu0 %v2545
        %2587 = vmatprep.subr.mxu0 %v2542
        %2588 = vmatpush1.msra.mxu0 %v2541
        %2589 = vmatprep.subr.mxu0 %v2538
        %2590 = vmatpush1.msra.mxu0 %v2537
        %2591 = vmatprep.subr.mxu0 %v2534
        %2592 = vmatpush1.msra.mxu0 %v2533
        %2593 = vmatprep.subr.mxu0 %v2530
        %2594 = vmatpush1.msra.mxu0 %v2529
        %2595 = vmatprep.subr.mxu0 %v2526
        %2596 = vmatpush1.msra.mxu0 %v2525
        %2597 = vmatprep.subr.mxu0 %v2522
        %2598 = vmatpush1.msra.mxu0 %v2521
        %2599 = vmatprep.subr.mxu0 %v2518
        %2600 = vmatpush1.msra.mxu0 %v2517
        %2601 = vmatprep.subr.mxu0 %v2514
        %2602 = vmatpush1.msra.mxu0 %v2513
        %2603 = vmatprep.subr.mxu0 %v2510
        %2604 = vmatpush1.msra.mxu0 %v2509
        %2605 = vmatprep.subr.mxu0 0.0
        %2606 = vmatpush2.msra.mxu0 0.0
        %2607 = vmatprep.subr.mxu0 0.0
        %2608 = vmatpush2.msra.mxu0 0.0
        %2609 = vmatprep.subr.mxu0 0.0
        %2610 = vmatpush2.msra.mxu0 0.0
        %2611 = vmatprep.subr.mxu0 0.0
        %2612 = vmatpush2.msra.mxu0 0.0
        %2613 = vmatprep.subr.mxu0 0.0
        %2614 = vmatpush2.msra.mxu0 0.0
        %2615 = vmatprep.subr.mxu0 0.0
        %2616 = vmatpush2.msra.mxu0 0.0
        %2617 = vmatprep.subr.mxu0 0.0
        %2618 = vmatpush2.msra.mxu0 0.0
        %2619 = vmatprep.subr.mxu0 0.0
        %2620 = vmatpush2.msra.mxu0 0.0
        %2621 = vmatprep.subr.mxu0 0.0
        %2622 = vmatpush2.msra.mxu0 0.0
        %2623 = vmatprep.subr.mxu0 0.0
        %2624 = vmatpush2.msra.mxu0 0.0
        %2625 = vmatprep.subr.mxu0 0.0
        %2626 = vmatpush2.msra.mxu0 0.0
        %2627 = vmatprep.subr.mxu0 0.0
        %2628 = vmatpush2.msra.mxu0 0.0
        %2629 = vmatprep.subr.mxu0 0.0
        %2630 = vmatpush2.msra.mxu0 0.0
        %2631 = vmatprep.subr.mxu0 0.0
        %2632 = vmatpush2.msra.mxu0 0.0
        %2633 = vmatprep.subr.mxu0 0.0
        %2634 = vmatpush2.msra.mxu0 0.0
        %2635 = vmatprep.subr.mxu0 0.0
        %2636 = vmatpush2.msra.mxu0 0.0
        %2637 = vmatprep.mubr.f32.mxu0 0.0
        %2638 = vmatmul.mubr.f32.gmra.mxu0 %v2061
        %v2639 = vpop.f32.mrf.mxu0
        %v2640 = vadd.f32 0.0, %v2639
        %v2641 = vpop.f32.mrf.mxu0
        %v2642 = vadd.f32 0.0, %v2641
        %2643 = vdwg.mxu0
        %2644 = vmatprep.subr.mxu0 %v2572
        %2645 = vmatpush1.msra.mxu0 %v2571
        %2646 = vmatprep.subr.mxu0 %v2568
        %2647 = vmatpush1.msra.mxu0 %v2567
        %2648 = vmatprep.subr.mxu0 %v2564
        %2649 = vmatpush1.msra.mxu0 %v2563
        %2650 = vmatprep.subr.mxu0 %v2560
        %2651 = vmatpush1.msra.mxu0 %v2559
        %2652 = vmatprep.subr.mxu0 %v2556
        %2653 = vmatpush1.msra.mxu0 %v2555
        %2654 = vmatprep.subr.mxu0 %v2552
        %2655 = vmatpush1.msra.mxu0 %v2551
        %2656 = vmatprep.subr.mxu0 %v2548
        %2657 = vmatpush1.msra.mxu0 %v2547
        %2658 = vmatprep.subr.mxu0 %v2544
        %2659 = vmatpush1.msra.mxu0 %v2543
        %2660 = vmatprep.subr.mxu0 %v2540
        %2661 = vmatpush1.msra.mxu0 %v2539
        %2662 = vmatprep.subr.mxu0 %v2536
        %2663 = vmatpush1.msra.mxu0 %v2535
        %2664 = vmatprep.subr.mxu0 %v2532
        %2665 = vmatpush1.msra.mxu0 %v2531
        %2666 = vmatprep.subr.mxu0 %v2528
        %2667 = vmatpush1.msra.mxu0 %v2527
        %2668 = vmatprep.subr.mxu0 %v2524
        %2669 = vmatpush1.msra.mxu0 %v2523
        %2670 = vmatprep.subr.mxu0 %v2520
        %2671 = vmatpush1.msra.mxu0 %v2519
        %2672 = vmatprep.subr.mxu0 %v2516
        %2673 = vmatpush1.msra.mxu0 %v2515
        %2674 = vmatprep.subr.mxu0 %v2512
        %2675 = vmatpush1.msra.mxu0 %v2511
        %2676 = vmatprep.subr.mxu0 0.0
        %2677 = vmatpush2.msra.mxu0 0.0
        %2678 = vmatprep.subr.mxu0 0.0
        %2679 = vmatpush2.msra.mxu0 0.0
        %2680 = vmatprep.subr.mxu0 0.0
        %2681 = vmatpush2.msra.mxu0 0.0
        %2682 = vmatprep.subr.mxu0 0.0
        %2683 = vmatpush2.msra.mxu0 0.0
        %2684 = vmatprep.subr.mxu0 0.0
        %2685 = vmatpush2.msra.mxu0 0.0
        %2686 = vmatprep.subr.mxu0 0.0
        %2687 = vmatpush2.msra.mxu0 0.0
        %2688 = vmatprep.subr.mxu0 0.0
        %2689 = vmatpush2.msra.mxu0 0.0
        %2690 = vmatprep.subr.mxu0 0.0
        %2691 = vmatpush2.msra.mxu0 0.0
        %2692 = vmatprep.subr.mxu0 0.0
        %2693 = vmatpush2.msra.mxu0 0.0
        %2694 = vmatprep.subr.mxu0 0.0
        %2695 = vmatpush2.msra.mxu0 0.0
        %2696 = vmatprep.subr.mxu0 0.0
        %2697 = vmatpush2.msra.mxu0 0.0
        %2698 = vmatprep.subr.mxu0 0.0
        %2699 = vmatpush2.msra.mxu0 0.0
        %2700 = vmatprep.subr.mxu0 0.0
        %2701 = vmatpush2.msra.mxu0 0.0
        %2702 = vmatprep.subr.mxu0 0.0
        %2703 = vmatpush2.msra.mxu0 0.0
        %2704 = vmatprep.subr.mxu0 0.0
        %2705 = vmatpush2.msra.mxu0 0.0
        %2706 = vmatprep.subr.mxu0 0.0
        %2707 = vmatpush2.msra.mxu0 0.0
        %2708 = vmatprep.mubr.f32.mxu0 0.0
        %2709 = vmatmul.mubr.f32.gmra.mxu0 %v2061
        %v2710 = vpop.f32.mrf.mxu0
        %v2711 = vadd.f32 0.0, %v2710
        %v2712 = vpop.f32.mrf.mxu0
        %v2713 = vadd.f32 0.0, %v2712
        %2714 = vdwg.mxu0
        %v2715 = vadd.f32 %v2505, %v2640
        %v2716 = vadd.f32 %v2506, %v2642
        %v2717 = vadd.f32 %v2507, %v2711
        %v2718 = vadd.f32 %v2508, %v2713
        %v2719 = vxor.u32 %v2715, 2147483648
        %v2720 = vmul.f32 %v2719, 1.442695
        %v2721 = vpow.pop %v2720
        %v2722 = vadd.f32 %v2721, 1.0
        %v2723 = vrcp.pop %v2722
        %v2724 = vmul.f32 1.0, %v2723
        %v2725 = vxor.u32 %v2716, 2147483648
        %v2726 = vmul.f32 %v2725, 1.442695
        %v2727 = vpow.pop %v2726
        %v2728 = vadd.f32 %v2727, 1.0
        %v2729 = vrcp.pop %v2728
        %v2730 = vmul.f32 1.0, %v2729
        %v2731 = vtanh.pop %v2717
        %v2732 = vxor.u32 %v2718, 2147483648
        %v2733 = vmul.f32 %v2732, 1.442695
        %v2734 = vpow.pop %v2733
        %v2735 = vadd.f32 %v2734, 1.0
        %v2736 = vrcp.pop %v2735
        %v2737 = vmul.f32 1.0, %v2736
        %v2738 = vmul.f32 %v2730, %v2059
        %v2739 = vmul.f32 %v2724, %v2731
        %v2740 = vadd.f32 %v2738, %v2739
        %v2741 = vtanh.pop %v2740
        %v2742 = vmul.f32 %v2737, %v2741
        %v2743 = vld [vmem:[#allocation10] sm:$0xff]
        %v2744 = vld [vmem:[#allocation10 + $0x8] sm:$0xff]
        %v2745 = vld [vmem:[#allocation10 + $0x10] sm:$0xff]
        %v2746 = vld [vmem:[#allocation10 + $0x18] sm:$0xff]
        %v2747 = vld [vmem:[#allocation10 + $0x20] sm:$0xff]
        %v2748 = vld [vmem:[#allocation10 + $0x28] sm:$0xff]
        %v2749 = vld [vmem:[#allocation10 + $0x30] sm:$0xff]
        %v2750 = vld [vmem:[#allocation10 + $0x38] sm:$0xff]
        %v2751 = vld [vmem:[#allocation10 + $0x40] sm:$0xff]
        %v2752 = vld [vmem:[#allocation10 + $0x48] sm:$0xff]
        %v2753 = vld [vmem:[#allocation10 + $0x50] sm:$0xff]
        %v2754 = vld [vmem:[#allocation10 + $0x58] sm:$0xff]
        %v2755 = vld [vmem:[#allocation10 + $0x60] sm:$0xff]
        %v2756 = vld [vmem:[#allocation10 + $0x68] sm:$0xff]
        %v2757 = vld [vmem:[#allocation10 + $0x70] sm:$0xff]
        %v2758 = vld [vmem:[#allocation10 + $0x78] sm:$0xff]
        %v2759 = vld [vmem:[#allocation10 + $0x80] sm:$0xff]
        %v2760 = vld [vmem:[#allocation10 + $0x88] sm:$0xff]
        %v2761 = vld [vmem:[#allocation10 + $0x90] sm:$0xff]
        %v2762 = vld [vmem:[#allocation10 + $0x98] sm:$0xff]
        %v2763 = vld [vmem:[#allocation10 + $0xa0] sm:$0xff]
        %v2764 = vld [vmem:[#allocation10 + $0xa8] sm:$0xff]
        %v2765 = vld [vmem:[#allocation10 + $0xb0] sm:$0xff]
        %v2766 = vld [vmem:[#allocation10 + $0xb8] sm:$0xff]
        %v2767 = vld [vmem:[#allocation10 + $0xc0] sm:$0xff]
        %v2768 = vld [vmem:[#allocation10 + $0xc8] sm:$0xff]
        %v2769 = vld [vmem:[#allocation10 + $0xd0] sm:$0xff]
        %v2770 = vld [vmem:[#allocation10 + $0xd8] sm:$0xff]
        %v2771 = vld [vmem:[#allocation10 + $0xe0] sm:$0xff]
        %v2772 = vld [vmem:[#allocation10 + $0xe8] sm:$0xff]
        %v2773 = vld [vmem:[#allocation10 + $0xf0] sm:$0xff]
        %v2774 = vld [vmem:[#allocation10 + $0xf8] sm:$0xff]
        %v2775 = vld [vmem:[#allocation10 + $0x100] sm:$0xff]
        %v2776 = vld [vmem:[#allocation10 + $0x108] sm:$0xff]
        %v2777 = vld [vmem:[#allocation10 + $0x110] sm:$0xff]
        %v2778 = vld [vmem:[#allocation10 + $0x118] sm:$0xff]
        %v2779 = vld [vmem:[#allocation10 + $0x120] sm:$0xff]
        %v2780 = vld [vmem:[#allocation10 + $0x128] sm:$0xff]
        %v2781 = vld [vmem:[#allocation10 + $0x130] sm:$0xff]
        %v2782 = vld [vmem:[#allocation10 + $0x138] sm:$0xff]
        %v2783 = vld [vmem:[#allocation10 + $0x140] sm:$0xff]
        %v2784 = vld [vmem:[#allocation10 + $0x148] sm:$0xff]
        %v2785 = vld [vmem:[#allocation10 + $0x150] sm:$0xff]
        %v2786 = vld [vmem:[#allocation10 + $0x158] sm:$0xff]
        %v2787 = vld [vmem:[#allocation10 + $0x160] sm:$0xff]
        %v2788 = vld [vmem:[#allocation10 + $0x168] sm:$0xff]
        %v2789 = vld [vmem:[#allocation10 + $0x170] sm:$0xff]
        %v2790 = vld [vmem:[#allocation10 + $0x178] sm:$0xff]
        %v2791 = vld [vmem:[#allocation10 + $0x180] sm:$0xff]
        %v2792 = vld [vmem:[#allocation10 + $0x188] sm:$0xff]
        %v2793 = vld [vmem:[#allocation10 + $0x190] sm:$0xff]
        %v2794 = vld [vmem:[#allocation10 + $0x198] sm:$0xff]
        %v2795 = vld [vmem:[#allocation10 + $0x1a0] sm:$0xff]
        %v2796 = vld [vmem:[#allocation10 + $0x1a8] sm:$0xff]
        %v2797 = vld [vmem:[#allocation10 + $0x1b0] sm:$0xff]
        %v2798 = vld [vmem:[#allocation10 + $0x1b8] sm:$0xff]
        %v2799 = vld [vmem:[#allocation10 + $0x1c0] sm:$0xff]
        %v2800 = vld [vmem:[#allocation10 + $0x1c8] sm:$0xff]
        %v2801 = vld [vmem:[#allocation10 + $0x1d0] sm:$0xff]
        %v2802 = vld [vmem:[#allocation10 + $0x1d8] sm:$0xff]
        %v2803 = vld [vmem:[#allocation10 + $0x1e0] sm:$0xff]
        %v2804 = vld [vmem:[#allocation10 + $0x1e8] sm:$0xff]
        %v2805 = vld [vmem:[#allocation10 + $0x1f0] sm:$0xff]
        %v2806 = vld [vmem:[#allocation10 + $0x1f8] sm:$0xff]
        %v2807 = vld [vmem:[#allocation11] sm:$0xff]
        %v2808 = vld [vmem:[#allocation11 + $0x8] sm:$0xff]
        %v2809 = vld [vmem:[#allocation11 + $0x10] sm:$0xff]
        %v2810 = vld [vmem:[#allocation11 + $0x18] sm:$0xff]
        %v2811 = vld [vmem:[#allocation11 + $0x20] sm:$0xff]
        %v2812 = vld [vmem:[#allocation11 + $0x28] sm:$0xff]
        %v2813 = vld [vmem:[#allocation11 + $0x30] sm:$0xff]
        %v2814 = vld [vmem:[#allocation11 + $0x38] sm:$0xff]
        %v2815 = vld [vmem:[#allocation11 + $0x40] sm:$0xff]
        %v2816 = vld [vmem:[#allocation11 + $0x48] sm:$0xff]
        %v2817 = vld [vmem:[#allocation11 + $0x50] sm:$0xff]
        %v2818 = vld [vmem:[#allocation11 + $0x58] sm:$0xff]
        %v2819 = vld [vmem:[#allocation11 + $0x60] sm:$0xff]
        %v2820 = vld [vmem:[#allocation11 + $0x68] sm:$0xff]
        %v2821 = vld [vmem:[#allocation11 + $0x70] sm:$0xff]
        %v2822 = vld [vmem:[#allocation11 + $0x78] sm:$0xff]
        %v2823 = vld [vmem:[#allocation11 + $0x80] sm:$0xff]
        %v2824 = vld [vmem:[#allocation11 + $0x88] sm:$0xff]
        %v2825 = vld [vmem:[#allocation11 + $0x90] sm:$0xff]
        %v2826 = vld [vmem:[#allocation11 + $0x98] sm:$0xff]
        %v2827 = vld [vmem:[#allocation11 + $0xa0] sm:$0xff]
        %v2828 = vld [vmem:[#allocation11 + $0xa8] sm:$0xff]
        %v2829 = vld [vmem:[#allocation11 + $0xb0] sm:$0xff]
        %v2830 = vld [vmem:[#allocation11 + $0xb8] sm:$0xff]
        %v2831 = vld [vmem:[#allocation11 + $0xc0] sm:$0xff]
        %v2832 = vld [vmem:[#allocation11 + $0xc8] sm:$0xff]
        %v2833 = vld [vmem:[#allocation11 + $0xd0] sm:$0xff]
        %v2834 = vld [vmem:[#allocation11 + $0xd8] sm:$0xff]
        %v2835 = vld [vmem:[#allocation11 + $0xe0] sm:$0xff]
        %v2836 = vld [vmem:[#allocation11 + $0xe8] sm:$0xff]
        %v2837 = vld [vmem:[#allocation11 + $0xf0] sm:$0xff]
        %v2838 = vld [vmem:[#allocation11 + $0xf8] sm:$0xff]
        %v2839 = vld [vmem:[#allocation11 + $0x100] sm:$0xff]
        %v2840 = vld [vmem:[#allocation11 + $0x108] sm:$0xff]
        %v2841 = vld [vmem:[#allocation11 + $0x110] sm:$0xff]
        %v2842 = vld [vmem:[#allocation11 + $0x118] sm:$0xff]
        %v2843 = vld [vmem:[#allocation11 + $0x120] sm:$0xff]
        %v2844 = vld [vmem:[#allocation11 + $0x128] sm:$0xff]
        %v2845 = vld [vmem:[#allocation11 + $0x130] sm:$0xff]
        %v2846 = vld [vmem:[#allocation11 + $0x138] sm:$0xff]
        %v2847 = vld [vmem:[#allocation11 + $0x140] sm:$0xff]
        %v2848 = vld [vmem:[#allocation11 + $0x148] sm:$0xff]
        %v2849 = vld [vmem:[#allocation11 + $0x150] sm:$0xff]
        %v2850 = vld [vmem:[#allocation11 + $0x158] sm:$0xff]
        %v2851 = vld [vmem:[#allocation11 + $0x160] sm:$0xff]
        %v2852 = vld [vmem:[#allocation11 + $0x168] sm:$0xff]
        %v2853 = vld [vmem:[#allocation11 + $0x170] sm:$0xff]
        %v2854 = vld [vmem:[#allocation11 + $0x178] sm:$0xff]
        %v2855 = vld [vmem:[#allocation11 + $0x180] sm:$0xff]
        %v2856 = vld [vmem:[#allocation11 + $0x188] sm:$0xff]
        %v2857 = vld [vmem:[#allocation11 + $0x190] sm:$0xff]
        %v2858 = vld [vmem:[#allocation11 + $0x198] sm:$0xff]
        %v2859 = vld [vmem:[#allocation11 + $0x1a0] sm:$0xff]
        %v2860 = vld [vmem:[#allocation11 + $0x1a8] sm:$0xff]
        %v2861 = vld [vmem:[#allocation11 + $0x1b0] sm:$0xff]
        %v2862 = vld [vmem:[#allocation11 + $0x1b8] sm:$0xff]
        %v2863 = vld [vmem:[#allocation11 + $0x1c0] sm:$0xff]
        %v2864 = vld [vmem:[#allocation11 + $0x1c8] sm:$0xff]
        %v2865 = vld [vmem:[#allocation11 + $0x1d0] sm:$0xff]
        %v2866 = vld [vmem:[#allocation11 + $0x1d8] sm:$0xff]
        %v2867 = vld [vmem:[#allocation11 + $0x1e0] sm:$0xff]
        %v2868 = vld [vmem:[#allocation11 + $0x1e8] sm:$0xff]
        %v2869 = vld [vmem:[#allocation11 + $0x1f0] sm:$0xff]
        %v2870 = vld [vmem:[#allocation11 + $0x1f8] sm:$0xff]
        %2871 = vmatprep.subr.mxu0 %v2868
        %2872 = vmatpush1.msra.mxu0 %v2867
        %2873 = vmatprep.subr.mxu0 %v2864
        %2874 = vmatpush1.msra.mxu0 %v2863
        %2875 = vmatprep.subr.mxu0 %v2860
        %2876 = vmatpush1.msra.mxu0 %v2859
        %2877 = vmatprep.subr.mxu0 %v2856
        %2878 = vmatpush1.msra.mxu0 %v2855
        %2879 = vmatprep.subr.mxu0 %v2852
        %2880 = vmatpush1.msra.mxu0 %v2851
        %2881 = vmatprep.subr.mxu0 %v2848
        %2882 = vmatpush1.msra.mxu0 %v2847
        %2883 = vmatprep.subr.mxu0 %v2844
        %2884 = vmatpush1.msra.mxu0 %v2843
        %2885 = vmatprep.subr.mxu0 %v2840
        %2886 = vmatpush1.msra.mxu0 %v2839
        %2887 = vmatprep.subr.mxu0 %v2836
        %2888 = vmatpush1.msra.mxu0 %v2835
        %2889 = vmatprep.subr.mxu0 %v2832
        %2890 = vmatpush1.msra.mxu0 %v2831
        %2891 = vmatprep.subr.mxu0 %v2828
        %2892 = vmatpush1.msra.mxu0 %v2827
        %2893 = vmatprep.subr.mxu0 %v2824
        %2894 = vmatpush1.msra.mxu0 %v2823
        %2895 = vmatprep.subr.mxu0 %v2820
        %2896 = vmatpush1.msra.mxu0 %v2819
        %2897 = vmatprep.subr.mxu0 %v2816
        %2898 = vmatpush1.msra.mxu0 %v2815
        %2899 = vmatprep.subr.mxu0 %v2812
        %2900 = vmatpush1.msra.mxu0 %v2811
        %2901 = vmatprep.subr.mxu0 %v2808
        %2902 = vmatpush1.msra.mxu0 %v2807
        %2903 = vmatprep.subr.mxu0 0.0
        %2904 = vmatpush2.msra.mxu0 0.0
        %2905 = vmatprep.subr.mxu0 0.0
        %2906 = vmatpush2.msra.mxu0 0.0
        %2907 = vmatprep.subr.mxu0 0.0
        %2908 = vmatpush2.msra.mxu0 0.0
        %2909 = vmatprep.subr.mxu0 0.0
        %2910 = vmatpush2.msra.mxu0 0.0
        %2911 = vmatprep.subr.mxu0 0.0
        %2912 = vmatpush2.msra.mxu0 0.0
        %2913 = vmatprep.subr.mxu0 0.0
        %2914 = vmatpush2.msra.mxu0 0.0
        %2915 = vmatprep.subr.mxu0 0.0
        %2916 = vmatpush2.msra.mxu0 0.0
        %2917 = vmatprep.subr.mxu0 0.0
        %2918 = vmatpush2.msra.mxu0 0.0
        %2919 = vmatprep.subr.mxu0 0.0
        %2920 = vmatpush2.msra.mxu0 0.0
        %2921 = vmatprep.subr.mxu0 0.0
        %2922 = vmatpush2.msra.mxu0 0.0
        %2923 = vmatprep.subr.mxu0 0.0
        %2924 = vmatpush2.msra.mxu0 0.0
        %2925 = vmatprep.subr.mxu0 0.0
        %2926 = vmatpush2.msra.mxu0 0.0
        %2927 = vmatprep.subr.mxu0 0.0
        %2928 = vmatpush2.msra.mxu0 0.0
        %2929 = vmatprep.subr.mxu0 0.0
        %2930 = vmatpush2.msra.mxu0 0.0
        %2931 = vmatprep.subr.mxu0 0.0
        %2932 = vmatpush2.msra.mxu0 0.0
        %2933 = vmatprep.subr.mxu0 0.0
        %2934 = vmatpush2.msra.mxu0 0.0
        %2935 = vmatprep.mubr.f32.mxu0 0.0
        %2936 = vmatmul.mubr.f32.gmra.mxu0 %v2501
        %v2937 = vpop.f32.mrf.mxu0
        %v2938 = vadd.f32 0.0, %v2937
        %v2939 = vpop.f32.mrf.mxu0
        %v2940 = vadd.f32 0.0, %v2939
        %2941 = vdwg.mxu0
        %2942 = vmatprep.subr.mxu0 %v2870
        %2943 = vmatpush1.msra.mxu0 %v2869
        %2944 = vmatprep.subr.mxu0 %v2866
        %2945 = vmatpush1.msra.mxu0 %v2865
        %2946 = vmatprep.subr.mxu0 %v2862
        %2947 = vmatpush1.msra.mxu0 %v2861
        %2948 = vmatprep.subr.mxu0 %v2858
        %2949 = vmatpush1.msra.mxu0 %v2857
        %2950 = vmatprep.subr.mxu0 %v2854
        %2951 = vmatpush1.msra.mxu0 %v2853
        %2952 = vmatprep.subr.mxu0 %v2850
        %2953 = vmatpush1.msra.mxu0 %v2849
        %2954 = vmatprep.subr.mxu0 %v2846
        %2955 = vmatpush1.msra.mxu0 %v2845
        %2956 = vmatprep.subr.mxu0 %v2842
        %2957 = vmatpush1.msra.mxu0 %v2841
        %2958 = vmatprep.subr.mxu0 %v2838
        %2959 = vmatpush1.msra.mxu0 %v2837
        %2960 = vmatprep.subr.mxu0 %v2834
        %2961 = vmatpush1.msra.mxu0 %v2833
        %2962 = vmatprep.subr.mxu0 %v2830
        %2963 = vmatpush1.msra.mxu0 %v2829
        %2964 = vmatprep.subr.mxu0 %v2826
        %2965 = vmatpush1.msra.mxu0 %v2825
        %2966 = vmatprep.subr.mxu0 %v2822
        %2967 = vmatpush1.msra.mxu0 %v2821
        %2968 = vmatprep.subr.mxu0 %v2818
        %2969 = vmatpush1.msra.mxu0 %v2817
        %2970 = vmatprep.subr.mxu0 %v2814
        %2971 = vmatpush1.msra.mxu0 %v2813
        %2972 = vmatprep.subr.mxu0 %v2810
        %2973 = vmatpush1.msra.mxu0 %v2809
        %2974 = vmatprep.subr.mxu0 0.0
        %2975 = vmatpush2.msra.mxu0 0.0
        %2976 = vmatprep.subr.mxu0 0.0
        %2977 = vmatpush2.msra.mxu0 0.0
        %2978 = vmatprep.subr.mxu0 0.0
        %2979 = vmatpush2.msra.mxu0 0.0
        %2980 = vmatprep.subr.mxu0 0.0
        %2981 = vmatpush2.msra.mxu0 0.0
        %2982 = vmatprep.subr.mxu0 0.0
        %2983 = vmatpush2.msra.mxu0 0.0
        %2984 = vmatprep.subr.mxu0 0.0
        %2985 = vmatpush2.msra.mxu0 0.0
        %2986 = vmatprep.subr.mxu0 0.0
        %2987 = vmatpush2.msra.mxu0 0.0
        %2988 = vmatprep.subr.mxu0 0.0
        %2989 = vmatpush2.msra.mxu0 0.0
        %2990 = vmatprep.subr.mxu0 0.0
        %2991 = vmatpush2.msra.mxu0 0.0
        %2992 = vmatprep.subr.mxu0 0.0
        %2993 = vmatpush2.msra.mxu0 0.0
        %2994 = vmatprep.subr.mxu0 0.0
        %2995 = vmatpush2.msra.mxu0 0.0
        %2996 = vmatprep.subr.mxu0 0.0
        %2997 = vmatpush2.msra.mxu0 0.0
        %2998 = vmatprep.subr.mxu0 0.0
        %2999 = vmatpush2.msra.mxu0 0.0
        %3000 = vmatprep.subr.mxu0 0.0
        %3001 = vmatpush2.msra.mxu0 0.0
        %3002 = vmatprep.subr.mxu0 0.0
        %3003 = vmatpush2.msra.mxu0 0.0
        %3004 = vmatprep.subr.mxu0 0.0
        %3005 = vmatpush2.msra.mxu0 0.0
        %3006 = vmatprep.mubr.f32.mxu0 0.0
        %3007 = vmatmul.mubr.f32.gmra.mxu0 %v2501
        %v3008 = vpop.f32.mrf.mxu0
        %v3009 = vadd.f32 0.0, %v3008
        %v3010 = vpop.f32.mrf.mxu0
        %v3011 = vadd.f32 0.0, %v3010
        %3012 = vdwg.mxu0
        %3013 = vmatprep.subr.mxu0 %v2804
        %3014 = vmatpush1.msra.mxu0 %v2803
        %3015 = vmatprep.subr.mxu0 %v2800
        %3016 = vmatpush1.msra.mxu0 %v2799
        %3017 = vmatprep.subr.mxu0 %v2796
        %3018 = vmatpush1.msra.mxu0 %v2795
        %3019 = vmatprep.subr.mxu0 %v2792
        %3020 = vmatpush1.msra.mxu0 %v2791
        %3021 = vmatprep.subr.mxu0 %v2788
        %3022 = vmatpush1.msra.mxu0 %v2787
        %3023 = vmatprep.subr.mxu0 %v2784
        %3024 = vmatpush1.msra.mxu0 %v2783
        %3025 = vmatprep.subr.mxu0 %v2780
        %3026 = vmatpush1.msra.mxu0 %v2779
        %3027 = vmatprep.subr.mxu0 %v2776
        %3028 = vmatpush1.msra.mxu0 %v2775
        %3029 = vmatprep.subr.mxu0 %v2772
        %3030 = vmatpush1.msra.mxu0 %v2771
        %3031 = vmatprep.subr.mxu0 %v2768
        %3032 = vmatpush1.msra.mxu0 %v2767
        %3033 = vmatprep.subr.mxu0 %v2764
        %3034 = vmatpush1.msra.mxu0 %v2763
        %3035 = vmatprep.subr.mxu0 %v2760
        %3036 = vmatpush1.msra.mxu0 %v2759
        %3037 = vmatprep.subr.mxu0 %v2756
        %3038 = vmatpush1.msra.mxu0 %v2755
        %3039 = vmatprep.subr.mxu0 %v2752
        %3040 = vmatpush1.msra.mxu0 %v2751
        %3041 = vmatprep.subr.mxu0 %v2748
        %3042 = vmatpush1.msra.mxu0 %v2747
        %3043 = vmatprep.subr.mxu0 %v2744
        %3044 = vmatpush1.msra.mxu0 %v2743
        %3045 = vmatprep.subr.mxu0 0.0
        %3046 = vmatpush2.msra.mxu0 0.0
        %3047 = vmatprep.subr.mxu0 0.0
        %3048 = vmatpush2.msra.mxu0 0.0
        %3049 = vmatprep.subr.mxu0 0.0
        %3050 = vmatpush2.msra.mxu0 0.0
        %3051 = vmatprep.subr.mxu0 0.0
        %3052 = vmatpush2.msra.mxu0 0.0
        %3053 = vmatprep.subr.mxu0 0.0
        %3054 = vmatpush2.msra.mxu0 0.0
        %3055 = vmatprep.subr.mxu0 0.0
        %3056 = vmatpush2.msra.mxu0 0.0
        %3057 = vmatprep.subr.mxu0 0.0
        %3058 = vmatpush2.msra.mxu0 0.0
        %3059 = vmatprep.subr.mxu0 0.0
        %3060 = vmatpush2.msra.mxu0 0.0
        %3061 = vmatprep.subr.mxu0 0.0
        %3062 = vmatpush2.msra.mxu0 0.0
        %3063 = vmatprep.subr.mxu0 0.0
        %3064 = vmatpush2.msra.mxu0 0.0
        %3065 = vmatprep.subr.mxu0 0.0
        %3066 = vmatpush2.msra.mxu0 0.0
        %3067 = vmatprep.subr.mxu0 0.0
        %3068 = vmatpush2.msra.mxu0 0.0
        %3069 = vmatprep.subr.mxu0 0.0
        %3070 = vmatpush2.msra.mxu0 0.0
        %3071 = vmatprep.subr.mxu0 0.0
        %3072 = vmatpush2.msra.mxu0 0.0
        %3073 = vmatprep.subr.mxu0 0.0
        %3074 = vmatpush2.msra.mxu0 0.0
        %3075 = vmatprep.subr.mxu0 0.0
        %3076 = vmatpush2.msra.mxu0 0.0
        %3077 = vmatprep.mubr.f32.mxu0 0.0
        %3078 = vmatmul.mubr.f32.gmra.mxu0 %v2742
        %v3079 = vpop.f32.mrf.mxu0
        %v3080 = vadd.f32 %v2938, %v3079
        %v3081 = vpop.f32.mrf.mxu0
        %v3082 = vadd.f32 %v2940, %v3081
        %3083 = vdwg.mxu0
        %3084 = vmatprep.subr.mxu0 %v2806
        %3085 = vmatpush1.msra.mxu0 %v2805
        %3086 = vmatprep.subr.mxu0 %v2802
        %3087 = vmatpush1.msra.mxu0 %v2801
        %3088 = vmatprep.subr.mxu0 %v2798
        %3089 = vmatpush1.msra.mxu0 %v2797
        %3090 = vmatprep.subr.mxu0 %v2794
        %3091 = vmatpush1.msra.mxu0 %v2793
        %3092 = vmatprep.subr.mxu0 %v2790
        %3093 = vmatpush1.msra.mxu0 %v2789
        %3094 = vmatprep.subr.mxu0 %v2786
        %3095 = vmatpush1.msra.mxu0 %v2785
        %3096 = vmatprep.subr.mxu0 %v2782
        %3097 = vmatpush1.msra.mxu0 %v2781
        %3098 = vmatprep.subr.mxu0 %v2778
        %3099 = vmatpush1.msra.mxu0 %v2777
        %3100 = vmatprep.subr.mxu0 %v2774
        %3101 = vmatpush1.msra.mxu0 %v2773
        %3102 = vmatprep.subr.mxu0 %v2770
        %3103 = vmatpush1.msra.mxu0 %v2769
        %3104 = vmatprep.subr.mxu0 %v2766
        %3105 = vmatpush1.msra.mxu0 %v2765
        %3106 = vmatprep.subr.mxu0 %v2762
        %3107 = vmatpush1.msra.mxu0 %v2761
        %3108 = vmatprep.subr.mxu0 %v2758
        %3109 = vmatpush1.msra.mxu0 %v2757
        %3110 = vmatprep.subr.mxu0 %v2754
        %3111 = vmatpush1.msra.mxu0 %v2753
        %3112 = vmatprep.subr.mxu0 %v2750
        %3113 = vmatpush1.msra.mxu0 %v2749
        %3114 = vmatprep.subr.mxu0 %v2746
        %3115 = vmatpush1.msra.mxu0 %v2745
        %3116 = vmatprep.subr.mxu0 0.0
        %3117 = vmatpush2.msra.mxu0 0.0
        %3118 = vmatprep.subr.mxu0 0.0
        %3119 = vmatpush2.msra.mxu0 0.0
        %3120 = vmatprep.subr.mxu0 0.0
        %3121 = vmatpush2.msra.mxu0 0.0
        %3122 = vmatprep.subr.mxu0 0.0
        %3123 = vmatpush2.msra.mxu0 0.0
        %3124 = vmatprep.subr.mxu0 0.0
        %3125 = vmatpush2.msra.mxu0 0.0
        %3126 = vmatprep.subr.mxu0 0.0
        %3127 = vmatpush2.msra.mxu0 0.0
        %3128 = vmatprep.subr.mxu0 0.0
        %3129 = vmatpush2.msra.mxu0 0.0
        %3130 = vmatprep.subr.mxu0 0.0
        %3131 = vmatpush2.msra.mxu0 0.0
        %3132 = vmatprep.subr.mxu0 0.0
        %3133 = vmatpush2.msra.mxu0 0.0
        %3134 = vmatprep.subr.mxu0 0.0
        %3135 = vmatpush2.msra.mxu0 0.0
        %3136 = vmatprep.subr.mxu0 0.0
        %3137 = vmatpush2.msra.mxu0 0.0
        %3138 = vmatprep.subr.mxu0 0.0
        %3139 = vmatpush2.msra.mxu0 0.0
        %3140 = vmatprep.subr.mxu0 0.0
        %3141 = vmatpush2.msra.mxu0 0.0
        %3142 = vmatprep.subr.mxu0 0.0
        %3143 = vmatpush2.msra.mxu0 0.0
        %3144 = vmatprep.subr.mxu0 0.0
        %3145 = vmatpush2.msra.mxu0 0.0
        %3146 = vmatprep.subr.mxu0 0.0
        %3147 = vmatpush2.msra.mxu0 0.0
        %3148 = vmatprep.mubr.f32.mxu0 0.0
        %3149 = vmatmul.mubr.f32.gmra.mxu0 %v2742
        %v3150 = vpop.f32.mrf.mxu0
        %v3151 = vadd.f32 %v3009, %v3150
        %v3152 = vpop.f32.mrf.mxu0
        %v3153 = vadd.f32 %v3011, %v3152
        %3154 = vdwg.mxu0
        %v3155 = vadd.f32 %v3080, %v446
        %v3156 = vadd.f32 %v3082, %v450
        %v3157 = vadd.f32 %v3151, %v454
        %v3158 = vadd.f32 %v3153, %v458
        %v3159 = vxor.u32 %v3155, 2147483648
        %v3160 = vmul.f32 %v3159, 1.442695
        %v3161 = vpow.pop %v3160
        %v3162 = vadd.f32 %v3161, 1.0
        %v3163 = vrcp.pop %v3162
        %v3164 = vmul.f32 1.0, %v3163
        %v3165 = vxor.u32 %v3156, 2147483648
        %v3166 = vmul.f32 %v3165, 1.442695
        %v3167 = vpow.pop %v3166
        %v3168 = vadd.f32 %v3167, 1.0
        %v3169 = vrcp.pop %v3168
        %v3170 = vmul.f32 1.0, %v3169
        %v3171 = vtanh.pop %v3157
        %v3172 = vxor.u32 %v3158, 2147483648
        %v3173 = vmul.f32 %v3172, 1.442695
        %v3174 = vpow.pop %v3173
        %v3175 = vadd.f32 %v3174, 1.0
        %v3176 = vrcp.pop %v3175
        %v3177 = vmul.f32 1.0, %v3176
        %v3178 = vmul.f32 %v3170, %v2499
        %v3179 = vmul.f32 %v3164, %v3171
        %v3180 = vadd.f32 %v3178, %v3179
        %v3181 = vtanh.pop %v3180
        %v3182 = vmul.f32 %v3177, %v3181
        %s3183 = scalar_lea.vmem %s416, 24 [#allocation13]
        %3184 = vst [vmem:[%s3183] sm:$0xff] %v3182
        %3185 = vst [vmem:[#allocation14] sm:$0xff] %v2742
        %3186 = vst [vmem:[#allocation16] sm:$0xff] %v2740
        %3187 = vst [vmem:[%s436] sm:$0xff] %v3182
        %3188 = vst [vmem:[%s439] sm:$0xff] %v3180
        %s3189 = sand.u32 %s191, 1
        %s3190 = scalar_lea.sflag [#allocation4], %s3189
        %s3191 = sand.u32 %s191, 1
        %s3192 = smul.addr %s3191, 32
        %s3193 = scalar_lea.vmem [#allocation13], %s3192
        // Predicated region
        $region77: #{tpu_custom_call.1} parent=47 // pred_check
          %p3194 = pneg %p201
        $region78: #{tpu_custom_call.1} parent=47 // pred_check_branch
          %3196 = sbr.rel (%p3194) target = $region80
        $region79: #{tpu_custom_call.1} parent=47 // pred_region
          %s3197 = smul.u32 4, %s31
          %s3199 = ssub.s32 512, 512
          %3200 = vsyncadd %s3190, %s3199
          %s3201 = smul.addr %s3197, 128
          %s3202 = scalar_lea.hbm %s7, %s3201
          %s3203 = sshll.u32 %s3193, 4
          %s3204 = int_to_ptr.vmem [resolvable:$true] %s3203
          %3209 = dma.vmem_to_hbm [thread:$0]  %s3204, 512, %s3202, %s3190, 128, 128, 8
        $region80: #{tpu_custom_call.1} parent=47 // pred_fallthru
          _
        // Predicated region
        $region81: #{tpu_custom_call.1} parent=47 // pred_check
          %p3210 = pneg %p222
        $region82: #{tpu_custom_call.1} parent=47 // pred_check_branch
          %3212 = sbr.rel (%p3210) target = $region84
        $region83: #{tpu_custom_call.1} parent=47 // pred_region
          %s3214 = ssub.s32 256, 256
          %3215 = vsyncadd [#allocation15], %s3214
          %s3216 = sshll.u32 [#allocation14], 4
          %s3217 = int_to_ptr.vmem [resolvable:$true] %s3216
          %3222 = dma.vmem_to_hbm [thread:$0]  %s3217, 256, %s8, [#allocation15], 128, 128, 8
        $region84: #{tpu_custom_call.1} parent=47 // pred_fallthru
          _
        // Predicated region
        $region85: #{tpu_custom_call.1} parent=47 // pred_check
          %p3223 = pneg %p243
        $region86: #{tpu_custom_call.1} parent=47 // pred_check_branch
          %3225 = sbr.rel (%p3223) target = $region88
        $region87: #{tpu_custom_call.1} parent=47 // pred_region
          %s3227 = ssub.s32 256, 256
          %3228 = vsyncadd [#allocation15], %s3227
          %s3229 = sshll.u32 [#allocation16], 4
          %s3230 = int_to_ptr.vmem [resolvable:$true] %s3229
          %3235 = dma.vmem_to_hbm [thread:$0]  %s3230, 256, %s9, [#allocation15], 128, 128, 8
        $region88: #{tpu_custom_call.1} parent=47 // pred_fallthru
          _
        // Predicated region
        $region89: #{tpu_custom_call.1} parent=47 // pred_check
          %p3236 = pneg %p222
        $region90: #{tpu_custom_call.1} parent=47 // pred_check_branch
          %3238 = sbr.rel (%p3236) target = $region92
        $region91: #{tpu_custom_call.1} parent=47 // pred_region
          %3239 = dma.done [#allocation15], 256
        $region92: #{tpu_custom_call.1} parent=47 // pred_fallthru
          _
        // Predicated region
        $region93: #{tpu_custom_call.1} parent=47 // pred_check
          %p3240 = pneg %p243
        $region94: #{tpu_custom_call.1} parent=47 // pred_check_branch
          %3242 = sbr.rel (%p3240) target = $region96
        $region95: #{tpu_custom_call.1} parent=47 // pred_region
          %3243 = dma.done [#allocation15], 256
        $region96: #{tpu_custom_call.1} parent=47 // pred_fallthru
          _
      $region48: #{tpu_custom_call.1} parent=5 // pred_fallthru
        _
      %p3244 = scmp.le.s32.totalorder 2, %s26
      // Predicated region
      $region97: #{tpu_custom_call.1} parent=5 // pred_check
        %p3245 = pneg %p3244
      $region98: #{tpu_custom_call.1} parent=5 // pred_check_branch
        %3247 = sbr.rel (%p3245) target = $region100
      $region99: #{tpu_custom_call.1} parent=5 // pred_region
        %s3248 = ssub.s32 %s26, 2
        // Predicated region
        $region101: #{tpu_custom_call.1} parent=99 // pred_check
          %p3249 = pneg %p207
        $region102: #{tpu_custom_call.1} parent=99 // pred_check_branch
          %3251 = sbr.rel (%p3249) target = $region104
        $region103: #{tpu_custom_call.1} parent=99 // pred_region
          %s3252 = sand.u32 %s192, 1
          %s3253 = scalar_lea.sflag [#allocation4], %s3252
          %s3254 = sand.u32 %s192, 1
          %s3255 = smul.addr %s3254, 32
          %s3256 = scalar_lea.vmem [#allocation13], %s3255
          %3257 = dma.done %s3253, 512
        $region104: #{tpu_custom_call.1} parent=99 // pred_fallthru
          _
      $region100: #{tpu_custom_call.1} parent=5 // pred_fallthru
        _
    $region6: #{tpu_custom_call.1} parent=1 // loop_footer
      %s30 = sadd.s32 1, %s26
    $region7: #{tpu_custom_call.1} parent=1 // loop_footer_branch
      %25 = sbr.rel target = $region3
    $region8: #{tpu_custom_call.1} parent=1 // loop_exit
      _
    %3258 = vsyncpa [#allocation3], 1
    %s3259 = scalar_lea.sflag [#allocation3], 1
    %3260 = vsyncpa %s3259, 1
    %3261 = vsyncpa [#allocation6], 1
    %3262 = vsyncpa [#allocation9], 1
    %3263 = vsyncpa [#allocation12], 1
    %3264 = vsyncpa [#allocation4], 1
    %s3265 = scalar_lea.sflag [#allocation4], 1
    %3266 = vsyncpa %s3265, 1
    %3267 = vsyncpa [#allocation15], 1

</llo_original>
